<compile_context>
chip_gen: v6e
topology: v6e:2x2x1
jax: 0.10.0
libtpu: 0.0.40
codegen_flags: <defaults>
</compile_context>

<pallas_src>
import math

import jax
import jax.numpy as jnp
from jax import lax
from jax.experimental import pallas as pl
from jax.experimental.pallas import tpu as pltpu

_K = 3            # kernel == stride == 3, padding == 1 for every layer
_PAD = 1
_NPH = _K * _K    # 9 taps per conv
_RF = 27          # composite receptive field of the 3-layer stack (3*3*3)
_OFF = 13         # composite padding offset: 9*1 + 3*1 + 1


def _out_size(s):
    return (s + 2 * _PAD - _K) // _K + 1      # == ceil(s / 3)


def _round_up(x, m):
    return (x + m - 1) // m * m


def _pick_row_tile(nj, cap=512):
    """Final-output-pixel rows per grid step.

    Multiple of 16 (bf16 sublane packing); aims for >=2 grid steps when there
    is enough work (v7x: 2 TCs share the 'parallel' axis) and >=8 for big
    shapes; capped so double-buffered a1 tiles stay small on all generations.
    """
    if nj <= 16:
        return 16
    target_steps = 8 if nj >= 2048 else 2
    rt = _round_up(-(-nj // target_steps), 16)
    return max(16, min(cap, rt))


def _fused_encoder_kernel(a1_ref, w1_ref, w2_ref, w3_ref, b3_ref,
                          o_ref, y2cat_ref):
    """conv1+ReLU -> conv2+ReLU -> conv3+ReLU for one tile of final output
    pixels ("rows"); all intermediates stay on-chip.

      a1_ref    (9, rows, F1)    bf16  per-p3 augmented input patches
      w1_ref    (F1, 9*c1+1)     bf16  block-diag conv1 weights (+b1 rows,
                                       +valid2 pass-through column)
      w2_ref    (9*c1+1, c2)     bf16  stacked conv2 weights (+b2 row)
      w3_ref    (9*c2, c3)       bf16  stacked conv3 weights
      b3_ref    (1, c3)          f32
      o_ref     (rows, c3)       f32
      y2cat_ref (rows, 9*c2)     bf16  scratch: conv2 outputs concat over p3
    """
    c2 = w2_ref.shape[1]
    for p3 in range(a1_ref.shape[0]):           # 9 conv3 taps (static unroll)
        # conv1: all 9 p2 taps in ONE (rows,F1)x(F1,289) block-diagonal dot.
        # Biases and zero-padding validity are folded into augmented columns,
        # so invalid taps come out exactly 0 after the ReLU.
        z1 = jnp.dot(a1_ref[p3], w1_ref[...],
                     preferred_element_type=jnp.float32)
        y1 = jnp.maximum(z1, 0.0).astype(jnp.bfloat16)       # (rows, 9*c1+1)
        # conv2: all 9 taps fused into one K=289 dot; the last weight row is
        # b2, gated by the valid2 column of y1 (0/1 passes through the ReLU).
        z2 = jnp.dot(y1, w2_ref[...], preferred_element_type=jnp.float32)
        y2 = jnp.maximum(z2, 0.0).astype(jnp.bfloat16)       # (rows, c2)
        y2cat_ref[:, p3 * c2:(p3 + 1) * c2] = y2
    # conv3: one K = 9*c2 = 576 dot over the concatenated taps.
    z3 = jnp.dot(y2cat_ref[...], w3_ref[...],
                 preferred_element_type=jnp.float32)
    o_ref[...] = jnp.maximum(z3 + b3_ref[...], 0.0)


@jax.jit
def encoders_forward(x_nchw, params):
    (w1, b1), (w2, b2), (w3, b3) = params
    N, Cin, H, W = x_nchw.shape
    c1, c2, c3 = w1.shape[0], w2.shape[0], w3.shape[0]
    k1 = Cin * _K * _K                    # conv1 patch features per tap (27)
    f_tap = k1 + 1                        # + valid1 (b1-gate) column
    f_raw = _NPH * f_tap + 1              # + valid2 (b2-gate) column  (253)
    F1 = _round_up(f_raw, 128)            # lane-dense a1 feature width (256)
    c1cat = _NPH * c1 + 1                 # fused conv1 output width   (289)

    Ho1, Wo1 = _out_size(H), _out_size(W)
    Ho2, Wo2 = _out_size(Ho1), _out_size(Wo1)
    Ho3, Wo3 = _out_size(Ho2), _out_size(Wo2)
    NJ = N * Ho3 * Wo3
    row_tile = _pick_row_tile(NJ)
    NJp = _round_up(NJ, row_tile)

    # ---- host prep: reshape-only im2col of the composite receptive field ---
    # stride == kernel == 3 in every layer, so each final output pixel owns a
    # disjoint 27x27 input window at offset 27*(h3,w3) - 13.  Pad-and-slice to
    # (N, 27*Ho3, 27*Wo3, Cin), then split each 27 into (kh3, kh2, kh1):
    # pure layout ops, no gather and no index tensors.
    dt = jnp.bfloat16
    xb = jnp.transpose(x_nchw, (0, 2, 3, 1)).astype(dt)
    xb = jnp.pad(xb, ((0, 0), (_OFF, _OFF), (_OFF, _OFF), (0, 0)))
    xb = xb[:, :_RF * Ho3, :_RF * Wo3, :]
    xb = xb.reshape(N, Ho3, _K, _K, _K, Wo3, _K, _K, _K, Cin)
    # -> (kh3, kw3, N, Ho3, Wo3, kh2, kw2, kh1, kw1, Cin)
    patches = jnp.transpose(xb, (2, 6, 0, 1, 5, 3, 7, 4, 8, 9))

    # Static validity of the layer-2 / layer-1 positions addressed by each
    # (p3[, p2]) tap of a final output pixel (the nested zero-paddings).
    def _axis_valid(o3, o2, o1):
        pos2 = _K * jnp.arange(o3)[:, None] + jnp.arange(_K)[None, :] - _PAD
        v2 = (pos2 >= 0) & (pos2 < o2)                               # (o3,3)
        pos1 = _K * pos2[:, :, None] + jnp.arange(_K)[None, None, :] - _PAD
        v1 = v2[:, :, None] & (pos1 >= 0) & (pos1 < o1)              # (o3,3,3)
        return v2, v1

    vh2, vh1 = _axis_valid(Ho3, Ho2, Ho1)
    vw2, vw1 = _axis_valid(Wo3, Wo2, Wo1)
    # valid1: (kh3, kw3, Ho3, Wo3, kh2, kw2); valid2: (kh3, kw3, Ho3, Wo3)
    v1 = (vh1.transpose(1, 0, 2)[:, None, :, None, :, None]
          & vw1.transpose(1, 0, 2)[None, :, None, :, None, :])
    v2 = (vh2.transpose(1, 0)[:, None, :, None]
          & vw2.transpose(1, 0)[None, :, None, :])

    # a1: (9, NJp, F1) = per-(p3, output pixel) row of 9 augmented conv1 patch
    # blocks [patch*valid1 | valid1] + trailing [valid2] + zero lane padding.
    pat = patches * v1[:, :, None, :, :, :, :, None, None, None].astype(dt)
    pat = pat.reshape(_NPH, NJ, _NPH, k1)
    aug1 = jnp.broadcast_to(v1[:, :, None], (_K, _K, N, Ho3, Wo3, _K, _K))
    aug1 = aug1.astype(dt).reshape(_NPH, NJ, _NPH, 1)
    aug2 = jnp.broadcast_to(v2[:, :, None], (_K, _K, N, Ho3, Wo3))
    aug2 = aug2.astype(dt).reshape(_NPH, NJ, 1)
    a1 = jnp.concatenate([pat, aug1], axis=-1).reshape(_NPH, NJ, _NPH * f_tap)
    a1 = jnp.concatenate([a1, aug2], axis=-1)             # (9, NJ, 253)
    a1 = jnp.pad(a1, ((0, 0), (0, NJp - NJ), (0, F1 - f_raw)))

    # ---- weights: biases + padding masks folded, bf16, MXU-fused layouts ---
    # conv1: block-diagonal (F1, 9*c1+1); tap-p2 block = [w1 ; b1] acting on
    # [patch*valid1 ; valid1]; last column routes valid2 through for b2 gating.
    w1m = jnp.transpose(w1, (2, 3, 1, 0)).reshape(k1, c1)   # (kh,kw,cin) x c1
    w1_bd = jnp.zeros((F1, c1cat), jnp.float32)
    for p2 in range(_NPH):
        w1_bd = w1_bd.at[p2 * f_tap:p2 * f_tap + k1,
                         p2 * c1:(p2 + 1) * c1].set(w1m)
        w1_bd = w1_bd.at[p2 * f_tap + k1, p2 * c1:(p2 + 1) * c1].set(b1)
    w1_bd = w1_bd.at[_NPH * f_tap, _NPH * c1].set(1.0).astype(dt)
    # conv2: taps stacked along K (9*c1) + b2 row gated by the valid2 column.
    w2_stk = jnp.concatenate(
        [jnp.transpose(w2, (2, 3, 1, 0)).reshape(_NPH * c1, c2),
         b2.reshape(1, c2)], axis=0).astype(dt)
    # conv3: taps stacked along K (9*c2); b3 is added in-kernel after the dot.
    w3_stk = jnp.transpose(w3, (2, 3, 1, 0)).reshape(_NPH * c2, c3).astype(dt)
    b3m = b3.reshape(1, c3).astype(jnp.float32)

    out = pl.pallas_call(
        _fused_encoder_kernel,
        out_shape=jax.ShapeDtypeStruct((NJp, c3), jnp.float32),
        grid=(NJp // row_tile,),
        in_specs=[
            pl.BlockSpec((_NPH, row_tile, F1), lambda i: (0, i, 0)),
            pl.BlockSpec((F1, c1cat), lambda i: (0, 0)),
            pl.BlockSpec((c1cat, c2), lambda i: (0, 0)),
            pl.BlockSpec((_NPH * c2, c3), lambda i: (0, 0)),
            pl.BlockSpec((1, c3), lambda i: (0, 0)),
        ],
        out_specs=pl.BlockSpec((row_tile, c3), lambda i: (i, 0)),
        scratch_shapes=[pltpu.VMEM((row_tile, _NPH * c2), jnp.bfloat16)],
        compiler_params=pltpu.CompilerParams(
            dimension_semantics=("parallel",)),
    )(a1, w1_bd, w2_stk, w3_stk, b3m)

    y = out[:NJ].reshape(N, Ho3, Wo3, c3)
    return jnp.transpose(y, (0, 3, 1, 2))        # NHWC -> NCHW


def init_params(key):
    """Deterministic PyTorch-style (uniform +/- 1/sqrt(fan_in)) init."""
    layers = [(3, 32), (32, 64), (64, 32)]
    params = []
    for i, (cin, cout) in enumerate(layers):
        kw_key, kb_key = jax.random.split(jax.random.fold_in(key, i))
        bound = 1.0 / math.sqrt(cin * _K * _K)
        w = jax.random.uniform(kw_key, (cout, cin, _K, _K), jnp.float32,
                               minval=-bound, maxval=bound)
        b = jax.random.uniform(kb_key, (cout,), jnp.float32,
                               minval=-bound, maxval=bound)
        params.append((w, b))
    return params


def reference_forward(x_nchw, params):
    """Pure-JAX f32 reference (lax.conv) for a sanity check."""
    x = x_nchw
    for (w, b) in params:
        y = lax.conv_general_dilated(
            x, w, window_strides=(_K, _K), padding=((_PAD, _PAD), (_PAD, _PAD)),
            dimension_numbers=("NCHW", "OIHW", "NCHW"))
        x = jnp.maximum(y + b[None, :, None, None], 0.0)
    return x


if __name__ == "__main__":
    key = jax.random.PRNGKey(0)
    x_key, p_key = jax.random.split(key)
    params = init_params(p_key)

    # Small shapes consistent with three stride-3 convs:
    #   (2,3,27,27) -> (2,32,1,1)   single-tile grid
    #   (2,3,96,96) -> (2,32,4,4)   2-step 'parallel' grid (both v7x TCs busy)
    for i, shape in enumerate([(2, 3, 27, 27), (2, 3, 96, 96)]):
        x = jax.random.normal(jax.random.fold_in(x_key, i), shape, jnp.float32)
        out = jax.block_until_ready(encoders_forward(x, params))
        ref = reference_forward(x, params)
        assert out.shape == ref.shape, (out.shape, ref.shape)
        err = float(jnp.max(jnp.abs(out - ref)))
        # bf16 MXU inputs with f32 accumulation: allow a few bf16 ulps.
        assert err < 2e-2, f"mismatch vs reference for {shape}: max abs err {err}"
    print("KERNEL_OK")
</pallas_src>

<mosaic_0001>
module attributes {stable_mosaic.version = 11 : i64} {
  func.func @_fused_encoder_kernel(%arg0: i32, %arg1: memref<9x16x256xbf16, #tpu.memory_space<vmem>>, %arg2: memref<256x289xbf16, #tpu.memory_space<vmem>>, %arg3: memref<289x64xbf16, #tpu.memory_space<vmem>>, %arg4: memref<576x32xbf16, #tpu.memory_space<vmem>>, %arg5: memref<1x32xf32, #tpu.memory_space<vmem>>, %arg6: memref<16x32xf32, #tpu.memory_space<vmem>>, %arg7: memref<16x576xbf16, #tpu.memory_space<vmem>>) attributes {dimension_semantics = [#tpu.dimension_semantics<parallel>], iteration_bounds = array<i64: 1>, scalar_prefetch = 0 : i64, scratch_operands = 1 : i64, tpu.core_type = #tpu.core_type<tc>, window_params = [{transform_indices = @transform_0, window_bounds = array<i64: 9, 16, 256>}, {pipeline_mode = #tpu.pipeline_mode<synchronous>, transform_indices = @transform_1, window_bounds = array<i64: 256, 289>}, {pipeline_mode = #tpu.pipeline_mode<synchronous>, transform_indices = @transform_2, window_bounds = array<i64: 289, 64>}, {pipeline_mode = #tpu.pipeline_mode<synchronous>, transform_indices = @transform_3, window_bounds = array<i64: 576, 32>}, {pipeline_mode = #tpu.pipeline_mode<synchronous>, transform_indices = @transform_4, window_bounds = array<i64: 1, 32>}, {transform_indices = @transform_5, window_bounds = array<i64: 16, 32>}]} {
    %c0 = arith.constant 0 : index
    %c0_0 = arith.constant 0 : index
    %c0_1 = arith.constant 0 : index
    %0 = vector.load %arg1[%c0, %c0_0, %c0_1] : memref<9x16x256xbf16, #tpu.memory_space<vmem>>, vector<1x16x256xbf16>
    %1 = vector.shape_cast %0 : vector<1x16x256xbf16> to vector<16x256xbf16>
    %c0_2 = arith.constant 0 : index
    %c0_3 = arith.constant 0 : index
    %2 = vector.load %arg2[%c0_2, %c0_3] : memref<256x289xbf16, #tpu.memory_space<vmem>>, vector<256x289xbf16>
    %cst = arith.constant dense<0.000000e+00> : vector<16x289xf32>
    %3 = tpu.matmul %1, %2, %cst {dimension_numbers = #tpu.dot_dimension_numbers<[1], [0], [0], [1], [0, 0, 1, 1], [], []>} : vector<16x256xbf16>, vector<256x289xbf16>, vector<16x289xf32> -> vector<16x289xf32>
    %cst_4 = arith.constant 0.000000e+00 : f32
    %4 = vector.broadcast %cst_4 : f32 to vector<16x289xf32>
    %5 = arith.maximumf %3, %4 : vector<16x289xf32>
    %6 = arith.truncf %5 : vector<16x289xf32> to vector<16x289xbf16>
    %c0_5 = arith.constant 0 : index
    %c0_6 = arith.constant 0 : index
    %7 = vector.load %arg3[%c0_5, %c0_6] : memref<289x64xbf16, #tpu.memory_space<vmem>>, vector<289x64xbf16>
    %cst_7 = arith.constant dense<0.000000e+00> : vector<16x64xf32>
    %8 = tpu.matmul %6, %7, %cst_7 {dimension_numbers = #tpu.dot_dimension_numbers<[1], [0], [0], [1], [0, 0, 1, 1], [], []>} : vector<16x289xbf16>, vector<289x64xbf16>, vector<16x64xf32> -> vector<16x64xf32>
    %cst_8 = arith.constant 0.000000e+00 : f32
    %9 = vector.broadcast %cst_8 : f32 to vector<16x64xf32>
    %10 = arith.maximumf %8, %9 : vector<16x64xf32>
    %11 = arith.truncf %10 : vector<16x64xf32> to vector<16x64xbf16>
    %c0_9 = arith.constant 0 : index
    %c0_10 = arith.constant 0 : index
    %12 = vector.load %arg7[%c0_9, %c0_10] : memref<16x576xbf16, #tpu.memory_space<vmem>>, vector<16x64xbf16>
    tpu.vector_store %arg7[%c0_9, %c0_10], %11 {strides = array<i32>} : memref<16x576xbf16, #tpu.memory_space<vmem>>, vector<16x64xbf16>,
    %c1 = arith.constant 1 : index
    %c0_11 = arith.constant 0 : index
    %c0_12 = arith.constant 0 : index
    %13 = vector.load %arg1[%c1, %c0_11, %c0_12] : memref<9x16x256xbf16, #tpu.memory_space<vmem>>, vector<1x16x256xbf16>
    %14 = vector.shape_cast %13 : vector<1x16x256xbf16> to vector<16x256xbf16>
    %c0_13 = arith.constant 0 : index
    %c0_14 = arith.constant 0 : index
    %15 = vector.load %arg2[%c0_13, %c0_14] : memref<256x289xbf16, #tpu.memory_space<vmem>>, vector<256x289xbf16>
    %cst_15 = arith.constant dense<0.000000e+00> : vector<16x289xf32>
    %16 = tpu.matmul %14, %15, %cst_15 {dimension_numbers = #tpu.dot_dimension_numbers<[1], [0], [0], [1], [0, 0, 1, 1], [], []>} : vector<16x256xbf16>, vector<256x289xbf16>, vector<16x289xf32> -> vector<16x289xf32>
    %cst_16 = arith.constant 0.000000e+00 : f32
    %17 = vector.broadcast %cst_16 : f32 to vector<16x289xf32>
    %18 = arith.maximumf %16, %17 : vector<16x289xf32>
    %19 = arith.truncf %18 : vector<16x289xf32> to vector<16x289xbf16>
    %c0_17 = arith.constant 0 : index
    %c0_18 = arith.constant 0 : index
    %20 = vector.load %arg3[%c0_17, %c0_18] : memref<289x64xbf16, #tpu.memory_space<vmem>>, vector<289x64xbf16>
    %cst_19 = arith.constant dense<0.000000e+00> : vector<16x64xf32>
    %21 = tpu.matmul %19, %20, %cst_19 {dimension_numbers = #tpu.dot_dimension_numbers<[1], [0], [0], [1], [0, 0, 1, 1], [], []>} : vector<16x289xbf16>, vector<289x64xbf16>, vector<16x64xf32> -> vector<16x64xf32>
    %cst_20 = arith.constant 0.000000e+00 : f32
    %22 = vector.broadcast %cst_20 : f32 to vector<16x64xf32>
    %23 = arith.maximumf %21, %22 : vector<16x64xf32>
    %24 = arith.truncf %23 : vector<16x64xf32> to vector<16x64xbf16>
    %c0_21 = arith.constant 0 : index
    %c64 = arith.constant 64 : index
    %25 = vector.load %arg7[%c0_21, %c64] : memref<16x576xbf16, #tpu.memory_space<vmem>>, vector<16x64xbf16>
    tpu.vector_store %arg7[%c0_21, %c64], %24 {strides = array<i32>} : memref<16x576xbf16, #tpu.memory_space<vmem>>, vector<16x64xbf16>,
    %c2 = arith.constant 2 : index
    %c0_22 = arith.constant 0 : index
    %c0_23 = arith.constant 0 : index
    %26 = vector.load %arg1[%c2, %c0_22, %c0_23] : memref<9x16x256xbf16, #tpu.memory_space<vmem>>, vector<1x16x256xbf16>
    %27 = vector.shape_cast %26 : vector<1x16x256xbf16> to vector<16x256xbf16>
    %c0_24 = arith.constant 0 : index
    %c0_25 = arith.constant 0 : index
    %28 = vector.load %arg2[%c0_24, %c0_25] : memref<256x289xbf16, #tpu.memory_space<vmem>>, vector<256x289xbf16>
    %cst_26 = arith.constant dense<0.000000e+00> : vector<16x289xf32>
    %29 = tpu.matmul %27, %28, %cst_26 {dimension_numbers = #tpu.dot_dimension_numbers<[1], [0], [0], [1], [0, 0, 1, 1], [], []>} : vector<16x256xbf16>, vector<256x289xbf16>, vector<16x289xf32> -> vector<16x289xf32>
    %cst_27 = arith.constant 0.000000e+00 : f32
    %30 = vector.broadcast %cst_27 : f32 to vector<16x289xf32>
    %31 = arith.maximumf %29, %30 : vector<16x289xf32>
    %32 = arith.truncf %31 : vector<16x289xf32> to vector<16x289xbf16>
    %c0_28 = arith.constant 0 : index
    %c0_29 = arith.constant 0 : index
    %33 = vector.load %arg3[%c0_28, %c0_29] : memref<289x64xbf16, #tpu.memory_space<vmem>>, vector<289x64xbf16>
    %cst_30 = arith.constant dense<0.000000e+00> : vector<16x64xf32>
    %34 = tpu.matmul %32, %33, %cst_30 {dimension_numbers = #tpu.dot_dimension_numbers<[1], [0], [0], [1], [0, 0, 1, 1], [], []>} : vector<16x289xbf16>, vector<289x64xbf16>, vector<16x64xf32> -> vector<16x64xf32>
    %cst_31 = arith.constant 0.000000e+00 : f32
    %35 = vector.broadcast %cst_31 : f32 to vector<16x64xf32>
    %36 = arith.maximumf %34, %35 : vector<16x64xf32>
    %37 = arith.truncf %36 : vector<16x64xf32> to vector<16x64xbf16>
    %c0_32 = arith.constant 0 : index
    %c128 = arith.constant 128 : index
    %38 = vector.load %arg7[%c0_32, %c128] : memref<16x576xbf16, #tpu.memory_space<vmem>>, vector<16x64xbf16>
    tpu.vector_store %arg7[%c0_32, %c128], %37 {strides = array<i32>} : memref<16x576xbf16, #tpu.memory_space<vmem>>, vector<16x64xbf16>,
    %c3 = arith.constant 3 : index
    %c0_33 = arith.constant 0 : index
    %c0_34 = arith.constant 0 : index
    %39 = vector.load %arg1[%c3, %c0_33, %c0_34] : memref<9x16x256xbf16, #tpu.memory_space<vmem>>, vector<1x16x256xbf16>
    %40 = vector.shape_cast %39 : vector<1x16x256xbf16> to vector<16x256xbf16>
    %c0_35 = arith.constant 0 : index
    %c0_36 = arith.constant 0 : index
    %41 = vector.load %arg2[%c0_35, %c0_36] : memref<256x289xbf16, #tpu.memory_space<vmem>>, vector<256x289xbf16>
    %cst_37 = arith.constant dense<0.000000e+00> : vector<16x289xf32>
    %42 = tpu.matmul %40, %41, %cst_37 {dimension_numbers = #tpu.dot_dimension_numbers<[1], [0], [0], [1], [0, 0, 1, 1], [], []>} : vector<16x256xbf16>, vector<256x289xbf16>, vector<16x289xf32> -> vector<16x289xf32>
    %cst_38 = arith.constant 0.000000e+00 : f32
    %43 = vector.broadcast %cst_38 : f32 to vector<16x289xf32>
    %44 = arith.maximumf %42, %43 : vector<16x289xf32>
    %45 = arith.truncf %44 : vector<16x289xf32> to vector<16x289xbf16>
    %c0_39 = arith.constant 0 : index
    %c0_40 = arith.constant 0 : index
    %46 = vector.load %arg3[%c0_39, %c0_40] : memref<289x64xbf16, #tpu.memory_space<vmem>>, vector<289x64xbf16>
    %cst_41 = arith.constant dense<0.000000e+00> : vector<16x64xf32>
    %47 = tpu.matmul %45, %46, %cst_41 {dimension_numbers = #tpu.dot_dimension_numbers<[1], [0], [0], [1], [0, 0, 1, 1], [], []>} : vector<16x289xbf16>, vector<289x64xbf16>, vector<16x64xf32> -> vector<16x64xf32>
    %cst_42 = arith.constant 0.000000e+00 : f32
    %48 = vector.broadcast %cst_42 : f32 to vector<16x64xf32>
    %49 = arith.maximumf %47, %48 : vector<16x64xf32>
    %50 = arith.truncf %49 : vector<16x64xf32> to vector<16x64xbf16>
    %c0_43 = arith.constant 0 : index
    %c192 = arith.constant 192 : index
    %51 = vector.load %arg7[%c0_43, %c192] : memref<16x576xbf16, #tpu.memory_space<vmem>>, vector<16x64xbf16>
    tpu.vector_store %arg7[%c0_43, %c192], %50 {strides = array<i32>} : memref<16x576xbf16, #tpu.memory_space<vmem>>, vector<16x64xbf16>,
    %c4 = arith.constant 4 : index
    %c0_44 = arith.constant 0 : index
    %c0_45 = arith.constant 0 : index
    %52 = vector.load %arg1[%c4, %c0_44, %c0_45] : memref<9x16x256xbf16, #tpu.memory_space<vmem>>, vector<1x16x256xbf16>
    %53 = vector.shape_cast %52 : vector<1x16x256xbf16> to vector<16x256xbf16>
    %c0_46 = arith.constant 0 : index
    %c0_47 = arith.constant 0 : index
    %54 = vector.load %arg2[%c0_46, %c0_47] : memref<256x289xbf16, #tpu.memory_space<vmem>>, vector<256x289xbf16>
    %cst_48 = arith.constant dense<0.000000e+00> : vector<16x289xf32>
    %55 = tpu.matmul %53, %54, %cst_48 {dimension_numbers = #tpu.dot_dimension_numbers<[1], [0], [0], [1], [0, 0, 1, 1], [], []>} : vector<16x256xbf16>, vector<256x289xbf16>, vector<16x289xf32> -> vector<16x289xf32>
    %cst_49 = arith.constant 0.000000e+00 : f32
    %56 = vector.broadcast %cst_49 : f32 to vector<16x289xf32>
    %57 = arith.maximumf %55, %56 : vector<16x289xf32>
    %58 = arith.truncf %57 : vector<16x289xf32> to vector<16x289xbf16>
    %c0_50 = arith.constant 0 : index
    %c0_51 = arith.constant 0 : index
    %59 = vector.load %arg3[%c0_50, %c0_51] : memref<289x64xbf16, #tpu.memory_space<vmem>>, vector<289x64xbf16>
    %cst_52 = arith.constant dense<0.000000e+00> : vector<16x64xf32>
    %60 = tpu.matmul %58, %59, %cst_52 {dimension_numbers = #tpu.dot_dimension_numbers<[1], [0], [0], [1], [0, 0, 1, 1], [], []>} : vector<16x289xbf16>, vector<289x64xbf16>, vector<16x64xf32> -> vector<16x64xf32>
    %cst_53 = arith.constant 0.000000e+00 : f32
    %61 = vector.broadcast %cst_53 : f32 to vector<16x64xf32>
    %62 = arith.maximumf %60, %61 : vector<16x64xf32>
    %63 = arith.truncf %62 : vector<16x64xf32> to vector<16x64xbf16>
    %c0_54 = arith.constant 0 : index
    %c256 = arith.constant 256 : index
    %64 = vector.load %arg7[%c0_54, %c256] : memref<16x576xbf16, #tpu.memory_space<vmem>>, vector<16x64xbf16>
    tpu.vector_store %arg7[%c0_54, %c256], %63 {strides = array<i32>} : memref<16x576xbf16, #tpu.memory_space<vmem>>, vector<16x64xbf16>,
    %c5 = arith.constant 5 : index
    %c0_55 = arith.constant 0 : index
    %c0_56 = arith.constant 0 : index
    %65 = vector.load %arg1[%c5, %c0_55, %c0_56] : memref<9x16x256xbf16, #tpu.memory_space<vmem>>, vector<1x16x256xbf16>
    %66 = vector.shape_cast %65 : vector<1x16x256xbf16> to vector<16x256xbf16>
    %c0_57 = arith.constant 0 : index
    %c0_58 = arith.constant 0 : index
    %67 = vector.load %arg2[%c0_57, %c0_58] : memref<256x289xbf16, #tpu.memory_space<vmem>>, vector<256x289xbf16>
    %cst_59 = arith.constant dense<0.000000e+00> : vector<16x289xf32>
    %68 = tpu.matmul %66, %67, %cst_59 {dimension_numbers = #tpu.dot_dimension_numbers<[1], [0], [0], [1], [0, 0, 1, 1], [], []>} : vector<16x256xbf16>, vector<256x289xbf16>, vector<16x289xf32> -> vector<16x289xf32>
    %cst_60 = arith.constant 0.000000e+00 : f32
    %69 = vector.broadcast %cst_60 : f32 to vector<16x289xf32>
    %70 = arith.maximumf %68, %69 : vector<16x289xf32>
    %71 = arith.truncf %70 : vector<16x289xf32> to vector<16x289xbf16>
    %c0_61 = arith.constant 0 : index
    %c0_62 = arith.constant 0 : index
    %72 = vector.load %arg3[%c0_61, %c0_62] : memref<289x64xbf16, #tpu.memory_space<vmem>>, vector<289x64xbf16>
    %cst_63 = arith.constant dense<0.000000e+00> : vector<16x64xf32>
    %73 = tpu.matmul %71, %72, %cst_63 {dimension_numbers = #tpu.dot_dimension_numbers<[1], [0], [0], [1], [0, 0, 1, 1], [], []>} : vector<16x289xbf16>, vector<289x64xbf16>, vector<16x64xf32> -> vector<16x64xf32>
    %cst_64 = arith.constant 0.000000e+00 : f32
    %74 = vector.broadcast %cst_64 : f32 to vector<16x64xf32>
    %75 = arith.maximumf %73, %74 : vector<16x64xf32>
    %76 = arith.truncf %75 : vector<16x64xf32> to vector<16x64xbf16>
    %c0_65 = arith.constant 0 : index
    %c320 = arith.constant 320 : index
    %77 = vector.load %arg7[%c0_65, %c320] : memref<16x576xbf16, #tpu.memory_space<vmem>>, vector<16x64xbf16>
    tpu.vector_store %arg7[%c0_65, %c320], %76 {strides = array<i32>} : memref<16x576xbf16, #tpu.memory_space<vmem>>, vector<16x64xbf16>,
    %c6 = arith.constant 6 : index
    %c0_66 = arith.constant 0 : index
    %c0_67 = arith.constant 0 : index
    %78 = vector.load %arg1[%c6, %c0_66, %c0_67] : memref<9x16x256xbf16, #tpu.memory_space<vmem>>, vector<1x16x256xbf16>
    %79 = vector.shape_cast %78 : vector<1x16x256xbf16> to vector<16x256xbf16>
    %c0_68 = arith.constant 0 : index
    %c0_69 = arith.constant 0 : index
    %80 = vector.load %arg2[%c0_68, %c0_69] : memref<256x289xbf16, #tpu.memory_space<vmem>>, vector<256x289xbf16>
    %cst_70 = arith.constant dense<0.000000e+00> : vector<16x289xf32>
    %81 = tpu.matmul %79, %80, %cst_70 {dimension_numbers = #tpu.dot_dimension_numbers<[1], [0], [0], [1], [0, 0, 1, 1], [], []>} : vector<16x256xbf16>, vector<256x289xbf16>, vector<16x289xf32> -> vector<16x289xf32>
    %cst_71 = arith.constant 0.000000e+00 : f32
    %82 = vector.broadcast %cst_71 : f32 to vector<16x289xf32>
    %83 = arith.maximumf %81, %82 : vector<16x289xf32>
    %84 = arith.truncf %83 : vector<16x289xf32> to vector<16x289xbf16>
    %c0_72 = arith.constant 0 : index
    %c0_73 = arith.constant 0 : index
    %85 = vector.load %arg3[%c0_72, %c0_73] : memref<289x64xbf16, #tpu.memory_space<vmem>>, vector<289x64xbf16>
    %cst_74 = arith.constant dense<0.000000e+00> : vector<16x64xf32>
    %86 = tpu.matmul %84, %85, %cst_74 {dimension_numbers = #tpu.dot_dimension_numbers<[1], [0], [0], [1], [0, 0, 1, 1], [], []>} : vector<16x289xbf16>, vector<289x64xbf16>, vector<16x64xf32> -> vector<16x64xf32>
    %cst_75 = arith.constant 0.000000e+00 : f32
    %87 = vector.broadcast %cst_75 : f32 to vector<16x64xf32>
    %88 = arith.maximumf %86, %87 : vector<16x64xf32>
    %89 = arith.truncf %88 : vector<16x64xf32> to vector<16x64xbf16>
    %c0_76 = arith.constant 0 : index
    %c384 = arith.constant 384 : index
    %90 = vector.load %arg7[%c0_76, %c384] : memref<16x576xbf16, #tpu.memory_space<vmem>>, vector<16x64xbf16>
    tpu.vector_store %arg7[%c0_76, %c384], %89 {strides = array<i32>} : memref<16x576xbf16, #tpu.memory_space<vmem>>, vector<16x64xbf16>,
    %c7 = arith.constant 7 : index
    %c0_77 = arith.constant 0 : index
    %c0_78 = arith.constant 0 : index
    %91 = vector.load %arg1[%c7, %c0_77, %c0_78] : memref<9x16x256xbf16, #tpu.memory_space<vmem>>, vector<1x16x256xbf16>
    %92 = vector.shape_cast %91 : vector<1x16x256xbf16> to vector<16x256xbf16>
    %c0_79 = arith.constant 0 : index
    %c0_80 = arith.constant 0 : index
    %93 = vector.load %arg2[%c0_79, %c0_80] : memref<256x289xbf16, #tpu.memory_space<vmem>>, vector<256x289xbf16>
    %cst_81 = arith.constant dense<0.000000e+00> : vector<16x289xf32>
    %94 = tpu.matmul %92, %93, %cst_81 {dimension_numbers = #tpu.dot_dimension_numbers<[1], [0], [0], [1], [0, 0, 1, 1], [], []>} : vector<16x256xbf16>, vector<256x289xbf16>, vector<16x289xf32> -> vector<16x289xf32>
    %cst_82 = arith.constant 0.000000e+00 : f32
    %95 = vector.broadcast %cst_82 : f32 to vector<16x289xf32>
    %96 = arith.maximumf %94, %95 : vector<16x289xf32>
    %97 = arith.truncf %96 : vector<16x289xf32> to vector<16x289xbf16>
    %c0_83 = arith.constant 0 : index
    %c0_84 = arith.constant 0 : index
    %98 = vector.load %arg3[%c0_83, %c0_84] : memref<289x64xbf16, #tpu.memory_space<vmem>>, vector<289x64xbf16>
    %cst_85 = arith.constant dense<0.000000e+00> : vector<16x64xf32>
    %99 = tpu.matmul %97, %98, %cst_85 {dimension_numbers = #tpu.dot_dimension_numbers<[1], [0], [0], [1], [0, 0, 1, 1], [], []>} : vector<16x289xbf16>, vector<289x64xbf16>, vector<16x64xf32> -> vector<16x64xf32>
    %cst_86 = arith.constant 0.000000e+00 : f32
    %100 = vector.broadcast %cst_86 : f32 to vector<16x64xf32>
    %101 = arith.maximumf %99, %100 : vector<16x64xf32>
    %102 = arith.truncf %101 : vector<16x64xf32> to vector<16x64xbf16>
    %c0_87 = arith.constant 0 : index
    %c448 = arith.constant 448 : index
    %103 = vector.load %arg7[%c0_87, %c448] : memref<16x576xbf16, #tpu.memory_space<vmem>>, vector<16x64xbf16>
    tpu.vector_store %arg7[%c0_87, %c448], %102 {strides = array<i32>} : memref<16x576xbf16, #tpu.memory_space<vmem>>, vector<16x64xbf16>,
    %c8 = arith.constant 8 : index
    %c0_88 = arith.constant 0 : index
    %c0_89 = arith.constant 0 : index
    %104 = vector.load %arg1[%c8, %c0_88, %c0_89] : memref<9x16x256xbf16, #tpu.memory_space<vmem>>, vector<1x16x256xbf16>
    %105 = vector.shape_cast %104 : vector<1x16x256xbf16> to vector<16x256xbf16>
    %c0_90 = arith.constant 0 : index
    %c0_91 = arith.constant 0 : index
    %106 = vector.load %arg2[%c0_90, %c0_91] : memref<256x289xbf16, #tpu.memory_space<vmem>>, vector<256x289xbf16>
    %cst_92 = arith.constant dense<0.000000e+00> : vector<16x289xf32>
    %107 = tpu.matmul %105, %106, %cst_92 {dimension_numbers = #tpu.dot_dimension_numbers<[1], [0], [0], [1], [0, 0, 1, 1], [], []>} : vector<16x256xbf16>, vector<256x289xbf16>, vector<16x289xf32> -> vector<16x289xf32>
    %cst_93 = arith.constant 0.000000e+00 : f32
    %108 = vector.broadcast %cst_93 : f32 to vector<16x289xf32>
    %109 = arith.maximumf %107, %108 : vector<16x289xf32>
    %110 = arith.truncf %109 : vector<16x289xf32> to vector<16x289xbf16>
    %c0_94 = arith.constant 0 : index
    %c0_95 = arith.constant 0 : index
    %111 = vector.load %arg3[%c0_94, %c0_95] : memref<289x64xbf16, #tpu.memory_space<vmem>>, vector<289x64xbf16>
    %cst_96 = arith.constant dense<0.000000e+00> : vector<16x64xf32>
    %112 = tpu.matmul %110, %111, %cst_96 {dimension_numbers = #tpu.dot_dimension_numbers<[1], [0], [0], [1], [0, 0, 1, 1], [], []>} : vector<16x289xbf16>, vector<289x64xbf16>, vector<16x64xf32> -> vector<16x64xf32>
    %cst_97 = arith.constant 0.000000e+00 : f32
    %113 = vector.broadcast %cst_97 : f32 to vector<16x64xf32>
    %114 = arith.maximumf %112, %113 : vector<16x64xf32>
    %115 = arith.truncf %114 : vector<16x64xf32> to vector<16x64xbf16>
    %c0_98 = arith.constant 0 : index
    %c512 = arith.constant 512 : index
    %116 = vector.load %arg7[%c0_98, %c512] : memref<16x576xbf16, #tpu.memory_space<vmem>>, vector<16x64xbf16>
    tpu.vector_store %arg7[%c0_98, %c512], %115 {strides = array<i32>} : memref<16x576xbf16, #tpu.memory_space<vmem>>, vector<16x64xbf16>,
    %c0_99 = arith.constant 0 : index
    %c0_100 = arith.constant 0 : index
    %117 = vector.load %arg7[%c0_99, %c0_100] : memref<16x576xbf16, #tpu.memory_space<vmem>>, vector<16x576xbf16>
    %c0_101 = arith.constant 0 : index
    %c0_102 = arith.constant 0 : index
    %118 = vector.load %arg4[%c0_101, %c0_102] : memref<576x32xbf16, #tpu.memory_space<vmem>>, vector<576x32xbf16>
    %cst_103 = arith.constant dense<0.000000e+00> : vector<16x32xf32>
    %119 = tpu.matmul %117, %118, %cst_103 {dimension_numbers = #tpu.dot_dimension_numbers<[1], [0], [0], [1], [0, 0, 1, 1], [], []>} : vector<16x576xbf16>, vector<576x32xbf16>, vector<16x32xf32> -> vector<16x32xf32>
    %c0_104 = arith.constant 0 : index
    %c0_105 = arith.constant 0 : index
    %120 = vector.load %arg5[%c0_104, %c0_105] : memref<1x32xf32, #tpu.memory_space<vmem>>, vector<1x32xf32>
    %121 = vector.broadcast %120 : vector<1x32xf32> to vector<16x32xf32>
    %122 = arith.addf %119, %121 : vector<16x32xf32>
    %cst_106 = arith.constant 0.000000e+00 : f32
    %123 = vector.broadcast %cst_106 : f32 to vector<16x32xf32>
    %124 = arith.maximumf %122, %123 : vector<16x32xf32>
    %c0_107 = arith.constant 0 : index
    %c0_108 = arith.constant 0 : index
    %125 = vector.load %arg6[%c0_107, %c0_108] : memref<16x32xf32, #tpu.memory_space<vmem>>, vector<16x32xf32>
    tpu.vector_store %arg6[%c0_107, %c0_108], %124 {strides = array<i32>} : memref<16x32xf32, #tpu.memory_space<vmem>>, vector<16x32xf32>,
    return
  }
  func.func @transform_0(%arg0: i32) -> (i32, i32, i32) {
    %c0_i32 = arith.constant 0 : i32
    %c0_i32_0 = arith.constant 0 : i32
    %c0_i32_1 = arith.constant 0 : i32
    return %c0_i32, %arg0, %c0_i32_0 : i32, i32, i32
  }
  func.func @transform_1(%arg0: i32) -> (i32, i32) {
    %c0_i32 = arith.constant 0 : i32
    %c0_i32_0 = arith.constant 0 : i32
    %c0_i32_1 = arith.constant 0 : i32
    return %c0_i32, %c0_i32_0 : i32, i32
  }
  func.func @transform_2(%arg0: i32) -> (i32, i32) {
    %c0_i32 = arith.constant 0 : i32
    %c0_i32_0 = arith.constant 0 : i32
    %c0_i32_1 = arith.constant 0 : i32
    return %c0_i32, %c0_i32_0 : i32, i32
  }
  func.func @transform_3(%arg0: i32) -> (i32, i32) {
    %c0_i32 = arith.constant 0 : i32
    %c0_i32_0 = arith.constant 0 : i32
    %c0_i32_1 = arith.constant 0 : i32
    return %c0_i32, %c0_i32_0 : i32, i32
  }
  func.func @transform_4(%arg0: i32) -> (i32, i32) {
    %c0_i32 = arith.constant 0 : i32
    %c0_i32_0 = arith.constant 0 : i32
    %c0_i32_1 = arith.constant 0 : i32
    return %c0_i32, %c0_i32_0 : i32, i32
  }
  func.func @transform_5(%arg0: i32) -> (i32, i32) {
    %c0_i32 = arith.constant 0 : i32
    %c0_i32_0 = arith.constant 0 : i32
    return %arg0, %c0_i32 : i32, i32
  }
}

</mosaic_0001>

<llo_original>
// kernel: encoders_forward.1
$region0: #{encoders_forward.1}
  #allocation0 [shape = 'u32[]', space=smem, size = 0x4, offset = 0x4, fixed_abs, tag = 'smem constant byte address 0x4 - core index']
  #allocation1 [shape = 'u32[144,128]{1,0:T(1,128)}', space=vmem, size = 0x12000, scoped, tag = 'internal scratch']
  #allocation2 [shape = 'bf16[16,576]{1,0:T(8,128)(2,1)}', space=vmem, size = 0x5000, scoped, tag = 'scratch operand']
  %s0 = inlined_call_operand.vmem [shape: bf16[9,16,256], index: 0, kind: input, shape index: {}]
  %s1 = inlined_call_operand.vmem [shape: bf16[256,289], index: 1, kind: input, shape index: {}]
  %s2 = inlined_call_operand.vmem [shape: bf16[289,64], index: 2, kind: input, shape index: {}]
  %s3 = inlined_call_operand.vmem [shape: bf16[576,32], index: 3, kind: input, shape index: {}]
  %s4 = inlined_call_operand.vmem [shape: f32[1,32], index: 4, kind: input, shape index: {}]
  %s5 = inlined_call_operand.vmem [shape: f32[16,32], index: 5, kind: output, shape index: {}]
  %s6 = sld [smem:[#allocation0]]
  $region30: #{encoders_forward.1} parent=0
    _
  %s8 = ssub.s32 1, %s6
  %s9 = scalar_select 0, %s8, %s6
  // Predicated region
  $region2: #{encoders_forward.1} parent=0 // pred_check
    _
  $region3: #{encoders_forward.1} parent=0 // pred_check_branch
    %11 = sbr.rel (0) target = $region5
  $region4: #{encoders_forward.1} parent=0 // pred_region
    _
  $region5: #{encoders_forward.1} parent=0 // pred_fallthru
    _
  // Predicated region
  $region6: #{encoders_forward.1} parent=0 // pred_check
    _
  $region7: #{encoders_forward.1} parent=0 // pred_check_branch
    %13 = sbr.rel (0) target = $region9
  $region8: #{encoders_forward.1} parent=0 // pred_region
    _
  $region9: #{encoders_forward.1} parent=0 // pred_fallthru
    _
  // Predicated region
  $region10: #{encoders_forward.1} parent=0 // pred_check
    _
  $region11: #{encoders_forward.1} parent=0 // pred_check_branch
    %15 = sbr.rel (0) target = $region13
  $region12: #{encoders_forward.1} parent=0 // pred_region
    _
  $region13: #{encoders_forward.1} parent=0 // pred_fallthru
    _
  // Predicated region
  $region14: #{encoders_forward.1} parent=0 // pred_check
    _
  $region15: #{encoders_forward.1} parent=0 // pred_check_branch
    %17 = sbr.rel (0) target = $region17
  $region16: #{encoders_forward.1} parent=0 // pred_region
    _
  $region17: #{encoders_forward.1} parent=0 // pred_fallthru
    _
  // Predicated region
  $region18: #{encoders_forward.1} parent=0 // pred_check
    _
  $region19: #{encoders_forward.1} parent=0 // pred_check_branch
    %19 = sbr.rel (0) target = $region21
  $region20: #{encoders_forward.1} parent=0 // pred_region
    _
  $region21: #{encoders_forward.1} parent=0 // pred_fallthru
    _
  %v21 = vld [vmem:[%s0] sm:$0xff]
  %v22 = vld [vmem:[%s0 + $0x8] sm:$0xff]
  %v23 = vld [vmem:[%s1] sm:$0xff]
  %v24 = vld [vmem:[%s1 + $0x8] sm:$0xf]
  %v25 = vld [vmem:[%s1 + $0xc] sm:$0xff]
  %v26 = vld [vmem:[%s1 + $0x14] sm:$0xf]
  %v27 = vld [vmem:[%s1 + $0x18] sm:$0xff]
  %v28 = vld [vmem:[%s1 + $0x20] sm:$0xf]
  %v29 = vld [vmem:[%s1 + $0x24] sm:$0xff]
  %v30 = vld [vmem:[%s1 + $0x2c] sm:$0xf]
  %v31 = vld [vmem:[%s1 + $0x30] sm:$0xff]
  %v32 = vld [vmem:[%s1 + $0x38] sm:$0xf]
  %v33 = vld [vmem:[%s1 + $0x3c] sm:$0xff]
  %v34 = vld [vmem:[%s1 + $0x44] sm:$0xf]
  %v35 = vld [vmem:[%s1 + $0x48] sm:$0xff]
  %v36 = vld [vmem:[%s1 + $0x50] sm:$0xf]
  %v37 = vld [vmem:[%s1 + $0x54] sm:$0xff]
  %v38 = vld [vmem:[%s1 + $0x5c] sm:$0xf]
  %v39 = vld [vmem:[%s1 + $0x60] sm:$0xff]
  %v40 = vld [vmem:[%s1 + $0x68] sm:$0xf]
  %v41 = vld [vmem:[%s1 + $0x6c] sm:$0xff]
  %v42 = vld [vmem:[%s1 + $0x74] sm:$0xf]
  %v43 = vld [vmem:[%s1 + $0x78] sm:$0xff]
  %v44 = vld [vmem:[%s1 + $0x80] sm:$0xf]
  %v45 = vld [vmem:[%s1 + $0x84] sm:$0xff]
  %v46 = vld [vmem:[%s1 + $0x8c] sm:$0xf]
  %v47 = vld [vmem:[%s1 + $0x90] sm:$0xff]
  %v48 = vld [vmem:[%s1 + $0x98] sm:$0xf]
  %v49 = vld [vmem:[%s1 + $0x9c] sm:$0xff]
  %v50 = vld [vmem:[%s1 + $0xa4] sm:$0xf]
  %v51 = vld [vmem:[%s1 + $0xa8] sm:$0xff]
  %v52 = vld [vmem:[%s1 + $0xb0] sm:$0xf]
  %v53 = vld [vmem:[%s1 + $0xb4] sm:$0xff]
  %v54 = vld [vmem:[%s1 + $0xbc] sm:$0xf]
  %v55 = vld [vmem:[%s1 + $0xc0] sm:$0xff]
  %v56 = vld [vmem:[%s1 + $0xc8] sm:$0xf]
  %v57 = vld [vmem:[%s1 + $0xcc] sm:$0xff]
  %v58 = vld [vmem:[%s1 + $0xd4] sm:$0xf]
  %v59 = vld [vmem:[%s1 + $0xd8] sm:$0xff]
  %v60 = vld [vmem:[%s1 + $0xe0] sm:$0xf]
  %v61 = vld [vmem:[%s1 + $0xe4] sm:$0xff]
  %v62 = vld [vmem:[%s1 + $0xec] sm:$0xf]
  %v63 = vld [vmem:[%s1 + $0xf0] sm:$0xff]
  %v64 = vld [vmem:[%s1 + $0xf8] sm:$0xf]
  %v65 = vld [vmem:[%s1 + $0xfc] sm:$0xff]
  %v66 = vld [vmem:[%s1 + $0x104] sm:$0xf]
  %v67 = vld [vmem:[%s1 + $0x108] sm:$0xff]
  %v68 = vld [vmem:[%s1 + $0x110] sm:$0xf]
  %v69 = vld [vmem:[%s1 + $0x114] sm:$0xff]
  %v70 = vld [vmem:[%s1 + $0x11c] sm:$0xf]
  %v71 = vld [vmem:[%s1 + $0x120] sm:$0xff]
  %v72 = vld [vmem:[%s1 + $0x128] sm:$0xf]
  %v73 = vld [vmem:[%s1 + $0x12c] sm:$0xff]
  %v74 = vld [vmem:[%s1 + $0x134] sm:$0xf]
  %v75 = vld [vmem:[%s1 + $0x138] sm:$0xff]
  %v76 = vld [vmem:[%s1 + $0x140] sm:$0xf]
  %v77 = vld [vmem:[%s1 + $0x144] sm:$0xff]
  %v78 = vld [vmem:[%s1 + $0x14c] sm:$0xf]
  %v79 = vld [vmem:[%s1 + $0x150] sm:$0xff]
  %v80 = vld [vmem:[%s1 + $0x158] sm:$0xf]
  %v81 = vld [vmem:[%s1 + $0x15c] sm:$0xff]
  %v82 = vld [vmem:[%s1 + $0x164] sm:$0xf]
  %v83 = vld [vmem:[%s1 + $0x168] sm:$0xff]
  %v84 = vld [vmem:[%s1 + $0x170] sm:$0xf]
  %v85 = vld [vmem:[%s1 + $0x174] sm:$0xff]
  %v86 = vld [vmem:[%s1 + $0x17c] sm:$0xf]
  %v89 = vunpack.c.l.b16 %v21
  %v90 = vunpack.c.h.b16 %v21
  %v91 = vunpack.c.l.b16 %v22
  %v92 = vunpack.c.h.b16 %v22
  %v93 = vpack.c.b16 %v91, %v89
  %v94 = vpack.c.b16 %v92, %v90
  %v161 = vunpack.c.l.b16 %v23
  %v162 = vunpack.c.h.b16 %v23
  %v163 = vunpack.c.l.b16 %v24
  %v164 = vunpack.c.l.b16 %v25
  %v165 = vunpack.c.h.b16 %v25
  %v166 = vunpack.c.l.b16 %v26
  %v167 = vunpack.c.l.b16 %v27
  %v168 = vunpack.c.h.b16 %v27
  %v169 = vunpack.c.l.b16 %v28
  %v170 = vunpack.c.l.b16 %v29
  %v171 = vunpack.c.h.b16 %v29
  %v172 = vunpack.c.l.b16 %v30
  %v173 = vunpack.c.l.b16 %v31
  %v174 = vunpack.c.h.b16 %v31
  %v175 = vunpack.c.l.b16 %v32
  %v176 = vunpack.c.l.b16 %v33
  %v177 = vunpack.c.h.b16 %v33
  %v178 = vunpack.c.l.b16 %v34
  %v179 = vunpack.c.l.b16 %v35
  %v180 = vunpack.c.h.b16 %v35
  %v181 = vunpack.c.l.b16 %v36
  %v182 = vunpack.c.l.b16 %v37
  %v183 = vunpack.c.h.b16 %v37
  %v184 = vunpack.c.l.b16 %v38
  %v185 = vunpack.c.l.b16 %v39
  %v186 = vunpack.c.h.b16 %v39
  %v187 = vunpack.c.l.b16 %v40
  %v188 = vunpack.c.l.b16 %v41
  %v189 = vunpack.c.h.b16 %v41
  %v190 = vunpack.c.l.b16 %v42
  %v191 = vunpack.c.l.b16 %v43
  %v192 = vunpack.c.h.b16 %v43
  %v193 = vunpack.c.l.b16 %v44
  %v194 = vunpack.c.l.b16 %v45
  %v195 = vunpack.c.h.b16 %v45
  %v196 = vunpack.c.l.b16 %v46
  %v197 = vunpack.c.l.b16 %v47
  %v198 = vunpack.c.h.b16 %v47
  %v199 = vunpack.c.l.b16 %v48
  %v200 = vunpack.c.l.b16 %v49
  %v201 = vunpack.c.h.b16 %v49
  %v202 = vunpack.c.l.b16 %v50
  %v203 = vunpack.c.l.b16 %v51
  %v204 = vunpack.c.h.b16 %v51
  %v205 = vunpack.c.l.b16 %v52
  %v206 = vunpack.c.l.b16 %v53
  %v207 = vunpack.c.h.b16 %v53
  %v208 = vunpack.c.l.b16 %v54
  %v209 = vunpack.c.l.b16 %v55
  %v210 = vunpack.c.h.b16 %v55
  %v211 = vunpack.c.l.b16 %v56
  %v212 = vunpack.c.l.b16 %v57
  %v213 = vunpack.c.h.b16 %v57
  %v214 = vunpack.c.l.b16 %v58
  %v215 = vunpack.c.l.b16 %v59
  %v216 = vunpack.c.h.b16 %v59
  %v217 = vunpack.c.l.b16 %v60
  %v218 = vunpack.c.l.b16 %v61
  %v219 = vunpack.c.h.b16 %v61
  %v220 = vunpack.c.l.b16 %v62
  %v221 = vunpack.c.l.b16 %v63
  %v222 = vunpack.c.h.b16 %v63
  %v223 = vunpack.c.l.b16 %v64
  %v224 = vunpack.c.l.b16 %v65
  %v225 = vunpack.c.h.b16 %v65
  %v226 = vunpack.c.l.b16 %v66
  %v227 = vunpack.c.l.b16 %v67
  %v228 = vunpack.c.h.b16 %v67
  %v229 = vunpack.c.l.b16 %v68
  %v230 = vunpack.c.l.b16 %v69
  %v231 = vunpack.c.h.b16 %v69
  %v232 = vunpack.c.l.b16 %v70
  %v233 = vunpack.c.l.b16 %v71
  %v234 = vunpack.c.h.b16 %v71
  %v235 = vunpack.c.l.b16 %v72
  %v236 = vunpack.c.l.b16 %v73
  %v237 = vunpack.c.h.b16 %v73
  %v238 = vunpack.c.l.b16 %v74
  %v239 = vunpack.c.l.b16 %v75
  %v240 = vunpack.c.h.b16 %v75
  %v241 = vunpack.c.l.b16 %v76
  %v242 = vunpack.c.l.b16 %v77
  %v243 = vunpack.c.h.b16 %v77
  %v244 = vunpack.c.l.b16 %v78
  %v245 = vunpack.c.l.b16 %v79
  %v246 = vunpack.c.h.b16 %v79
  %v247 = vunpack.c.l.b16 %v80
  %v248 = vunpack.c.l.b16 %v81
  %v249 = vunpack.c.h.b16 %v81
  %v250 = vunpack.c.l.b16 %v82
  %v251 = vunpack.c.l.b16 %v83
  %v252 = vunpack.c.h.b16 %v83
  %v253 = vunpack.c.l.b16 %v84
  %v254 = vunpack.c.l.b16 %v85
  %v255 = vunpack.c.h.b16 %v85
  %v256 = vunpack.c.l.b16 %v86
  %v257 = vpack.c.b16 %v164, %v161
  %v258 = vpack.c.b16 %v165, %v162
  %v259 = vpack.c.b16 %v166, %v163
  %v260 = vpack.c.b16 %v170, %v167
  %v261 = vpack.c.b16 %v171, %v168
  %v262 = vpack.c.b16 %v172, %v169
  %v263 = vpack.c.b16 %v176, %v173
  %v264 = vpack.c.b16 %v177, %v174
  %v265 = vpack.c.b16 %v178, %v175
  %v266 = vpack.c.b16 %v182, %v179
  %v267 = vpack.c.b16 %v183, %v180
  %v268 = vpack.c.b16 %v184, %v181
  %v269 = vpack.c.b16 %v188, %v185
  %v270 = vpack.c.b16 %v189, %v186
  %v271 = vpack.c.b16 %v190, %v187
  %v272 = vpack.c.b16 %v194, %v191
  %v273 = vpack.c.b16 %v195, %v192
  %v274 = vpack.c.b16 %v196, %v193
  %v275 = vpack.c.b16 %v200, %v197
  %v276 = vpack.c.b16 %v201, %v198
  %v277 = vpack.c.b16 %v202, %v199
  %v278 = vpack.c.b16 %v206, %v203
  %v279 = vpack.c.b16 %v207, %v204
  %v280 = vpack.c.b16 %v208, %v205
  %v281 = vpack.c.b16 %v212, %v209
  %v282 = vpack.c.b16 %v213, %v210
  %v283 = vpack.c.b16 %v214, %v211
  %v284 = vpack.c.b16 %v218, %v215
  %v285 = vpack.c.b16 %v219, %v216
  %v286 = vpack.c.b16 %v220, %v217
  %v287 = vpack.c.b16 %v224, %v221
  %v288 = vpack.c.b16 %v225, %v222
  %v289 = vpack.c.b16 %v226, %v223
  %v290 = vpack.c.b16 %v230, %v227
  %v291 = vpack.c.b16 %v231, %v228
  %v292 = vpack.c.b16 %v232, %v229
  %v293 = vpack.c.b16 %v236, %v233
  %v294 = vpack.c.b16 %v237, %v234
  %v295 = vpack.c.b16 %v238, %v235
  %v296 = vpack.c.b16 %v242, %v239
  %v297 = vpack.c.b16 %v243, %v240
  %v298 = vpack.c.b16 %v244, %v241
  %v299 = vpack.c.b16 %v248, %v245
  %v300 = vpack.c.b16 %v249, %v246
  %v301 = vpack.c.b16 %v250, %v247
  %v302 = vpack.c.b16 %v254, %v251
  %v303 = vpack.c.b16 %v255, %v252
  %v304 = vpack.c.b16 %v256, %v253
  %353 = vmatprep.subr.bf16.mxu0 %v279
  %354 = vmatpush1.bf16.msra.mxu0 %v278
  %355 = vmatprep.subr.bf16.mxu0 %v276
  %356 = vmatpush1.bf16.msra.mxu0 %v275
  %357 = vmatprep.subr.bf16.mxu0 %v273
  %358 = vmatpush1.bf16.msra.mxu0 %v272
  %359 = vmatprep.subr.bf16.mxu0 %v270
  %360 = vmatpush1.bf16.msra.mxu0 %v269
  %361 = vmatprep.subr.bf16.mxu0 %v267
  %362 = vmatpush1.bf16.msra.mxu0 %v266
  %363 = vmatprep.subr.bf16.mxu0 %v264
  %364 = vmatpush1.bf16.msra.mxu0 %v263
  %365 = vmatprep.subr.bf16.mxu0 %v261
  %366 = vmatpush1.bf16.msra.mxu0 %v260
  %367 = vmatprep.subr.bf16.mxu0 %v258
  %368 = vmatpush1.bf16.msra.mxu0 %v257
  %369 = vmatprep.subr.bf16.mxu0 %v303
  %370 = vmatpush2.bf16.msra.mxu0 %v302
  %371 = vmatprep.subr.bf16.mxu0 %v300
  %372 = vmatpush2.bf16.msra.mxu0 %v299
  %373 = vmatprep.subr.bf16.mxu0 %v297
  %374 = vmatpush2.bf16.msra.mxu0 %v296
  %375 = vmatprep.subr.bf16.mxu0 %v294
  %376 = vmatpush2.bf16.msra.mxu0 %v293
  %377 = vmatprep.subr.bf16.mxu0 %v291
  %378 = vmatpush2.bf16.msra.mxu0 %v290
  %379 = vmatprep.subr.bf16.mxu0 %v288
  %380 = vmatpush2.bf16.msra.mxu0 %v287
  %381 = vmatprep.subr.bf16.mxu0 %v285
  %382 = vmatpush2.bf16.msra.mxu0 %v284
  %383 = vmatprep.subr.bf16.mxu0 %v282
  %384 = vmatpush2.bf16.msra.mxu0 %v281
  %385 = vmatprep.mubr.bf16.mxu0 %v94
  %386 = vmatmul.mubr.bf16.gmra.mxu0 %v93
  %v387 = vpop.f32.mrf.mxu0
  %v388 = vadd.f32 0.0, %v387
  %v389 = vpop.f32.mrf.mxu0
  %v390 = vadd.f32 0.0, %v389
  %v391 = vpop.f32.mrf.mxu0
  %v392 = vadd.f32 0.0, %v391
  %v393 = vpop.f32.mrf.mxu0
  %v394 = vadd.f32 0.0, %v393
  %395 = vdwg.mxu0
  %396 = vmatprep.subr.bf16.mxu0 0
  %397 = vmatpush1.bf16.msra.mxu0 %v280
  %398 = vmatprep.subr.bf16.mxu0 0
  %399 = vmatpush1.bf16.msra.mxu0 %v277
  %400 = vmatprep.subr.bf16.mxu0 0
  %401 = vmatpush1.bf16.msra.mxu0 %v274
  %402 = vmatprep.subr.bf16.mxu0 0
  %403 = vmatpush1.bf16.msra.mxu0 %v271
  %404 = vmatprep.subr.bf16.mxu0 0
  %405 = vmatpush1.bf16.msra.mxu0 %v268
  %406 = vmatprep.subr.bf16.mxu0 0
  %407 = vmatpush1.bf16.msra.mxu0 %v265
  %408 = vmatprep.subr.bf16.mxu0 0
  %409 = vmatpush1.bf16.msra.mxu0 %v262
  %410 = vmatprep.subr.bf16.mxu0 0
  %411 = vmatpush1.bf16.msra.mxu0 %v259
  %412 = vmatprep.subr.bf16.mxu0 0
  %413 = vmatpush2.bf16.msra.mxu0 %v304
  %414 = vmatprep.subr.bf16.mxu0 0
  %415 = vmatpush2.bf16.msra.mxu0 %v301
  %416 = vmatprep.subr.bf16.mxu0 0
  %417 = vmatpush2.bf16.msra.mxu0 %v298
  %418 = vmatprep.subr.bf16.mxu0 0
  %419 = vmatpush2.bf16.msra.mxu0 %v295
  %420 = vmatprep.subr.bf16.mxu0 0
  %421 = vmatpush2.bf16.msra.mxu0 %v292
  %422 = vmatprep.subr.bf16.mxu0 0
  %423 = vmatpush2.bf16.msra.mxu0 %v289
  %424 = vmatprep.subr.bf16.mxu0 0
  %425 = vmatpush2.bf16.msra.mxu0 %v286
  %426 = vmatprep.subr.bf16.mxu0 0
  %427 = vmatpush2.bf16.msra.mxu0 %v283
  %428 = vmatprep.mubr.bf16.mxu0 %v94
  %429 = vmatmul.mubr.bf16.gmra.mxu0 %v93
  %v430 = vpop.f32.mrf.mxu0
  %v431 = vadd.f32 0.0, %v430
  %v432 = vpop.f32.mrf.mxu0
  %v433 = vpop.f32.mrf.mxu0
  %v434 = vadd.f32 0.0, %v433
  %v435 = vpop.f32.mrf.mxu0
  %436 = vdwg.mxu0
  %v437 = vmax.f32 %v388, 0.0
  %v438 = vmax.f32 %v390, 0.0
  %v439 = vmax.f32 %v431, 0.0
  %v440 = vmax.f32 %v392, 0.0
  %v441 = vmax.f32 %v394, 0.0
  %v442 = vmax.f32 %v434, 0.0
  %v443 = vpack.c.bf16 %v440, %v437
  %v444 = vpack.c.bf16 %v441, %v438
  %v445 = vpack.c.bf16 %v442, %v439
  %v446 = vld [vmem:[%s2] sm:$0xf]
  %v447 = vld [vmem:[%s2 + $0x4] sm:$0xf]
  %v448 = vld [vmem:[%s2 + $0x8] sm:$0xf]
  %v449 = vld [vmem:[%s2 + $0xc] sm:$0xf]
  %v450 = vld [vmem:[%s2 + $0x10] sm:$0xf]
  %v451 = vld [vmem:[%s2 + $0x14] sm:$0xf]
  %v452 = vld [vmem:[%s2 + $0x18] sm:$0xf]
  %v453 = vld [vmem:[%s2 + $0x1c] sm:$0xf]
  %v454 = vld [vmem:[%s2 + $0x20] sm:$0xf]
  %v455 = vld [vmem:[%s2 + $0x24] sm:$0xf]
  %v456 = vld [vmem:[%s2 + $0x28] sm:$0xf]
  %v457 = vld [vmem:[%s2 + $0x2c] sm:$0xf]
  %v458 = vld [vmem:[%s2 + $0x30] sm:$0xf]
  %v459 = vld [vmem:[%s2 + $0x34] sm:$0xf]
  %v460 = vld [vmem:[%s2 + $0x38] sm:$0xf]
  %v461 = vld [vmem:[%s2 + $0x3c] sm:$0xf]
  %v462 = vld [vmem:[%s2 + $0x40] sm:$0xf]
  %v463 = vld [vmem:[%s2 + $0x44] sm:$0xf]
  %v464 = vld [vmem:[%s2 + $0x48] sm:$0xf]
  %v465 = vld [vmem:[%s2 + $0x4c] sm:$0xf]
  %v466 = vld [vmem:[%s2 + $0x50] sm:$0xf]
  %v467 = vld [vmem:[%s2 + $0x54] sm:$0xf]
  %v468 = vld [vmem:[%s2 + $0x58] sm:$0xf]
  %v469 = vld [vmem:[%s2 + $0x5c] sm:$0xf]
  %v470 = vld [vmem:[%s2 + $0x60] sm:$0xf]
  %v471 = vld [vmem:[%s2 + $0x64] sm:$0xf]
  %v472 = vld [vmem:[%s2 + $0x68] sm:$0xf]
  %v473 = vld [vmem:[%s2 + $0x6c] sm:$0xf]
  %v474 = vld [vmem:[%s2 + $0x70] sm:$0xf]
  %v475 = vld [vmem:[%s2 + $0x74] sm:$0xf]
  %v476 = vld [vmem:[%s2 + $0x78] sm:$0xf]
  %v477 = vld [vmem:[%s2 + $0x7c] sm:$0xf]
  %v478 = vld [vmem:[%s2 + $0x80] sm:$0xf]
  %v479 = vld [vmem:[%s2 + $0x84] sm:$0xf]
  %v480 = vld [vmem:[%s2 + $0x88] sm:$0xf]
  %v481 = vld [vmem:[%s2 + $0x8c] sm:$0xf]
  %v482 = vld [vmem:[%s2 + $0x90] sm:$0x1]
  %v520 = vunpack.c.l.b16 %v446
  %v521 = vunpack.c.l.b16 %v447
  %v522 = vunpack.c.l.b16 %v448
  %v523 = vunpack.c.l.b16 %v449
  %v524 = vunpack.c.l.b16 %v450
  %v525 = vunpack.c.l.b16 %v451
  %v526 = vunpack.c.l.b16 %v452
  %v527 = vunpack.c.l.b16 %v453
  %v528 = vunpack.c.l.b16 %v454
  %v529 = vunpack.c.l.b16 %v455
  %v530 = vunpack.c.l.b16 %v456
  %v531 = vunpack.c.l.b16 %v457
  %v532 = vunpack.c.l.b16 %v458
  %v533 = vunpack.c.l.b16 %v459
  %v534 = vunpack.c.l.b16 %v460
  %v535 = vunpack.c.l.b16 %v461
  %v536 = vunpack.c.l.b16 %v462
  %v537 = vunpack.c.l.b16 %v463
  %v538 = vunpack.c.l.b16 %v464
  %v539 = vunpack.c.l.b16 %v465
  %v540 = vunpack.c.l.b16 %v466
  %v541 = vunpack.c.l.b16 %v467
  %v542 = vunpack.c.l.b16 %v468
  %v543 = vunpack.c.l.b16 %v469
  %v544 = vunpack.c.l.b16 %v470
  %v545 = vunpack.c.l.b16 %v471
  %v546 = vunpack.c.l.b16 %v472
  %v547 = vunpack.c.l.b16 %v473
  %v548 = vunpack.c.l.b16 %v474
  %v549 = vunpack.c.l.b16 %v475
  %v550 = vunpack.c.l.b16 %v476
  %v551 = vunpack.c.l.b16 %v477
  %v552 = vunpack.c.l.b16 %v478
  %v553 = vunpack.c.l.b16 %v479
  %v554 = vunpack.c.l.b16 %v480
  %v555 = vunpack.c.l.b16 %v481
  %v556 = vunpack.c.l.b16 %v482
  %v557 = vpack.c.b16 %v521, %v520
  %v558 = vpack.c.b16 %v523, %v522
  %v559 = vpack.c.b16 %v525, %v524
  %v560 = vpack.c.b16 %v527, %v526
  %v561 = vpack.c.b16 %v529, %v528
  %v562 = vpack.c.b16 %v531, %v530
  %v563 = vpack.c.b16 %v533, %v532
  %v564 = vpack.c.b16 %v535, %v534
  %v565 = vpack.c.b16 %v537, %v536
  %v566 = vpack.c.b16 %v539, %v538
  %v567 = vpack.c.b16 %v541, %v540
  %v568 = vpack.c.b16 %v543, %v542
  %v569 = vpack.c.b16 %v545, %v544
  %v570 = vpack.c.b16 %v547, %v546
  %v571 = vpack.c.b16 %v549, %v548
  %v572 = vpack.c.b16 %v551, %v550
  %v573 = vpack.c.b16 %v553, %v552
  %v574 = vpack.c.b16 %v555, %v554
  %v575 = vpack.c.b16 %v556, %v556
  %vm594 = vcmask 269312
  %v596 = vsel %vm594, %v445, 0
  %vm598 = vcmask 1040384
  %v599 = vsel 0, 4294967295, 65535
  %v600 = vsel %vm598, %v599, 0
  %v602 = vand.u32 %v575, %v600
  %604 = vmatprep.subr.bf16.mxu0 0
  %605 = vmatpush1.bf16.msra.mxu0 %v564
  %606 = vmatprep.subr.bf16.mxu0 0
  %607 = vmatpush1.bf16.msra.mxu0 %v563
  %608 = vmatprep.subr.bf16.mxu0 0
  %609 = vmatpush1.bf16.msra.mxu0 %v562
  %610 = vmatprep.subr.bf16.mxu0 0
  %611 = vmatpush1.bf16.msra.mxu0 %v561
  %612 = vmatprep.subr.bf16.mxu0 0
  %613 = vmatpush1.bf16.msra.mxu0 %v560
  %614 = vmatprep.subr.bf16.mxu0 0
  %615 = vmatpush1.bf16.msra.mxu0 %v559
  %616 = vmatprep.subr.bf16.mxu0 0
  %617 = vmatpush1.bf16.msra.mxu0 %v558
  %618 = vmatprep.subr.bf16.mxu0 0
  %619 = vmatpush1.bf16.msra.mxu0 %v557
  %620 = vmatprep.subr.bf16.mxu0 0
  %621 = vmatpush2.bf16.msra.mxu0 %v572
  %622 = vmatprep.subr.bf16.mxu0 0
  %623 = vmatpush2.bf16.msra.mxu0 %v571
  %624 = vmatprep.subr.bf16.mxu0 0
  %625 = vmatpush2.bf16.msra.mxu0 %v570
  %626 = vmatprep.subr.bf16.mxu0 0
  %627 = vmatpush2.bf16.msra.mxu0 %v569
  %628 = vmatprep.subr.bf16.mxu0 0
  %629 = vmatpush2.bf16.msra.mxu0 %v568
  %630 = vmatprep.subr.bf16.mxu0 0
  %631 = vmatpush2.bf16.msra.mxu0 %v567
  %632 = vmatprep.subr.bf16.mxu0 0
  %633 = vmatpush2.bf16.msra.mxu0 %v566
  %634 = vmatprep.subr.bf16.mxu0 0
  %635 = vmatpush2.bf16.msra.mxu0 %v565
  %636 = vmatprep.mubr.bf16.mxu0 %v444
  %637 = vmatmul.mubr.bf16.gmra.mxu0 %v443
  %v638 = vpop.f32.mrf.mxu0
  %v639 = vadd.f32 0.0, %v638
  %v640 = vpop.f32.mrf.mxu0
  %v641 = vpop.f32.mrf.mxu0
  %v642 = vadd.f32 0.0, %v641
  %v643 = vpop.f32.mrf.mxu0
  %644 = vdwg.mxu0
  %645 = vmatprep.subr.bf16.mxu0 0
  %646 = vmatpush1.bf16.msra.mxu0 0
  %647 = vmatprep.subr.bf16.mxu0 0
  %648 = vmatpush1.bf16.msra.mxu0 0
  %649 = vmatprep.subr.bf16.mxu0 0
  %650 = vmatpush1.bf16.msra.mxu0 0
  %651 = vmatprep.subr.bf16.mxu0 0
  %652 = vmatpush1.bf16.msra.mxu0 0
  %653 = vmatprep.subr.bf16.mxu0 0
  %654 = vmatpush1.bf16.msra.mxu0 0
  %655 = vmatprep.subr.bf16.mxu0 0
  %656 = vmatpush1.bf16.msra.mxu0 %v602
  %657 = vmatprep.subr.bf16.mxu0 0
  %658 = vmatpush1.bf16.msra.mxu0 %v574
  %659 = vmatprep.subr.bf16.mxu0 0
  %660 = vmatpush1.bf16.msra.mxu0 %v573
  %661 = vmatprep.subr.bf16.mxu0 0
  %662 = vmatpush2.bf16.msra.mxu0 0
  %663 = vmatprep.subr.bf16.mxu0 0
  %664 = vmatpush2.bf16.msra.mxu0 0
  %665 = vmatprep.subr.bf16.mxu0 0
  %666 = vmatpush2.bf16.msra.mxu0 0
  %667 = vmatprep.subr.bf16.mxu0 0
  %668 = vmatpush2.bf16.msra.mxu0 0
  %669 = vmatprep.subr.bf16.mxu0 0
  %670 = vmatpush2.bf16.msra.mxu0 0
  %671 = vmatprep.subr.bf16.mxu0 0
  %672 = vmatpush2.bf16.msra.mxu0 0
  %673 = vmatprep.subr.bf16.mxu0 0
  %674 = vmatpush2.bf16.msra.mxu0 0
  %675 = vmatprep.subr.bf16.mxu0 0
  %676 = vmatpush2.bf16.msra.mxu0 0
  %677 = vmatprep.mubr.bf16.mxu0 0
  %678 = vmatmul.mubr.bf16.gmra.mxu0 %v596
  %v679 = vpop.f32.mrf.mxu0
  %v680 = vadd.f32 %v639, %v679
  %v681 = vpop.f32.mrf.mxu0
  %v682 = vpop.f32.mrf.mxu0
  %v683 = vadd.f32 %v642, %v682
  %v684 = vpop.f32.mrf.mxu0
  %685 = vdwg.mxu0
  %v686 = vmax.f32 %v680, 0.0
  %v687 = vmax.f32 %v683, 0.0
  %v688 = vpack.c.bf16 %v687, %v686
  %v690 = vunpack.c.l.b16 %v688
  %v691 = vunpack.c.h.b16 %v688
  %v692 = vpack.c.b16 %v690, %v690
  %v693 = vpack.c.b16 %v691, %v691
  %vm696 = vcmask 519168
  %697 = vst.msk [vmem:[#allocation2] sm:$0xf] %vm696, %v692
  %698 = vst.msk [vmem:[#allocation2 + $0x14] sm:$0xf] %vm696, %v693
  %s699 = scalar_lea.vmem %s0, 16
  %v700 = vld [vmem:[%s699] sm:$0xff]
  %v701 = vld [vmem:[%s699 + $0x8] sm:$0xff]
  %v702 = vld [vmem:[%s1] sm:$0xff]
  %v703 = vld [vmem:[%s1 + $0x8] sm:$0xf]
  %v704 = vld [vmem:[%s1 + $0xc] sm:$0xff]
  %v705 = vld [vmem:[%s1 + $0x14] sm:$0xf]
  %v706 = vld [vmem:[%s1 + $0x18] sm:$0xff]
  %v707 = vld [vmem:[%s1 + $0x20] sm:$0xf]
  %v708 = vld [vmem:[%s1 + $0x24] sm:$0xff]
  %v709 = vld [vmem:[%s1 + $0x2c] sm:$0xf]
  %v710 = vld [vmem:[%s1 + $0x30] sm:$0xff]
  %v711 = vld [vmem:[%s1 + $0x38] sm:$0xf]
  %v712 = vld [vmem:[%s1 + $0x3c] sm:$0xff]
  %v713 = vld [vmem:[%s1 + $0x44] sm:$0xf]
  %v714 = vld [vmem:[%s1 + $0x48] sm:$0xff]
  %v715 = vld [vmem:[%s1 + $0x50] sm:$0xf]
  %v716 = vld [vmem:[%s1 + $0x54] sm:$0xff]
  %v717 = vld [vmem:[%s1 + $0x5c] sm:$0xf]
  %v718 = vld [vmem:[%s1 + $0x60] sm:$0xff]
  %v719 = vld [vmem:[%s1 + $0x68] sm:$0xf]
  %v720 = vld [vmem:[%s1 + $0x6c] sm:$0xff]
  %v721 = vld [vmem:[%s1 + $0x74] sm:$0xf]
  %v722 = vld [vmem:[%s1 + $0x78] sm:$0xff]
  %v723 = vld [vmem:[%s1 + $0x80] sm:$0xf]
  %v724 = vld [vmem:[%s1 + $0x84] sm:$0xff]
  %v725 = vld [vmem:[%s1 + $0x8c] sm:$0xf]
  %v726 = vld [vmem:[%s1 + $0x90] sm:$0xff]
  %v727 = vld [vmem:[%s1 + $0x98] sm:$0xf]
  %v728 = vld [vmem:[%s1 + $0x9c] sm:$0xff]
  %v729 = vld [vmem:[%s1 + $0xa4] sm:$0xf]
  %v730 = vld [vmem:[%s1 + $0xa8] sm:$0xff]
  %v731 = vld [vmem:[%s1 + $0xb0] sm:$0xf]
  %v732 = vld [vmem:[%s1 + $0xb4] sm:$0xff]
  %v733 = vld [vmem:[%s1 + $0xbc] sm:$0xf]
  %v734 = vld [vmem:[%s1 + $0xc0] sm:$0xff]
  %v735 = vld [vmem:[%s1 + $0xc8] sm:$0xf]
  %v736 = vld [vmem:[%s1 + $0xcc] sm:$0xff]
  %v737 = vld [vmem:[%s1 + $0xd4] sm:$0xf]
  %v738 = vld [vmem:[%s1 + $0xd8] sm:$0xff]
  %v739 = vld [vmem:[%s1 + $0xe0] sm:$0xf]
  %v740 = vld [vmem:[%s1 + $0xe4] sm:$0xff]
  %v741 = vld [vmem:[%s1 + $0xec] sm:$0xf]
  %v742 = vld [vmem:[%s1 + $0xf0] sm:$0xff]
  %v743 = vld [vmem:[%s1 + $0xf8] sm:$0xf]
  %v744 = vld [vmem:[%s1 + $0xfc] sm:$0xff]
  %v745 = vld [vmem:[%s1 + $0x104] sm:$0xf]
  %v746 = vld [vmem:[%s1 + $0x108] sm:$0xff]
  %v747 = vld [vmem:[%s1 + $0x110] sm:$0xf]
  %v748 = vld [vmem:[%s1 + $0x114] sm:$0xff]
  %v749 = vld [vmem:[%s1 + $0x11c] sm:$0xf]
  %v750 = vld [vmem:[%s1 + $0x120] sm:$0xff]
  %v751 = vld [vmem:[%s1 + $0x128] sm:$0xf]
  %v752 = vld [vmem:[%s1 + $0x12c] sm:$0xff]
  %v753 = vld [vmem:[%s1 + $0x134] sm:$0xf]
  %v754 = vld [vmem:[%s1 + $0x138] sm:$0xff]
  %v755 = vld [vmem:[%s1 + $0x140] sm:$0xf]
  %v756 = vld [vmem:[%s1 + $0x144] sm:$0xff]
  %v757 = vld [vmem:[%s1 + $0x14c] sm:$0xf]
  %v758 = vld [vmem:[%s1 + $0x150] sm:$0xff]
  %v759 = vld [vmem:[%s1 + $0x158] sm:$0xf]
  %v760 = vld [vmem:[%s1 + $0x15c] sm:$0xff]
  %v761 = vld [vmem:[%s1 + $0x164] sm:$0xf]
  %v762 = vld [vmem:[%s1 + $0x168] sm:$0xff]
  %v763 = vld [vmem:[%s1 + $0x170] sm:$0xf]
  %v764 = vld [vmem:[%s1 + $0x174] sm:$0xff]
  %v765 = vld [vmem:[%s1 + $0x17c] sm:$0xf]
  %v768 = vunpack.c.l.b16 %v700
  %v769 = vunpack.c.h.b16 %v700
  %v770 = vunpack.c.l.b16 %v701
  %v771 = vunpack.c.h.b16 %v701
  %v772 = vpack.c.b16 %v770, %v768
  %v773 = vpack.c.b16 %v771, %v769
  %v840 = vunpack.c.l.b16 %v702
  %v841 = vunpack.c.h.b16 %v702
  %v842 = vunpack.c.l.b16 %v703
  %v843 = vunpack.c.l.b16 %v704
  %v844 = vunpack.c.h.b16 %v704
  %v845 = vunpack.c.l.b16 %v705
  %v846 = vunpack.c.l.b16 %v706
  %v847 = vunpack.c.h.b16 %v706
  %v848 = vunpack.c.l.b16 %v707
  %v849 = vunpack.c.l.b16 %v708
  %v850 = vunpack.c.h.b16 %v708
  %v851 = vunpack.c.l.b16 %v709
  %v852 = vunpack.c.l.b16 %v710
  %v853 = vunpack.c.h.b16 %v710
  %v854 = vunpack.c.l.b16 %v711
  %v855 = vunpack.c.l.b16 %v712
  %v856 = vunpack.c.h.b16 %v712
  %v857 = vunpack.c.l.b16 %v713
  %v858 = vunpack.c.l.b16 %v714
  %v859 = vunpack.c.h.b16 %v714
  %v860 = vunpack.c.l.b16 %v715
  %v861 = vunpack.c.l.b16 %v716
  %v862 = vunpack.c.h.b16 %v716
  %v863 = vunpack.c.l.b16 %v717
  %v864 = vunpack.c.l.b16 %v718
  %v865 = vunpack.c.h.b16 %v718
  %v866 = vunpack.c.l.b16 %v719
  %v867 = vunpack.c.l.b16 %v720
  %v868 = vunpack.c.h.b16 %v720
  %v869 = vunpack.c.l.b16 %v721
  %v870 = vunpack.c.l.b16 %v722
  %v871 = vunpack.c.h.b16 %v722
  %v872 = vunpack.c.l.b16 %v723
  %v873 = vunpack.c.l.b16 %v724
  %v874 = vunpack.c.h.b16 %v724
  %v875 = vunpack.c.l.b16 %v725
  %v876 = vunpack.c.l.b16 %v726
  %v877 = vunpack.c.h.b16 %v726
  %v878 = vunpack.c.l.b16 %v727
  %v879 = vunpack.c.l.b16 %v728
  %v880 = vunpack.c.h.b16 %v728
  %v881 = vunpack.c.l.b16 %v729
  %v882 = vunpack.c.l.b16 %v730
  %v883 = vunpack.c.h.b16 %v730
  %v884 = vunpack.c.l.b16 %v731
  %v885 = vunpack.c.l.b16 %v732
  %v886 = vunpack.c.h.b16 %v732
  %v887 = vunpack.c.l.b16 %v733
  %v888 = vunpack.c.l.b16 %v734
  %v889 = vunpack.c.h.b16 %v734
  %v890 = vunpack.c.l.b16 %v735
  %v891 = vunpack.c.l.b16 %v736
  %v892 = vunpack.c.h.b16 %v736
  %v893 = vunpack.c.l.b16 %v737
  %v894 = vunpack.c.l.b16 %v738
  %v895 = vunpack.c.h.b16 %v738
  %v896 = vunpack.c.l.b16 %v739
  %v897 = vunpack.c.l.b16 %v740
  %v898 = vunpack.c.h.b16 %v740
  %v899 = vunpack.c.l.b16 %v741
  %v900 = vunpack.c.l.b16 %v742
  %v901 = vunpack.c.h.b16 %v742
  %v902 = vunpack.c.l.b16 %v743
  %v903 = vunpack.c.l.b16 %v744
  %v904 = vunpack.c.h.b16 %v744
  %v905 = vunpack.c.l.b16 %v745
  %v906 = vunpack.c.l.b16 %v746
  %v907 = vunpack.c.h.b16 %v746
  %v908 = vunpack.c.l.b16 %v747
  %v909 = vunpack.c.l.b16 %v748
  %v910 = vunpack.c.h.b16 %v748
  %v911 = vunpack.c.l.b16 %v749
  %v912 = vunpack.c.l.b16 %v750
  %v913 = vunpack.c.h.b16 %v750
  %v914 = vunpack.c.l.b16 %v751
  %v915 = vunpack.c.l.b16 %v752
  %v916 = vunpack.c.h.b16 %v752
  %v917 = vunpack.c.l.b16 %v753
  %v918 = vunpack.c.l.b16 %v754
  %v919 = vunpack.c.h.b16 %v754
  %v920 = vunpack.c.l.b16 %v755
  %v921 = vunpack.c.l.b16 %v756
  %v922 = vunpack.c.h.b16 %v756
  %v923 = vunpack.c.l.b16 %v757
  %v924 = vunpack.c.l.b16 %v758
  %v925 = vunpack.c.h.b16 %v758
  %v926 = vunpack.c.l.b16 %v759
  %v927 = vunpack.c.l.b16 %v760
  %v928 = vunpack.c.h.b16 %v760
  %v929 = vunpack.c.l.b16 %v761
  %v930 = vunpack.c.l.b16 %v762
  %v931 = vunpack.c.h.b16 %v762
  %v932 = vunpack.c.l.b16 %v763
  %v933 = vunpack.c.l.b16 %v764
  %v934 = vunpack.c.h.b16 %v764
  %v935 = vunpack.c.l.b16 %v765
  %v936 = vpack.c.b16 %v843, %v840
  %v937 = vpack.c.b16 %v844, %v841
  %v938 = vpack.c.b16 %v845, %v842
  %v939 = vpack.c.b16 %v849, %v846
  %v940 = vpack.c.b16 %v850, %v847
  %v941 = vpack.c.b16 %v851, %v848
  %v942 = vpack.c.b16 %v855, %v852
  %v943 = vpack.c.b16 %v856, %v853
  %v944 = vpack.c.b16 %v857, %v854
  %v945 = vpack.c.b16 %v861, %v858
  %v946 = vpack.c.b16 %v862, %v859
  %v947 = vpack.c.b16 %v863, %v860
  %v948 = vpack.c.b16 %v867, %v864
  %v949 = vpack.c.b16 %v868, %v865
  %v950 = vpack.c.b16 %v869, %v866
  %v951 = vpack.c.b16 %v873, %v870
  %v952 = vpack.c.b16 %v874, %v871
  %v953 = vpack.c.b16 %v875, %v872
  %v954 = vpack.c.b16 %v879, %v876
  %v955 = vpack.c.b16 %v880, %v877
  %v956 = vpack.c.b16 %v881, %v878
  %v957 = vpack.c.b16 %v885, %v882
  %v958 = vpack.c.b16 %v886, %v883
  %v959 = vpack.c.b16 %v887, %v884
  %v960 = vpack.c.b16 %v891, %v888
  %v961 = vpack.c.b16 %v892, %v889
  %v962 = vpack.c.b16 %v893, %v890
  %v963 = vpack.c.b16 %v897, %v894
  %v964 = vpack.c.b16 %v898, %v895
  %v965 = vpack.c.b16 %v899, %v896
  %v966 = vpack.c.b16 %v903, %v900
  %v967 = vpack.c.b16 %v904, %v901
  %v968 = vpack.c.b16 %v905, %v902
  %v969 = vpack.c.b16 %v909, %v906
  %v970 = vpack.c.b16 %v910, %v907
  %v971 = vpack.c.b16 %v911, %v908
  %v972 = vpack.c.b16 %v915, %v912
  %v973 = vpack.c.b16 %v916, %v913
  %v974 = vpack.c.b16 %v917, %v914
  %v975 = vpack.c.b16 %v921, %v918
  %v976 = vpack.c.b16 %v922, %v919
  %v977 = vpack.c.b16 %v923, %v920
  %v978 = vpack.c.b16 %v927, %v924
  %v979 = vpack.c.b16 %v928, %v925
  %v980 = vpack.c.b16 %v929, %v926
  %v981 = vpack.c.b16 %v933, %v930
  %v982 = vpack.c.b16 %v934, %v931
  %v983 = vpack.c.b16 %v935, %v932
  %1032 = vmatprep.subr.bf16.mxu0 %v958
  %1033 = vmatpush1.bf16.msra.mxu0 %v957
  %1034 = vmatprep.subr.bf16.mxu0 %v955
  %1035 = vmatpush1.bf16.msra.mxu0 %v954
  %1036 = vmatprep.subr.bf16.mxu0 %v952
  %1037 = vmatpush1.bf16.msra.mxu0 %v951
  %1038 = vmatprep.subr.bf16.mxu0 %v949
  %1039 = vmatpush1.bf16.msra.mxu0 %v948
  %1040 = vmatprep.subr.bf16.mxu0 %v946
  %1041 = vmatpush1.bf16.msra.mxu0 %v945
  %1042 = vmatprep.subr.bf16.mxu0 %v943
  %1043 = vmatpush1.bf16.msra.mxu0 %v942
  %1044 = vmatprep.subr.bf16.mxu0 %v940
  %1045 = vmatpush1.bf16.msra.mxu0 %v939
  %1046 = vmatprep.subr.bf16.mxu0 %v937
  %1047 = vmatpush1.bf16.msra.mxu0 %v936
  %1048 = vmatprep.subr.bf16.mxu0 %v982
  %1049 = vmatpush2.bf16.msra.mxu0 %v981
  %1050 = vmatprep.subr.bf16.mxu0 %v979
  %1051 = vmatpush2.bf16.msra.mxu0 %v978
  %1052 = vmatprep.subr.bf16.mxu0 %v976
  %1053 = vmatpush2.bf16.msra.mxu0 %v975
  %1054 = vmatprep.subr.bf16.mxu0 %v973
  %1055 = vmatpush2.bf16.msra.mxu0 %v972
  %1056 = vmatprep.subr.bf16.mxu0 %v970
  %1057 = vmatpush2.bf16.msra.mxu0 %v969
  %1058 = vmatprep.subr.bf16.mxu0 %v967
  %1059 = vmatpush2.bf16.msra.mxu0 %v966
  %1060 = vmatprep.subr.bf16.mxu0 %v964
  %1061 = vmatpush2.bf16.msra.mxu0 %v963
  %1062 = vmatprep.subr.bf16.mxu0 %v961
  %1063 = vmatpush2.bf16.msra.mxu0 %v960
  %1064 = vmatprep.mubr.bf16.mxu0 %v773
  %1065 = vmatmul.mubr.bf16.gmra.mxu0 %v772
  %v1066 = vpop.f32.mrf.mxu0
  %v1067 = vadd.f32 0.0, %v1066
  %v1068 = vpop.f32.mrf.mxu0
  %v1069 = vadd.f32 0.0, %v1068
  %v1070 = vpop.f32.mrf.mxu0
  %v1071 = vadd.f32 0.0, %v1070
  %v1072 = vpop.f32.mrf.mxu0
  %v1073 = vadd.f32 0.0, %v1072
  %1074 = vdwg.mxu0
  %1075 = vmatprep.subr.bf16.mxu0 0
  %1076 = vmatpush1.bf16.msra.mxu0 %v959
  %1077 = vmatprep.subr.bf16.mxu0 0
  %1078 = vmatpush1.bf16.msra.mxu0 %v956
  %1079 = vmatprep.subr.bf16.mxu0 0
  %1080 = vmatpush1.bf16.msra.mxu0 %v953
  %1081 = vmatprep.subr.bf16.mxu0 0
  %1082 = vmatpush1.bf16.msra.mxu0 %v950
  %1083 = vmatprep.subr.bf16.mxu0 0
  %1084 = vmatpush1.bf16.msra.mxu0 %v947
  %1085 = vmatprep.subr.bf16.mxu0 0
  %1086 = vmatpush1.bf16.msra.mxu0 %v944
  %1087 = vmatprep.subr.bf16.mxu0 0
  %1088 = vmatpush1.bf16.msra.mxu0 %v941
  %1089 = vmatprep.subr.bf16.mxu0 0
  %1090 = vmatpush1.bf16.msra.mxu0 %v938
  %1091 = vmatprep.subr.bf16.mxu0 0
  %1092 = vmatpush2.bf16.msra.mxu0 %v983
  %1093 = vmatprep.subr.bf16.mxu0 0
  %1094 = vmatpush2.bf16.msra.mxu0 %v980
  %1095 = vmatprep.subr.bf16.mxu0 0
  %1096 = vmatpush2.bf16.msra.mxu0 %v977
  %1097 = vmatprep.subr.bf16.mxu0 0
  %1098 = vmatpush2.bf16.msra.mxu0 %v974
  %1099 = vmatprep.subr.bf16.mxu0 0
  %1100 = vmatpush2.bf16.msra.mxu0 %v971
  %1101 = vmatprep.subr.bf16.mxu0 0
  %1102 = vmatpush2.bf16.msra.mxu0 %v968
  %1103 = vmatprep.subr.bf16.mxu0 0
  %1104 = vmatpush2.bf16.msra.mxu0 %v965
  %1105 = vmatprep.subr.bf16.mxu0 0
  %1106 = vmatpush2.bf16.msra.mxu0 %v962
  %1107 = vmatprep.mubr.bf16.mxu0 %v773
  %1108 = vmatmul.mubr.bf16.gmra.mxu0 %v772
  %v1109 = vpop.f32.mrf.mxu0
  %v1110 = vadd.f32 0.0, %v1109
  %v1111 = vpop.f32.mrf.mxu0
  %v1112 = vpop.f32.mrf.mxu0
  %v1113 = vadd.f32 0.0, %v1112
  %v1114 = vpop.f32.mrf.mxu0
  %1115 = vdwg.mxu0
  %v1116 = vmax.f32 %v1067, 0.0
  %v1117 = vmax.f32 %v1069, 0.0
  %v1118 = vmax.f32 %v1110, 0.0
  %v1119 = vmax.f32 %v1071, 0.0
  %v1120 = vmax.f32 %v1073, 0.0
  %v1121 = vmax.f32 %v1113, 0.0
  %v1122 = vpack.c.bf16 %v1119, %v1116
  %v1123 = vpack.c.bf16 %v1120, %v1117
  %v1124 = vpack.c.bf16 %v1121, %v1118
  %v1125 = vld [vmem:[%s2] sm:$0xf]
  %v1126 = vld [vmem:[%s2 + $0x4] sm:$0xf]
  %v1127 = vld [vmem:[%s2 + $0x8] sm:$0xf]
  %v1128 = vld [vmem:[%s2 + $0xc] sm:$0xf]
  %v1129 = vld [vmem:[%s2 + $0x10] sm:$0xf]
  %v1130 = vld [vmem:[%s2 + $0x14] sm:$0xf]
  %v1131 = vld [vmem:[%s2 + $0x18] sm:$0xf]
  %v1132 = vld [vmem:[%s2 + $0x1c] sm:$0xf]
  %v1133 = vld [vmem:[%s2 + $0x20] sm:$0xf]
  %v1134 = vld [vmem:[%s2 + $0x24] sm:$0xf]
  %v1135 = vld [vmem:[%s2 + $0x28] sm:$0xf]
  %v1136 = vld [vmem:[%s2 + $0x2c] sm:$0xf]
  %v1137 = vld [vmem:[%s2 + $0x30] sm:$0xf]
  %v1138 = vld [vmem:[%s2 + $0x34] sm:$0xf]
  %v1139 = vld [vmem:[%s2 + $0x38] sm:$0xf]
  %v1140 = vld [vmem:[%s2 + $0x3c] sm:$0xf]
  %v1141 = vld [vmem:[%s2 + $0x40] sm:$0xf]
  %v1142 = vld [vmem:[%s2 + $0x44] sm:$0xf]
  %v1143 = vld [vmem:[%s2 + $0x48] sm:$0xf]
  %v1144 = vld [vmem:[%s2 + $0x4c] sm:$0xf]
  %v1145 = vld [vmem:[%s2 + $0x50] sm:$0xf]
  %v1146 = vld [vmem:[%s2 + $0x54] sm:$0xf]
  %v1147 = vld [vmem:[%s2 + $0x58] sm:$0xf]
  %v1148 = vld [vmem:[%s2 + $0x5c] sm:$0xf]
  %v1149 = vld [vmem:[%s2 + $0x60] sm:$0xf]
  %v1150 = vld [vmem:[%s2 + $0x64] sm:$0xf]
  %v1151 = vld [vmem:[%s2 + $0x68] sm:$0xf]
  %v1152 = vld [vmem:[%s2 + $0x6c] sm:$0xf]
  %v1153 = vld [vmem:[%s2 + $0x70] sm:$0xf]
  %v1154 = vld [vmem:[%s2 + $0x74] sm:$0xf]
  %v1155 = vld [vmem:[%s2 + $0x78] sm:$0xf]
  %v1156 = vld [vmem:[%s2 + $0x7c] sm:$0xf]
  %v1157 = vld [vmem:[%s2 + $0x80] sm:$0xf]
  %v1158 = vld [vmem:[%s2 + $0x84] sm:$0xf]
  %v1159 = vld [vmem:[%s2 + $0x88] sm:$0xf]
  %v1160 = vld [vmem:[%s2 + $0x8c] sm:$0xf]
  %v1161 = vld [vmem:[%s2 + $0x90] sm:$0x1]
  %v1199 = vunpack.c.l.b16 %v1125
  %v1200 = vunpack.c.l.b16 %v1126
  %v1201 = vunpack.c.l.b16 %v1127
  %v1202 = vunpack.c.l.b16 %v1128
  %v1203 = vunpack.c.l.b16 %v1129
  %v1204 = vunpack.c.l.b16 %v1130
  %v1205 = vunpack.c.l.b16 %v1131
  %v1206 = vunpack.c.l.b16 %v1132
  %v1207 = vunpack.c.l.b16 %v1133
  %v1208 = vunpack.c.l.b16 %v1134
  %v1209 = vunpack.c.l.b16 %v1135
  %v1210 = vunpack.c.l.b16 %v1136
  %v1211 = vunpack.c.l.b16 %v1137
  %v1212 = vunpack.c.l.b16 %v1138
  %v1213 = vunpack.c.l.b16 %v1139
  %v1214 = vunpack.c.l.b16 %v1140
  %v1215 = vunpack.c.l.b16 %v1141
  %v1216 = vunpack.c.l.b16 %v1142
  %v1217 = vunpack.c.l.b16 %v1143
  %v1218 = vunpack.c.l.b16 %v1144
  %v1219 = vunpack.c.l.b16 %v1145
  %v1220 = vunpack.c.l.b16 %v1146
  %v1221 = vunpack.c.l.b16 %v1147
  %v1222 = vunpack.c.l.b16 %v1148
  %v1223 = vunpack.c.l.b16 %v1149
  %v1224 = vunpack.c.l.b16 %v1150
  %v1225 = vunpack.c.l.b16 %v1151
  %v1226 = vunpack.c.l.b16 %v1152
  %v1227 = vunpack.c.l.b16 %v1153
  %v1228 = vunpack.c.l.b16 %v1154
  %v1229 = vunpack.c.l.b16 %v1155
  %v1230 = vunpack.c.l.b16 %v1156
  %v1231 = vunpack.c.l.b16 %v1157
  %v1232 = vunpack.c.l.b16 %v1158
  %v1233 = vunpack.c.l.b16 %v1159
  %v1234 = vunpack.c.l.b16 %v1160
  %v1235 = vunpack.c.l.b16 %v1161
  %v1236 = vpack.c.b16 %v1200, %v1199
  %v1237 = vpack.c.b16 %v1202, %v1201
  %v1238 = vpack.c.b16 %v1204, %v1203
  %v1239 = vpack.c.b16 %v1206, %v1205
  %v1240 = vpack.c.b16 %v1208, %v1207
  %v1241 = vpack.c.b16 %v1210, %v1209
  %v1242 = vpack.c.b16 %v1212, %v1211
  %v1243 = vpack.c.b16 %v1214, %v1213
  %v1244 = vpack.c.b16 %v1216, %v1215
  %v1245 = vpack.c.b16 %v1218, %v1217
  %v1246 = vpack.c.b16 %v1220, %v1219
  %v1247 = vpack.c.b16 %v1222, %v1221
  %v1248 = vpack.c.b16 %v1224, %v1223
  %v1249 = vpack.c.b16 %v1226, %v1225
  %v1250 = vpack.c.b16 %v1228, %v1227
  %v1251 = vpack.c.b16 %v1230, %v1229
  %v1252 = vpack.c.b16 %v1232, %v1231
  %v1253 = vpack.c.b16 %v1234, %v1233
  %v1254 = vpack.c.b16 %v1235, %v1235
  %v1274 = vsel %vm594, %v1124, 0
  %v1277 = vand.u32 %v1254, %v600
  %1279 = vmatprep.subr.bf16.mxu0 0
  %1280 = vmatpush1.bf16.msra.mxu0 %v1243
  %1281 = vmatprep.subr.bf16.mxu0 0
  %1282 = vmatpush1.bf16.msra.mxu0 %v1242
  %1283 = vmatprep.subr.bf16.mxu0 0
  %1284 = vmatpush1.bf16.msra.mxu0 %v1241
  %1285 = vmatprep.subr.bf16.mxu0 0
  %1286 = vmatpush1.bf16.msra.mxu0 %v1240
  %1287 = vmatprep.subr.bf16.mxu0 0
  %1288 = vmatpush1.bf16.msra.mxu0 %v1239
  %1289 = vmatprep.subr.bf16.mxu0 0
  %1290 = vmatpush1.bf16.msra.mxu0 %v1238
  %1291 = vmatprep.subr.bf16.mxu0 0
  %1292 = vmatpush1.bf16.msra.mxu0 %v1237
  %1293 = vmatprep.subr.bf16.mxu0 0
  %1294 = vmatpush1.bf16.msra.mxu0 %v1236
  %1295 = vmatprep.subr.bf16.mxu0 0
  %1296 = vmatpush2.bf16.msra.mxu0 %v1251
  %1297 = vmatprep.subr.bf16.mxu0 0
  %1298 = vmatpush2.bf16.msra.mxu0 %v1250
  %1299 = vmatprep.subr.bf16.mxu0 0
  %1300 = vmatpush2.bf16.msra.mxu0 %v1249
  %1301 = vmatprep.subr.bf16.mxu0 0
  %1302 = vmatpush2.bf16.msra.mxu0 %v1248
  %1303 = vmatprep.subr.bf16.mxu0 0
  %1304 = vmatpush2.bf16.msra.mxu0 %v1247
  %1305 = vmatprep.subr.bf16.mxu0 0
  %1306 = vmatpush2.bf16.msra.mxu0 %v1246
  %1307 = vmatprep.subr.bf16.mxu0 0
  %1308 = vmatpush2.bf16.msra.mxu0 %v1245
  %1309 = vmatprep.subr.bf16.mxu0 0
  %1310 = vmatpush2.bf16.msra.mxu0 %v1244
  %1311 = vmatprep.mubr.bf16.mxu0 %v1123
  %1312 = vmatmul.mubr.bf16.gmra.mxu0 %v1122
  %v1313 = vpop.f32.mrf.mxu0
  %v1314 = vadd.f32 0.0, %v1313
  %v1315 = vpop.f32.mrf.mxu0
  %v1316 = vpop.f32.mrf.mxu0
  %v1317 = vadd.f32 0.0, %v1316
  %v1318 = vpop.f32.mrf.mxu0
  %1319 = vdwg.mxu0
  %1320 = vmatprep.subr.bf16.mxu0 0
  %1321 = vmatpush1.bf16.msra.mxu0 0
  %1322 = vmatprep.subr.bf16.mxu0 0
  %1323 = vmatpush1.bf16.msra.mxu0 0
  %1324 = vmatprep.subr.bf16.mxu0 0
  %1325 = vmatpush1.bf16.msra.mxu0 0
  %1326 = vmatprep.subr.bf16.mxu0 0
  %1327 = vmatpush1.bf16.msra.mxu0 0
  %1328 = vmatprep.subr.bf16.mxu0 0
  %1329 = vmatpush1.bf16.msra.mxu0 0
  %1330 = vmatprep.subr.bf16.mxu0 0
  %1331 = vmatpush1.bf16.msra.mxu0 %v1277
  %1332 = vmatprep.subr.bf16.mxu0 0
  %1333 = vmatpush1.bf16.msra.mxu0 %v1253
  %1334 = vmatprep.subr.bf16.mxu0 0
  %1335 = vmatpush1.bf16.msra.mxu0 %v1252
  %1336 = vmatprep.subr.bf16.mxu0 0
  %1337 = vmatpush2.bf16.msra.mxu0 0
  %1338 = vmatprep.subr.bf16.mxu0 0
  %1339 = vmatpush2.bf16.msra.mxu0 0
  %1340 = vmatprep.subr.bf16.mxu0 0
  %1341 = vmatpush2.bf16.msra.mxu0 0
  %1342 = vmatprep.subr.bf16.mxu0 0
  %1343 = vmatpush2.bf16.msra.mxu0 0
  %1344 = vmatprep.subr.bf16.mxu0 0
  %1345 = vmatpush2.bf16.msra.mxu0 0
  %1346 = vmatprep.subr.bf16.mxu0 0
  %1347 = vmatpush2.bf16.msra.mxu0 0
  %1348 = vmatprep.subr.bf16.mxu0 0
  %1349 = vmatpush2.bf16.msra.mxu0 0
  %1350 = vmatprep.subr.bf16.mxu0 0
  %1351 = vmatpush2.bf16.msra.mxu0 0
  %1352 = vmatprep.mubr.bf16.mxu0 0
  %1353 = vmatmul.mubr.bf16.gmra.mxu0 %v1274
  %v1354 = vpop.f32.mrf.mxu0
  %v1355 = vadd.f32 %v1314, %v1354
  %v1356 = vpop.f32.mrf.mxu0
  %v1357 = vpop.f32.mrf.mxu0
  %v1358 = vadd.f32 %v1317, %v1357
  %v1359 = vpop.f32.mrf.mxu0
  %1360 = vdwg.mxu0
  %v1361 = vmax.f32 %v1355, 0.0
  %v1362 = vmax.f32 %v1358, 0.0
  %v1363 = vpack.c.bf16 %v1362, %v1361
  %v1365 = vunpack.c.l.b16 %v1363
  %v1366 = vunpack.c.h.b16 %v1363
  %v1367 = vpack.c.b16 %v1365, %v1365
  %v1368 = vpack.c.b16 %v1366, %v1366
  %1369 = vrot.lane.b32.xlu0 %v1367, 64
  %v1370 = vpop.permute.xlu0 %1369
  %1371 = vrot.lane.b32.xlu0 %v1368, 64
  %v1372 = vpop.permute.xlu0 %1371
  %vm1375 = vcmask 1043968
  %1376 = vst.msk [vmem:[#allocation2] sm:$0xf] %vm1375, %v1370
  %1377 = vst.msk [vmem:[#allocation2 + $0x14] sm:$0xf] %vm1375, %v1372
  %s1378 = scalar_lea.vmem %s0, 32
  %v1379 = vld [vmem:[%s1378] sm:$0xff]
  %v1380 = vld [vmem:[%s1378 + $0x8] sm:$0xff]
  %v1381 = vld [vmem:[%s1] sm:$0xff]
  %v1382 = vld [vmem:[%s1 + $0x8] sm:$0xf]
  %v1383 = vld [vmem:[%s1 + $0xc] sm:$0xff]
  %v1384 = vld [vmem:[%s1 + $0x14] sm:$0xf]
  %v1385 = vld [vmem:[%s1 + $0x18] sm:$0xff]
  %v1386 = vld [vmem:[%s1 + $0x20] sm:$0xf]
  %v1387 = vld [vmem:[%s1 + $0x24] sm:$0xff]
  %v1388 = vld [vmem:[%s1 + $0x2c] sm:$0xf]
  %v1389 = vld [vmem:[%s1 + $0x30] sm:$0xff]
  %v1390 = vld [vmem:[%s1 + $0x38] sm:$0xf]
  %v1391 = vld [vmem:[%s1 + $0x3c] sm:$0xff]
  %v1392 = vld [vmem:[%s1 + $0x44] sm:$0xf]
  %v1393 = vld [vmem:[%s1 + $0x48] sm:$0xff]
  %v1394 = vld [vmem:[%s1 + $0x50] sm:$0xf]
  %v1395 = vld [vmem:[%s1 + $0x54] sm:$0xff]
  %v1396 = vld [vmem:[%s1 + $0x5c] sm:$0xf]
  %v1397 = vld [vmem:[%s1 + $0x60] sm:$0xff]
  %v1398 = vld [vmem:[%s1 + $0x68] sm:$0xf]
  %v1399 = vld [vmem:[%s1 + $0x6c] sm:$0xff]
  %v1400 = vld [vmem:[%s1 + $0x74] sm:$0xf]
  %v1401 = vld [vmem:[%s1 + $0x78] sm:$0xff]
  %v1402 = vld [vmem:[%s1 + $0x80] sm:$0xf]
  %v1403 = vld [vmem:[%s1 + $0x84] sm:$0xff]
  %v1404 = vld [vmem:[%s1 + $0x8c] sm:$0xf]
  %v1405 = vld [vmem:[%s1 + $0x90] sm:$0xff]
  %v1406 = vld [vmem:[%s1 + $0x98] sm:$0xf]
  %v1407 = vld [vmem:[%s1 + $0x9c] sm:$0xff]
  %v1408 = vld [vmem:[%s1 + $0xa4] sm:$0xf]
  %v1409 = vld [vmem:[%s1 + $0xa8] sm:$0xff]
  %v1410 = vld [vmem:[%s1 + $0xb0] sm:$0xf]
  %v1411 = vld [vmem:[%s1 + $0xb4] sm:$0xff]
  %v1412 = vld [vmem:[%s1 + $0xbc] sm:$0xf]
  %v1413 = vld [vmem:[%s1 + $0xc0] sm:$0xff]
  %v1414 = vld [vmem:[%s1 + $0xc8] sm:$0xf]
  %v1415 = vld [vmem:[%s1 + $0xcc] sm:$0xff]
  %v1416 = vld [vmem:[%s1 + $0xd4] sm:$0xf]
  %v1417 = vld [vmem:[%s1 + $0xd8] sm:$0xff]
  %v1418 = vld [vmem:[%s1 + $0xe0] sm:$0xf]
  %v1419 = vld [vmem:[%s1 + $0xe4] sm:$0xff]
  %v1420 = vld [vmem:[%s1 + $0xec] sm:$0xf]
  %v1421 = vld [vmem:[%s1 + $0xf0] sm:$0xff]
  %v1422 = vld [vmem:[%s1 + $0xf8] sm:$0xf]
  %v1423 = vld [vmem:[%s1 + $0xfc] sm:$0xff]
  %v1424 = vld [vmem:[%s1 + $0x104] sm:$0xf]
  %v1425 = vld [vmem:[%s1 + $0x108] sm:$0xff]
  %v1426 = vld [vmem:[%s1 + $0x110] sm:$0xf]
  %v1427 = vld [vmem:[%s1 + $0x114] sm:$0xff]
  %v1428 = vld [vmem:[%s1 + $0x11c] sm:$0xf]
  %v1429 = vld [vmem:[%s1 + $0x120] sm:$0xff]
  %v1430 = vld [vmem:[%s1 + $0x128] sm:$0xf]
  %v1431 = vld [vmem:[%s1 + $0x12c] sm:$0xff]
  %v1432 = vld [vmem:[%s1 + $0x134] sm:$0xf]
  %v1433 = vld [vmem:[%s1 + $0x138] sm:$0xff]
  %v1434 = vld [vmem:[%s1 + $0x140] sm:$0xf]
  %v1435 = vld [vmem:[%s1 + $0x144] sm:$0xff]
  %v1436 = vld [vmem:[%s1 + $0x14c] sm:$0xf]
  %v1437 = vld [vmem:[%s1 + $0x150] sm:$0xff]
  %v1438 = vld [vmem:[%s1 + $0x158] sm:$0xf]
  %v1439 = vld [vmem:[%s1 + $0x15c] sm:$0xff]
  %v1440 = vld [vmem:[%s1 + $0x164] sm:$0xf]
  %v1441 = vld [vmem:[%s1 + $0x168] sm:$0xff]
  %v1442 = vld [vmem:[%s1 + $0x170] sm:$0xf]
  %v1443 = vld [vmem:[%s1 + $0x174] sm:$0xff]
  %v1444 = vld [vmem:[%s1 + $0x17c] sm:$0xf]
  %v1447 = vunpack.c.l.b16 %v1379
  %v1448 = vunpack.c.h.b16 %v1379
  %v1449 = vunpack.c.l.b16 %v1380
  %v1450 = vunpack.c.h.b16 %v1380
  %v1451 = vpack.c.b16 %v1449, %v1447
  %v1452 = vpack.c.b16 %v1450, %v1448
  %v1519 = vunpack.c.l.b16 %v1381
  %v1520 = vunpack.c.h.b16 %v1381
  %v1521 = vunpack.c.l.b16 %v1382
  %v1522 = vunpack.c.l.b16 %v1383
  %v1523 = vunpack.c.h.b16 %v1383
  %v1524 = vunpack.c.l.b16 %v1384
  %v1525 = vunpack.c.l.b16 %v1385
  %v1526 = vunpack.c.h.b16 %v1385
  %v1527 = vunpack.c.l.b16 %v1386
  %v1528 = vunpack.c.l.b16 %v1387
  %v1529 = vunpack.c.h.b16 %v1387
  %v1530 = vunpack.c.l.b16 %v1388
  %v1531 = vunpack.c.l.b16 %v1389
  %v1532 = vunpack.c.h.b16 %v1389
  %v1533 = vunpack.c.l.b16 %v1390
  %v1534 = vunpack.c.l.b16 %v1391
  %v1535 = vunpack.c.h.b16 %v1391
  %v1536 = vunpack.c.l.b16 %v1392
  %v1537 = vunpack.c.l.b16 %v1393
  %v1538 = vunpack.c.h.b16 %v1393
  %v1539 = vunpack.c.l.b16 %v1394
  %v1540 = vunpack.c.l.b16 %v1395
  %v1541 = vunpack.c.h.b16 %v1395
  %v1542 = vunpack.c.l.b16 %v1396
  %v1543 = vunpack.c.l.b16 %v1397
  %v1544 = vunpack.c.h.b16 %v1397
  %v1545 = vunpack.c.l.b16 %v1398
  %v1546 = vunpack.c.l.b16 %v1399
  %v1547 = vunpack.c.h.b16 %v1399
  %v1548 = vunpack.c.l.b16 %v1400
  %v1549 = vunpack.c.l.b16 %v1401
  %v1550 = vunpack.c.h.b16 %v1401
  %v1551 = vunpack.c.l.b16 %v1402
  %v1552 = vunpack.c.l.b16 %v1403
  %v1553 = vunpack.c.h.b16 %v1403
  %v1554 = vunpack.c.l.b16 %v1404
  %v1555 = vunpack.c.l.b16 %v1405
  %v1556 = vunpack.c.h.b16 %v1405
  %v1557 = vunpack.c.l.b16 %v1406
  %v1558 = vunpack.c.l.b16 %v1407
  %v1559 = vunpack.c.h.b16 %v1407
  %v1560 = vunpack.c.l.b16 %v1408
  %v1561 = vunpack.c.l.b16 %v1409
  %v1562 = vunpack.c.h.b16 %v1409
  %v1563 = vunpack.c.l.b16 %v1410
  %v1564 = vunpack.c.l.b16 %v1411
  %v1565 = vunpack.c.h.b16 %v1411
  %v1566 = vunpack.c.l.b16 %v1412
  %v1567 = vunpack.c.l.b16 %v1413
  %v1568 = vunpack.c.h.b16 %v1413
  %v1569 = vunpack.c.l.b16 %v1414
  %v1570 = vunpack.c.l.b16 %v1415
  %v1571 = vunpack.c.h.b16 %v1415
  %v1572 = vunpack.c.l.b16 %v1416
  %v1573 = vunpack.c.l.b16 %v1417
  %v1574 = vunpack.c.h.b16 %v1417
  %v1575 = vunpack.c.l.b16 %v1418
  %v1576 = vunpack.c.l.b16 %v1419
  %v1577 = vunpack.c.h.b16 %v1419
  %v1578 = vunpack.c.l.b16 %v1420
  %v1579 = vunpack.c.l.b16 %v1421
  %v1580 = vunpack.c.h.b16 %v1421
  %v1581 = vunpack.c.l.b16 %v1422
  %v1582 = vunpack.c.l.b16 %v1423
  %v1583 = vunpack.c.h.b16 %v1423
  %v1584 = vunpack.c.l.b16 %v1424
  %v1585 = vunpack.c.l.b16 %v1425
  %v1586 = vunpack.c.h.b16 %v1425
  %v1587 = vunpack.c.l.b16 %v1426
  %v1588 = vunpack.c.l.b16 %v1427
  %v1589 = vunpack.c.h.b16 %v1427
  %v1590 = vunpack.c.l.b16 %v1428
  %v1591 = vunpack.c.l.b16 %v1429
  %v1592 = vunpack.c.h.b16 %v1429
  %v1593 = vunpack.c.l.b16 %v1430
  %v1594 = vunpack.c.l.b16 %v1431
  %v1595 = vunpack.c.h.b16 %v1431
  %v1596 = vunpack.c.l.b16 %v1432
  %v1597 = vunpack.c.l.b16 %v1433
  %v1598 = vunpack.c.h.b16 %v1433
  %v1599 = vunpack.c.l.b16 %v1434
  %v1600 = vunpack.c.l.b16 %v1435
  %v1601 = vunpack.c.h.b16 %v1435
  %v1602 = vunpack.c.l.b16 %v1436
  %v1603 = vunpack.c.l.b16 %v1437
  %v1604 = vunpack.c.h.b16 %v1437
  %v1605 = vunpack.c.l.b16 %v1438
  %v1606 = vunpack.c.l.b16 %v1439
  %v1607 = vunpack.c.h.b16 %v1439
  %v1608 = vunpack.c.l.b16 %v1440
  %v1609 = vunpack.c.l.b16 %v1441
  %v1610 = vunpack.c.h.b16 %v1441
  %v1611 = vunpack.c.l.b16 %v1442
  %v1612 = vunpack.c.l.b16 %v1443
  %v1613 = vunpack.c.h.b16 %v1443
  %v1614 = vunpack.c.l.b16 %v1444
  %v1615 = vpack.c.b16 %v1522, %v1519
  %v1616 = vpack.c.b16 %v1523, %v1520
  %v1617 = vpack.c.b16 %v1524, %v1521
  %v1618 = vpack.c.b16 %v1528, %v1525
  %v1619 = vpack.c.b16 %v1529, %v1526
  %v1620 = vpack.c.b16 %v1530, %v1527
  %v1621 = vpack.c.b16 %v1534, %v1531
  %v1622 = vpack.c.b16 %v1535, %v1532
  %v1623 = vpack.c.b16 %v1536, %v1533
  %v1624 = vpack.c.b16 %v1540, %v1537
  %v1625 = vpack.c.b16 %v1541, %v1538
  %v1626 = vpack.c.b16 %v1542, %v1539
  %v1627 = vpack.c.b16 %v1546, %v1543
  %v1628 = vpack.c.b16 %v1547, %v1544
  %v1629 = vpack.c.b16 %v1548, %v1545
  %v1630 = vpack.c.b16 %v1552, %v1549
  %v1631 = vpack.c.b16 %v1553, %v1550
  %v1632 = vpack.c.b16 %v1554, %v1551
  %v1633 = vpack.c.b16 %v1558, %v1555
  %v1634 = vpack.c.b16 %v1559, %v1556
  %v1635 = vpack.c.b16 %v1560, %v1557
  %v1636 = vpack.c.b16 %v1564, %v1561
  %v1637 = vpack.c.b16 %v1565, %v1562
  %v1638 = vpack.c.b16 %v1566, %v1563
  %v1639 = vpack.c.b16 %v1570, %v1567
  %v1640 = vpack.c.b16 %v1571, %v1568
  %v1641 = vpack.c.b16 %v1572, %v1569
  %v1642 = vpack.c.b16 %v1576, %v1573
  %v1643 = vpack.c.b16 %v1577, %v1574
  %v1644 = vpack.c.b16 %v1578, %v1575
  %v1645 = vpack.c.b16 %v1582, %v1579
  %v1646 = vpack.c.b16 %v1583, %v1580
  %v1647 = vpack.c.b16 %v1584, %v1581
  %v1648 = vpack.c.b16 %v1588, %v1585
  %v1649 = vpack.c.b16 %v1589, %v1586
  %v1650 = vpack.c.b16 %v1590, %v1587
  %v1651 = vpack.c.b16 %v1594, %v1591
  %v1652 = vpack.c.b16 %v1595, %v1592
  %v1653 = vpack.c.b16 %v1596, %v1593
  %v1654 = vpack.c.b16 %v1600, %v1597
  %v1655 = vpack.c.b16 %v1601, %v1598
  %v1656 = vpack.c.b16 %v1602, %v1599
  %v1657 = vpack.c.b16 %v1606, %v1603
  %v1658 = vpack.c.b16 %v1607, %v1604
  %v1659 = vpack.c.b16 %v1608, %v1605
  %v1660 = vpack.c.b16 %v1612, %v1609
  %v1661 = vpack.c.b16 %v1613, %v1610
  %v1662 = vpack.c.b16 %v1614, %v1611
  %1711 = vmatprep.subr.bf16.mxu0 %v1637
  %1712 = vmatpush1.bf16.msra.mxu0 %v1636
  %1713 = vmatprep.subr.bf16.mxu0 %v1634
  %1714 = vmatpush1.bf16.msra.mxu0 %v1633
  %1715 = vmatprep.subr.bf16.mxu0 %v1631
  %1716 = vmatpush1.bf16.msra.mxu0 %v1630
  %1717 = vmatprep.subr.bf16.mxu0 %v1628
  %1718 = vmatpush1.bf16.msra.mxu0 %v1627
  %1719 = vmatprep.subr.bf16.mxu0 %v1625
  %1720 = vmatpush1.bf16.msra.mxu0 %v1624
  %1721 = vmatprep.subr.bf16.mxu0 %v1622
  %1722 = vmatpush1.bf16.msra.mxu0 %v1621
  %1723 = vmatprep.subr.bf16.mxu0 %v1619
  %1724 = vmatpush1.bf16.msra.mxu0 %v1618
  %1725 = vmatprep.subr.bf16.mxu0 %v1616
  %1726 = vmatpush1.bf16.msra.mxu0 %v1615
  %1727 = vmatprep.subr.bf16.mxu0 %v1661
  %1728 = vmatpush2.bf16.msra.mxu0 %v1660
  %1729 = vmatprep.subr.bf16.mxu0 %v1658
  %1730 = vmatpush2.bf16.msra.mxu0 %v1657
  %1731 = vmatprep.subr.bf16.mxu0 %v1655
  %1732 = vmatpush2.bf16.msra.mxu0 %v1654
  %1733 = vmatprep.subr.bf16.mxu0 %v1652
  %1734 = vmatpush2.bf16.msra.mxu0 %v1651
  %1735 = vmatprep.subr.bf16.mxu0 %v1649
  %1736 = vmatpush2.bf16.msra.mxu0 %v1648
  %1737 = vmatprep.subr.bf16.mxu0 %v1646
  %1738 = vmatpush2.bf16.msra.mxu0 %v1645
  %1739 = vmatprep.subr.bf16.mxu0 %v1643
  %1740 = vmatpush2.bf16.msra.mxu0 %v1642
  %1741 = vmatprep.subr.bf16.mxu0 %v1640
  %1742 = vmatpush2.bf16.msra.mxu0 %v1639
  %1743 = vmatprep.mubr.bf16.mxu0 %v1452
  %1744 = vmatmul.mubr.bf16.gmra.mxu0 %v1451
  %v1745 = vpop.f32.mrf.mxu0
  %v1746 = vadd.f32 0.0, %v1745
  %v1747 = vpop.f32.mrf.mxu0
  %v1748 = vadd.f32 0.0, %v1747
  %v1749 = vpop.f32.mrf.mxu0
  %v1750 = vadd.f32 0.0, %v1749
  %v1751 = vpop.f32.mrf.mxu0
  %v1752 = vadd.f32 0.0, %v1751
  %1753 = vdwg.mxu0
  %1754 = vmatprep.subr.bf16.mxu0 0
  %1755 = vmatpush1.bf16.msra.mxu0 %v1638
  %1756 = vmatprep.subr.bf16.mxu0 0
  %1757 = vmatpush1.bf16.msra.mxu0 %v1635
  %1758 = vmatprep.subr.bf16.mxu0 0
  %1759 = vmatpush1.bf16.msra.mxu0 %v1632
  %1760 = vmatprep.subr.bf16.mxu0 0
  %1761 = vmatpush1.bf16.msra.mxu0 %v1629
  %1762 = vmatprep.subr.bf16.mxu0 0
  %1763 = vmatpush1.bf16.msra.mxu0 %v1626
  %1764 = vmatprep.subr.bf16.mxu0 0
  %1765 = vmatpush1.bf16.msra.mxu0 %v1623
  %1766 = vmatprep.subr.bf16.mxu0 0
  %1767 = vmatpush1.bf16.msra.mxu0 %v1620
  %1768 = vmatprep.subr.bf16.mxu0 0
  %1769 = vmatpush1.bf16.msra.mxu0 %v1617
  %1770 = vmatprep.subr.bf16.mxu0 0
  %1771 = vmatpush2.bf16.msra.mxu0 %v1662
  %1772 = vmatprep.subr.bf16.mxu0 0
  %1773 = vmatpush2.bf16.msra.mxu0 %v1659
  %1774 = vmatprep.subr.bf16.mxu0 0
  %1775 = vmatpush2.bf16.msra.mxu0 %v1656
  %1776 = vmatprep.subr.bf16.mxu0 0
  %1777 = vmatpush2.bf16.msra.mxu0 %v1653
  %1778 = vmatprep.subr.bf16.mxu0 0
  %1779 = vmatpush2.bf16.msra.mxu0 %v1650
  %1780 = vmatprep.subr.bf16.mxu0 0
  %1781 = vmatpush2.bf16.msra.mxu0 %v1647
  %1782 = vmatprep.subr.bf16.mxu0 0
  %1783 = vmatpush2.bf16.msra.mxu0 %v1644
  %1784 = vmatprep.subr.bf16.mxu0 0
  %1785 = vmatpush2.bf16.msra.mxu0 %v1641
  %1786 = vmatprep.mubr.bf16.mxu0 %v1452
  %1787 = vmatmul.mubr.bf16.gmra.mxu0 %v1451
  %v1788 = vpop.f32.mrf.mxu0
  %v1789 = vadd.f32 0.0, %v1788
  %v1790 = vpop.f32.mrf.mxu0
  %v1791 = vpop.f32.mrf.mxu0
  %v1792 = vadd.f32 0.0, %v1791
  %v1793 = vpop.f32.mrf.mxu0
  %1794 = vdwg.mxu0
  %v1795 = vmax.f32 %v1746, 0.0
  %v1796 = vmax.f32 %v1748, 0.0
  %v1797 = vmax.f32 %v1789, 0.0
  %v1798 = vmax.f32 %v1750, 0.0
  %v1799 = vmax.f32 %v1752, 0.0
  %v1800 = vmax.f32 %v1792, 0.0
  %v1801 = vpack.c.bf16 %v1798, %v1795
  %v1802 = vpack.c.bf16 %v1799, %v1796
  %v1803 = vpack.c.bf16 %v1800, %v1797
  %v1804 = vld [vmem:[%s2] sm:$0xf]
  %v1805 = vld [vmem:[%s2 + $0x4] sm:$0xf]
  %v1806 = vld [vmem:[%s2 + $0x8] sm:$0xf]
  %v1807 = vld [vmem:[%s2 + $0xc] sm:$0xf]
  %v1808 = vld [vmem:[%s2 + $0x10] sm:$0xf]
  %v1809 = vld [vmem:[%s2 + $0x14] sm:$0xf]
  %v1810 = vld [vmem:[%s2 + $0x18] sm:$0xf]
  %v1811 = vld [vmem:[%s2 + $0x1c] sm:$0xf]
  %v1812 = vld [vmem:[%s2 + $0x20] sm:$0xf]
  %v1813 = vld [vmem:[%s2 + $0x24] sm:$0xf]
  %v1814 = vld [vmem:[%s2 + $0x28] sm:$0xf]
  %v1815 = vld [vmem:[%s2 + $0x2c] sm:$0xf]
  %v1816 = vld [vmem:[%s2 + $0x30] sm:$0xf]
  %v1817 = vld [vmem:[%s2 + $0x34] sm:$0xf]
  %v1818 = vld [vmem:[%s2 + $0x38] sm:$0xf]
  %v1819 = vld [vmem:[%s2 + $0x3c] sm:$0xf]
  %v1820 = vld [vmem:[%s2 + $0x40] sm:$0xf]
  %v1821 = vld [vmem:[%s2 + $0x44] sm:$0xf]
  %v1822 = vld [vmem:[%s2 + $0x48] sm:$0xf]
  %v1823 = vld [vmem:[%s2 + $0x4c] sm:$0xf]
  %v1824 = vld [vmem:[%s2 + $0x50] sm:$0xf]
  %v1825 = vld [vmem:[%s2 + $0x54] sm:$0xf]
  %v1826 = vld [vmem:[%s2 + $0x58] sm:$0xf]
  %v1827 = vld [vmem:[%s2 + $0x5c] sm:$0xf]
  %v1828 = vld [vmem:[%s2 + $0x60] sm:$0xf]
  %v1829 = vld [vmem:[%s2 + $0x64] sm:$0xf]
  %v1830 = vld [vmem:[%s2 + $0x68] sm:$0xf]
  %v1831 = vld [vmem:[%s2 + $0x6c] sm:$0xf]
  %v1832 = vld [vmem:[%s2 + $0x70] sm:$0xf]
  %v1833 = vld [vmem:[%s2 + $0x74] sm:$0xf]
  %v1834 = vld [vmem:[%s2 + $0x78] sm:$0xf]
  %v1835 = vld [vmem:[%s2 + $0x7c] sm:$0xf]
  %v1836 = vld [vmem:[%s2 + $0x80] sm:$0xf]
  %v1837 = vld [vmem:[%s2 + $0x84] sm:$0xf]
  %v1838 = vld [vmem:[%s2 + $0x88] sm:$0xf]
  %v1839 = vld [vmem:[%s2 + $0x8c] sm:$0xf]
  %v1840 = vld [vmem:[%s2 + $0x90] sm:$0x1]
  %v1878 = vunpack.c.l.b16 %v1804
  %v1879 = vunpack.c.l.b16 %v1805
  %v1880 = vunpack.c.l.b16 %v1806
  %v1881 = vunpack.c.l.b16 %v1807
  %v1882 = vunpack.c.l.b16 %v1808
  %v1883 = vunpack.c.l.b16 %v1809
  %v1884 = vunpack.c.l.b16 %v1810
  %v1885 = vunpack.c.l.b16 %v1811
  %v1886 = vunpack.c.l.b16 %v1812
  %v1887 = vunpack.c.l.b16 %v1813
  %v1888 = vunpack.c.l.b16 %v1814
  %v1889 = vunpack.c.l.b16 %v1815
  %v1890 = vunpack.c.l.b16 %v1816
  %v1891 = vunpack.c.l.b16 %v1817
  %v1892 = vunpack.c.l.b16 %v1818
  %v1893 = vunpack.c.l.b16 %v1819
  %v1894 = vunpack.c.l.b16 %v1820
  %v1895 = vunpack.c.l.b16 %v1821
  %v1896 = vunpack.c.l.b16 %v1822
  %v1897 = vunpack.c.l.b16 %v1823
  %v1898 = vunpack.c.l.b16 %v1824
  %v1899 = vunpack.c.l.b16 %v1825
  %v1900 = vunpack.c.l.b16 %v1826
  %v1901 = vunpack.c.l.b16 %v1827
  %v1902 = vunpack.c.l.b16 %v1828
  %v1903 = vunpack.c.l.b16 %v1829
  %v1904 = vunpack.c.l.b16 %v1830
  %v1905 = vunpack.c.l.b16 %v1831
  %v1906 = vunpack.c.l.b16 %v1832
  %v1907 = vunpack.c.l.b16 %v1833
  %v1908 = vunpack.c.l.b16 %v1834
  %v1909 = vunpack.c.l.b16 %v1835
  %v1910 = vunpack.c.l.b16 %v1836
  %v1911 = vunpack.c.l.b16 %v1837
  %v1912 = vunpack.c.l.b16 %v1838
  %v1913 = vunpack.c.l.b16 %v1839
  %v1914 = vunpack.c.l.b16 %v1840
  %v1915 = vpack.c.b16 %v1879, %v1878
  %v1916 = vpack.c.b16 %v1881, %v1880
  %v1917 = vpack.c.b16 %v1883, %v1882
  %v1918 = vpack.c.b16 %v1885, %v1884
  %v1919 = vpack.c.b16 %v1887, %v1886
  %v1920 = vpack.c.b16 %v1889, %v1888
  %v1921 = vpack.c.b16 %v1891, %v1890
  %v1922 = vpack.c.b16 %v1893, %v1892
  %v1923 = vpack.c.b16 %v1895, %v1894
  %v1924 = vpack.c.b16 %v1897, %v1896
  %v1925 = vpack.c.b16 %v1899, %v1898
  %v1926 = vpack.c.b16 %v1901, %v1900
  %v1927 = vpack.c.b16 %v1903, %v1902
  %v1928 = vpack.c.b16 %v1905, %v1904
  %v1929 = vpack.c.b16 %v1907, %v1906
  %v1930 = vpack.c.b16 %v1909, %v1908
  %v1931 = vpack.c.b16 %v1911, %v1910
  %v1932 = vpack.c.b16 %v1913, %v1912
  %v1933 = vpack.c.b16 %v1914, %v1914
  %v1953 = vsel %vm594, %v1803, 0
  %v1956 = vand.u32 %v1933, %v600
  %1958 = vmatprep.subr.bf16.mxu0 0
  %1959 = vmatpush1.bf16.msra.mxu0 %v1922
  %1960 = vmatprep.subr.bf16.mxu0 0
  %1961 = vmatpush1.bf16.msra.mxu0 %v1921
  %1962 = vmatprep.subr.bf16.mxu0 0
  %1963 = vmatpush1.bf16.msra.mxu0 %v1920
  %1964 = vmatprep.subr.bf16.mxu0 0
  %1965 = vmatpush1.bf16.msra.mxu0 %v1919
  %1966 = vmatprep.subr.bf16.mxu0 0
  %1967 = vmatpush1.bf16.msra.mxu0 %v1918
  %1968 = vmatprep.subr.bf16.mxu0 0
  %1969 = vmatpush1.bf16.msra.mxu0 %v1917
  %1970 = vmatprep.subr.bf16.mxu0 0
  %1971 = vmatpush1.bf16.msra.mxu0 %v1916
  %1972 = vmatprep.subr.bf16.mxu0 0
  %1973 = vmatpush1.bf16.msra.mxu0 %v1915
  %1974 = vmatprep.subr.bf16.mxu0 0
  %1975 = vmatpush2.bf16.msra.mxu0 %v1930
  %1976 = vmatprep.subr.bf16.mxu0 0
  %1977 = vmatpush2.bf16.msra.mxu0 %v1929
  %1978 = vmatprep.subr.bf16.mxu0 0
  %1979 = vmatpush2.bf16.msra.mxu0 %v1928
  %1980 = vmatprep.subr.bf16.mxu0 0
  %1981 = vmatpush2.bf16.msra.mxu0 %v1927
  %1982 = vmatprep.subr.bf16.mxu0 0
  %1983 = vmatpush2.bf16.msra.mxu0 %v1926
  %1984 = vmatprep.subr.bf16.mxu0 0
  %1985 = vmatpush2.bf16.msra.mxu0 %v1925
  %1986 = vmatprep.subr.bf16.mxu0 0
  %1987 = vmatpush2.bf16.msra.mxu0 %v1924
  %1988 = vmatprep.subr.bf16.mxu0 0
  %1989 = vmatpush2.bf16.msra.mxu0 %v1923
  %1990 = vmatprep.mubr.bf16.mxu0 %v1802
  %1991 = vmatmul.mubr.bf16.gmra.mxu0 %v1801
  %v1992 = vpop.f32.mrf.mxu0
  %v1993 = vadd.f32 0.0, %v1992
  %v1994 = vpop.f32.mrf.mxu0
  %v1995 = vpop.f32.mrf.mxu0
  %v1996 = vadd.f32 0.0, %v1995
  %v1997 = vpop.f32.mrf.mxu0
  %1998 = vdwg.mxu0
  %1999 = vmatprep.subr.bf16.mxu0 0
  %2000 = vmatpush1.bf16.msra.mxu0 0
  %2001 = vmatprep.subr.bf16.mxu0 0
  %2002 = vmatpush1.bf16.msra.mxu0 0
  %2003 = vmatprep.subr.bf16.mxu0 0
  %2004 = vmatpush1.bf16.msra.mxu0 0
  %2005 = vmatprep.subr.bf16.mxu0 0
  %2006 = vmatpush1.bf16.msra.mxu0 0
  %2007 = vmatprep.subr.bf16.mxu0 0
  %2008 = vmatpush1.bf16.msra.mxu0 0
  %2009 = vmatprep.subr.bf16.mxu0 0
  %2010 = vmatpush1.bf16.msra.mxu0 %v1956
  %2011 = vmatprep.subr.bf16.mxu0 0
  %2012 = vmatpush1.bf16.msra.mxu0 %v1932
  %2013 = vmatprep.subr.bf16.mxu0 0
  %2014 = vmatpush1.bf16.msra.mxu0 %v1931
  %2015 = vmatprep.subr.bf16.mxu0 0
  %2016 = vmatpush2.bf16.msra.mxu0 0
  %2017 = vmatprep.subr.bf16.mxu0 0
  %2018 = vmatpush2.bf16.msra.mxu0 0
  %2019 = vmatprep.subr.bf16.mxu0 0
  %2020 = vmatpush2.bf16.msra.mxu0 0
  %2021 = vmatprep.subr.bf16.mxu0 0
  %2022 = vmatpush2.bf16.msra.mxu0 0
  %2023 = vmatprep.subr.bf16.mxu0 0
  %2024 = vmatpush2.bf16.msra.mxu0 0
  %2025 = vmatprep.subr.bf16.mxu0 0
  %2026 = vmatpush2.bf16.msra.mxu0 0
  %2027 = vmatprep.subr.bf16.mxu0 0
  %2028 = vmatpush2.bf16.msra.mxu0 0
  %2029 = vmatprep.subr.bf16.mxu0 0
  %2030 = vmatpush2.bf16.msra.mxu0 0
  %2031 = vmatprep.mubr.bf16.mxu0 0
  %2032 = vmatmul.mubr.bf16.gmra.mxu0 %v1953
  %v2033 = vpop.f32.mrf.mxu0
  %v2034 = vadd.f32 %v1993, %v2033
  %v2035 = vpop.f32.mrf.mxu0
  %v2036 = vpop.f32.mrf.mxu0
  %v2037 = vadd.f32 %v1996, %v2036
  %v2038 = vpop.f32.mrf.mxu0
  %2039 = vdwg.mxu0
  %v2040 = vmax.f32 %v2034, 0.0
  %v2041 = vmax.f32 %v2037, 0.0
  %v2042 = vpack.c.bf16 %v2041, %v2040
  %v2044 = vunpack.c.l.b16 %v2042
  %v2045 = vunpack.c.h.b16 %v2042
  %v2046 = vpack.c.b16 %v2044, %v2044
  %v2047 = vpack.c.b16 %v2045, %v2045
  %2050 = vst.msk [vmem:[#allocation2 + $0x4] sm:$0xf] %vm696, %v2046
  %2051 = vst.msk [vmem:[#allocation2 + $0x18] sm:$0xf] %vm696, %v2047
  %s2052 = scalar_lea.vmem %s0, 48
  %v2053 = vld [vmem:[%s2052] sm:$0xff]
  %v2054 = vld [vmem:[%s2052 + $0x8] sm:$0xff]
  %v2055 = vld [vmem:[%s1] sm:$0xff]
  %v2056 = vld [vmem:[%s1 + $0x8] sm:$0xf]
  %v2057 = vld [vmem:[%s1 + $0xc] sm:$0xff]
  %v2058 = vld [vmem:[%s1 + $0x14] sm:$0xf]
  %v2059 = vld [vmem:[%s1 + $0x18] sm:$0xff]
  %v2060 = vld [vmem:[%s1 + $0x20] sm:$0xf]
  %v2061 = vld [vmem:[%s1 + $0x24] sm:$0xff]
  %v2062 = vld [vmem:[%s1 + $0x2c] sm:$0xf]
  %v2063 = vld [vmem:[%s1 + $0x30] sm:$0xff]
  %v2064 = vld [vmem:[%s1 + $0x38] sm:$0xf]
  %v2065 = vld [vmem:[%s1 + $0x3c] sm:$0xff]
  %v2066 = vld [vmem:[%s1 + $0x44] sm:$0xf]
  %v2067 = vld [vmem:[%s1 + $0x48] sm:$0xff]
  %v2068 = vld [vmem:[%s1 + $0x50] sm:$0xf]
  %v2069 = vld [vmem:[%s1 + $0x54] sm:$0xff]
  %v2070 = vld [vmem:[%s1 + $0x5c] sm:$0xf]
  %v2071 = vld [vmem:[%s1 + $0x60] sm:$0xff]
  %v2072 = vld [vmem:[%s1 + $0x68] sm:$0xf]
  %v2073 = vld [vmem:[%s1 + $0x6c] sm:$0xff]
  %v2074 = vld [vmem:[%s1 + $0x74] sm:$0xf]
  %v2075 = vld [vmem:[%s1 + $0x78] sm:$0xff]
  %v2076 = vld [vmem:[%s1 + $0x80] sm:$0xf]
  %v2077 = vld [vmem:[%s1 + $0x84] sm:$0xff]
  %v2078 = vld [vmem:[%s1 + $0x8c] sm:$0xf]
  %v2079 = vld [vmem:[%s1 + $0x90] sm:$0xff]
  %v2080 = vld [vmem:[%s1 + $0x98] sm:$0xf]
  %v2081 = vld [vmem:[%s1 + $0x9c] sm:$0xff]
  %v2082 = vld [vmem:[%s1 + $0xa4] sm:$0xf]
  %v2083 = vld [vmem:[%s1 + $0xa8] sm:$0xff]
  %v2084 = vld [vmem:[%s1 + $0xb0] sm:$0xf]
  %v2085 = vld [vmem:[%s1 + $0xb4] sm:$0xff]
  %v2086 = vld [vmem:[%s1 + $0xbc] sm:$0xf]
  %v2087 = vld [vmem:[%s1 + $0xc0] sm:$0xff]
  %v2088 = vld [vmem:[%s1 + $0xc8] sm:$0xf]
  %v2089 = vld [vmem:[%s1 + $0xcc] sm:$0xff]
  %v2090 = vld [vmem:[%s1 + $0xd4] sm:$0xf]
  %v2091 = vld [vmem:[%s1 + $0xd8] sm:$0xff]
  %v2092 = vld [vmem:[%s1 + $0xe0] sm:$0xf]
  %v2093 = vld [vmem:[%s1 + $0xe4] sm:$0xff]
  %v2094 = vld [vmem:[%s1 + $0xec] sm:$0xf]
  %v2095 = vld [vmem:[%s1 + $0xf0] sm:$0xff]
  %v2096 = vld [vmem:[%s1 + $0xf8] sm:$0xf]
  %v2097 = vld [vmem:[%s1 + $0xfc] sm:$0xff]
  %v2098 = vld [vmem:[%s1 + $0x104] sm:$0xf]
  %v2099 = vld [vmem:[%s1 + $0x108] sm:$0xff]
  %v2100 = vld [vmem:[%s1 + $0x110] sm:$0xf]
  %v2101 = vld [vmem:[%s1 + $0x114] sm:$0xff]
  %v2102 = vld [vmem:[%s1 + $0x11c] sm:$0xf]
  %v2103 = vld [vmem:[%s1 + $0x120] sm:$0xff]
  %v2104 = vld [vmem:[%s1 + $0x128] sm:$0xf]
  %v2105 = vld [vmem:[%s1 + $0x12c] sm:$0xff]
  %v2106 = vld [vmem:[%s1 + $0x134] sm:$0xf]
  %v2107 = vld [vmem:[%s1 + $0x138] sm:$0xff]
  %v2108 = vld [vmem:[%s1 + $0x140] sm:$0xf]
  %v2109 = vld [vmem:[%s1 + $0x144] sm:$0xff]
  %v2110 = vld [vmem:[%s1 + $0x14c] sm:$0xf]
  %v2111 = vld [vmem:[%s1 + $0x150] sm:$0xff]
  %v2112 = vld [vmem:[%s1 + $0x158] sm:$0xf]
  %v2113 = vld [vmem:[%s1 + $0x15c] sm:$0xff]
  %v2114 = vld [vmem:[%s1 + $0x164] sm:$0xf]
  %v2115 = vld [vmem:[%s1 + $0x168] sm:$0xff]
  %v2116 = vld [vmem:[%s1 + $0x170] sm:$0xf]
  %v2117 = vld [vmem:[%s1 + $0x174] sm:$0xff]
  %v2118 = vld [vmem:[%s1 + $0x17c] sm:$0xf]
  %v2121 = vunpack.c.l.b16 %v2053
  %v2122 = vunpack.c.h.b16 %v2053
  %v2123 = vunpack.c.l.b16 %v2054
  %v2124 = vunpack.c.h.b16 %v2054
  %v2125 = vpack.c.b16 %v2123, %v2121
  %v2126 = vpack.c.b16 %v2124, %v2122
  %v2193 = vunpack.c.l.b16 %v2055
  %v2194 = vunpack.c.h.b16 %v2055
  %v2195 = vunpack.c.l.b16 %v2056
  %v2196 = vunpack.c.l.b16 %v2057
  %v2197 = vunpack.c.h.b16 %v2057
  %v2198 = vunpack.c.l.b16 %v2058
  %v2199 = vunpack.c.l.b16 %v2059
  %v2200 = vunpack.c.h.b16 %v2059
  %v2201 = vunpack.c.l.b16 %v2060
  %v2202 = vunpack.c.l.b16 %v2061
  %v2203 = vunpack.c.h.b16 %v2061
  %v2204 = vunpack.c.l.b16 %v2062
  %v2205 = vunpack.c.l.b16 %v2063
  %v2206 = vunpack.c.h.b16 %v2063
  %v2207 = vunpack.c.l.b16 %v2064
  %v2208 = vunpack.c.l.b16 %v2065
  %v2209 = vunpack.c.h.b16 %v2065
  %v2210 = vunpack.c.l.b16 %v2066
  %v2211 = vunpack.c.l.b16 %v2067
  %v2212 = vunpack.c.h.b16 %v2067
  %v2213 = vunpack.c.l.b16 %v2068
  %v2214 = vunpack.c.l.b16 %v2069
  %v2215 = vunpack.c.h.b16 %v2069
  %v2216 = vunpack.c.l.b16 %v2070
  %v2217 = vunpack.c.l.b16 %v2071
  %v2218 = vunpack.c.h.b16 %v2071
  %v2219 = vunpack.c.l.b16 %v2072
  %v2220 = vunpack.c.l.b16 %v2073
  %v2221 = vunpack.c.h.b16 %v2073
  %v2222 = vunpack.c.l.b16 %v2074
  %v2223 = vunpack.c.l.b16 %v2075
  %v2224 = vunpack.c.h.b16 %v2075
  %v2225 = vunpack.c.l.b16 %v2076
  %v2226 = vunpack.c.l.b16 %v2077
  %v2227 = vunpack.c.h.b16 %v2077
  %v2228 = vunpack.c.l.b16 %v2078
  %v2229 = vunpack.c.l.b16 %v2079
  %v2230 = vunpack.c.h.b16 %v2079
  %v2231 = vunpack.c.l.b16 %v2080
  %v2232 = vunpack.c.l.b16 %v2081
  %v2233 = vunpack.c.h.b16 %v2081
  %v2234 = vunpack.c.l.b16 %v2082
  %v2235 = vunpack.c.l.b16 %v2083
  %v2236 = vunpack.c.h.b16 %v2083
  %v2237 = vunpack.c.l.b16 %v2084
  %v2238 = vunpack.c.l.b16 %v2085
  %v2239 = vunpack.c.h.b16 %v2085
  %v2240 = vunpack.c.l.b16 %v2086
  %v2241 = vunpack.c.l.b16 %v2087
  %v2242 = vunpack.c.h.b16 %v2087
  %v2243 = vunpack.c.l.b16 %v2088
  %v2244 = vunpack.c.l.b16 %v2089
  %v2245 = vunpack.c.h.b16 %v2089
  %v2246 = vunpack.c.l.b16 %v2090
  %v2247 = vunpack.c.l.b16 %v2091
  %v2248 = vunpack.c.h.b16 %v2091
  %v2249 = vunpack.c.l.b16 %v2092
  %v2250 = vunpack.c.l.b16 %v2093
  %v2251 = vunpack.c.h.b16 %v2093
  %v2252 = vunpack.c.l.b16 %v2094
  %v2253 = vunpack.c.l.b16 %v2095
  %v2254 = vunpack.c.h.b16 %v2095
  %v2255 = vunpack.c.l.b16 %v2096
  %v2256 = vunpack.c.l.b16 %v2097
  %v2257 = vunpack.c.h.b16 %v2097
  %v2258 = vunpack.c.l.b16 %v2098
  %v2259 = vunpack.c.l.b16 %v2099
  %v2260 = vunpack.c.h.b16 %v2099
  %v2261 = vunpack.c.l.b16 %v2100
  %v2262 = vunpack.c.l.b16 %v2101
  %v2263 = vunpack.c.h.b16 %v2101
  %v2264 = vunpack.c.l.b16 %v2102
  %v2265 = vunpack.c.l.b16 %v2103
  %v2266 = vunpack.c.h.b16 %v2103
  %v2267 = vunpack.c.l.b16 %v2104
  %v2268 = vunpack.c.l.b16 %v2105
  %v2269 = vunpack.c.h.b16 %v2105
  %v2270 = vunpack.c.l.b16 %v2106
  %v2271 = vunpack.c.l.b16 %v2107
  %v2272 = vunpack.c.h.b16 %v2107
  %v2273 = vunpack.c.l.b16 %v2108
  %v2274 = vunpack.c.l.b16 %v2109
  %v2275 = vunpack.c.h.b16 %v2109
  %v2276 = vunpack.c.l.b16 %v2110
  %v2277 = vunpack.c.l.b16 %v2111
  %v2278 = vunpack.c.h.b16 %v2111
  %v2279 = vunpack.c.l.b16 %v2112
  %v2280 = vunpack.c.l.b16 %v2113
  %v2281 = vunpack.c.h.b16 %v2113
  %v2282 = vunpack.c.l.b16 %v2114
  %v2283 = vunpack.c.l.b16 %v2115
  %v2284 = vunpack.c.h.b16 %v2115
  %v2285 = vunpack.c.l.b16 %v2116
  %v2286 = vunpack.c.l.b16 %v2117
  %v2287 = vunpack.c.h.b16 %v2117
  %v2288 = vunpack.c.l.b16 %v2118
  %v2289 = vpack.c.b16 %v2196, %v2193
  %v2290 = vpack.c.b16 %v2197, %v2194
  %v2291 = vpack.c.b16 %v2198, %v2195
  %v2292 = vpack.c.b16 %v2202, %v2199
  %v2293 = vpack.c.b16 %v2203, %v2200
  %v2294 = vpack.c.b16 %v2204, %v2201
  %v2295 = vpack.c.b16 %v2208, %v2205
  %v2296 = vpack.c.b16 %v2209, %v2206
  %v2297 = vpack.c.b16 %v2210, %v2207
  %v2298 = vpack.c.b16 %v2214, %v2211
  %v2299 = vpack.c.b16 %v2215, %v2212
  %v2300 = vpack.c.b16 %v2216, %v2213
  %v2301 = vpack.c.b16 %v2220, %v2217
  %v2302 = vpack.c.b16 %v2221, %v2218
  %v2303 = vpack.c.b16 %v2222, %v2219
  %v2304 = vpack.c.b16 %v2226, %v2223
  %v2305 = vpack.c.b16 %v2227, %v2224
  %v2306 = vpack.c.b16 %v2228, %v2225
  %v2307 = vpack.c.b16 %v2232, %v2229
  %v2308 = vpack.c.b16 %v2233, %v2230
  %v2309 = vpack.c.b16 %v2234, %v2231
  %v2310 = vpack.c.b16 %v2238, %v2235
  %v2311 = vpack.c.b16 %v2239, %v2236
  %v2312 = vpack.c.b16 %v2240, %v2237
  %v2313 = vpack.c.b16 %v2244, %v2241
  %v2314 = vpack.c.b16 %v2245, %v2242
  %v2315 = vpack.c.b16 %v2246, %v2243
  %v2316 = vpack.c.b16 %v2250, %v2247
  %v2317 = vpack.c.b16 %v2251, %v2248
  %v2318 = vpack.c.b16 %v2252, %v2249
  %v2319 = vpack.c.b16 %v2256, %v2253
  %v2320 = vpack.c.b16 %v2257, %v2254
  %v2321 = vpack.c.b16 %v2258, %v2255
  %v2322 = vpack.c.b16 %v2262, %v2259
  %v2323 = vpack.c.b16 %v2263, %v2260
  %v2324 = vpack.c.b16 %v2264, %v2261
  %v2325 = vpack.c.b16 %v2268, %v2265
  %v2326 = vpack.c.b16 %v2269, %v2266
  %v2327 = vpack.c.b16 %v2270, %v2267
  %v2328 = vpack.c.b16 %v2274, %v2271
  %v2329 = vpack.c.b16 %v2275, %v2272
  %v2330 = vpack.c.b16 %v2276, %v2273
  %v2331 = vpack.c.b16 %v2280, %v2277
  %v2332 = vpack.c.b16 %v2281, %v2278
  %v2333 = vpack.c.b16 %v2282, %v2279
  %v2334 = vpack.c.b16 %v2286, %v2283
  %v2335 = vpack.c.b16 %v2287, %v2284
  %v2336 = vpack.c.b16 %v2288, %v2285
  %2385 = vmatprep.subr.bf16.mxu0 %v2311
  %2386 = vmatpush1.bf16.msra.mxu0 %v2310
  %2387 = vmatprep.subr.bf16.mxu0 %v2308
  %2388 = vmatpush1.bf16.msra.mxu0 %v2307
  %2389 = vmatprep.subr.bf16.mxu0 %v2305
  %2390 = vmatpush1.bf16.msra.mxu0 %v2304
  %2391 = vmatprep.subr.bf16.mxu0 %v2302
  %2392 = vmatpush1.bf16.msra.mxu0 %v2301
  %2393 = vmatprep.subr.bf16.mxu0 %v2299
  %2394 = vmatpush1.bf16.msra.mxu0 %v2298
  %2395 = vmatprep.subr.bf16.mxu0 %v2296
  %2396 = vmatpush1.bf16.msra.mxu0 %v2295
  %2397 = vmatprep.subr.bf16.mxu0 %v2293
  %2398 = vmatpush1.bf16.msra.mxu0 %v2292
  %2399 = vmatprep.subr.bf16.mxu0 %v2290
  %2400 = vmatpush1.bf16.msra.mxu0 %v2289
  %2401 = vmatprep.subr.bf16.mxu0 %v2335
  %2402 = vmatpush2.bf16.msra.mxu0 %v2334
  %2403 = vmatprep.subr.bf16.mxu0 %v2332
  %2404 = vmatpush2.bf16.msra.mxu0 %v2331
  %2405 = vmatprep.subr.bf16.mxu0 %v2329
  %2406 = vmatpush2.bf16.msra.mxu0 %v2328
  %2407 = vmatprep.subr.bf16.mxu0 %v2326
  %2408 = vmatpush2.bf16.msra.mxu0 %v2325
  %2409 = vmatprep.subr.bf16.mxu0 %v2323
  %2410 = vmatpush2.bf16.msra.mxu0 %v2322
  %2411 = vmatprep.subr.bf16.mxu0 %v2320
  %2412 = vmatpush2.bf16.msra.mxu0 %v2319
  %2413 = vmatprep.subr.bf16.mxu0 %v2317
  %2414 = vmatpush2.bf16.msra.mxu0 %v2316
  %2415 = vmatprep.subr.bf16.mxu0 %v2314
  %2416 = vmatpush2.bf16.msra.mxu0 %v2313
  %2417 = vmatprep.mubr.bf16.mxu0 %v2126
  %2418 = vmatmul.mubr.bf16.gmra.mxu0 %v2125
  %v2419 = vpop.f32.mrf.mxu0
  %v2420 = vadd.f32 0.0, %v2419
  %v2421 = vpop.f32.mrf.mxu0
  %v2422 = vadd.f32 0.0, %v2421
  %v2423 = vpop.f32.mrf.mxu0
  %v2424 = vadd.f32 0.0, %v2423
  %v2425 = vpop.f32.mrf.mxu0
  %v2426 = vadd.f32 0.0, %v2425
  %2427 = vdwg.mxu0
  %2428 = vmatprep.subr.bf16.mxu0 0
  %2429 = vmatpush1.bf16.msra.mxu0 %v2312
  %2430 = vmatprep.subr.bf16.mxu0 0
  %2431 = vmatpush1.bf16.msra.mxu0 %v2309
  %2432 = vmatprep.subr.bf16.mxu0 0
  %2433 = vmatpush1.bf16.msra.mxu0 %v2306
  %2434 = vmatprep.subr.bf16.mxu0 0
  %2435 = vmatpush1.bf16.msra.mxu0 %v2303
  %2436 = vmatprep.subr.bf16.mxu0 0
  %2437 = vmatpush1.bf16.msra.mxu0 %v2300
  %2438 = vmatprep.subr.bf16.mxu0 0
  %2439 = vmatpush1.bf16.msra.mxu0 %v2297
  %2440 = vmatprep.subr.bf16.mxu0 0
  %2441 = vmatpush1.bf16.msra.mxu0 %v2294
  %2442 = vmatprep.subr.bf16.mxu0 0
  %2443 = vmatpush1.bf16.msra.mxu0 %v2291
  %2444 = vmatprep.subr.bf16.mxu0 0
  %2445 = vmatpush2.bf16.msra.mxu0 %v2336
  %2446 = vmatprep.subr.bf16.mxu0 0
  %2447 = vmatpush2.bf16.msra.mxu0 %v2333
  %2448 = vmatprep.subr.bf16.mxu0 0
  %2449 = vmatpush2.bf16.msra.mxu0 %v2330
  %2450 = vmatprep.subr.bf16.mxu0 0
  %2451 = vmatpush2.bf16.msra.mxu0 %v2327
  %2452 = vmatprep.subr.bf16.mxu0 0
  %2453 = vmatpush2.bf16.msra.mxu0 %v2324
  %2454 = vmatprep.subr.bf16.mxu0 0
  %2455 = vmatpush2.bf16.msra.mxu0 %v2321
  %2456 = vmatprep.subr.bf16.mxu0 0
  %2457 = vmatpush2.bf16.msra.mxu0 %v2318
  %2458 = vmatprep.subr.bf16.mxu0 0
  %2459 = vmatpush2.bf16.msra.mxu0 %v2315
  %2460 = vmatprep.mubr.bf16.mxu0 %v2126
  %2461 = vmatmul.mubr.bf16.gmra.mxu0 %v2125
  %v2462 = vpop.f32.mrf.mxu0
  %v2463 = vadd.f32 0.0, %v2462
  %v2464 = vpop.f32.mrf.mxu0
  %v2465 = vpop.f32.mrf.mxu0
  %v2466 = vadd.f32 0.0, %v2465
  %v2467 = vpop.f32.mrf.mxu0
  %2468 = vdwg.mxu0
  %v2469 = vmax.f32 %v2420, 0.0
  %v2470 = vmax.f32 %v2422, 0.0
  %v2471 = vmax.f32 %v2463, 0.0
  %v2472 = vmax.f32 %v2424, 0.0
  %v2473 = vmax.f32 %v2426, 0.0
  %v2474 = vmax.f32 %v2466, 0.0
  %v2475 = vpack.c.bf16 %v2472, %v2469
  %v2476 = vpack.c.bf16 %v2473, %v2470
  %v2477 = vpack.c.bf16 %v2474, %v2471
  %v2478 = vld [vmem:[%s2] sm:$0xf]
  %v2479 = vld [vmem:[%s2 + $0x4] sm:$0xf]
  %v2480 = vld [vmem:[%s2 + $0x8] sm:$0xf]
  %v2481 = vld [vmem:[%s2 + $0xc] sm:$0xf]
  %v2482 = vld [vmem:[%s2 + $0x10] sm:$0xf]
  %v2483 = vld [vmem:[%s2 + $0x14] sm:$0xf]
  %v2484 = vld [vmem:[%s2 + $0x18] sm:$0xf]
  %v2485 = vld [vmem:[%s2 + $0x1c] sm:$0xf]
  %v2486 = vld [vmem:[%s2 + $0x20] sm:$0xf]
  %v2487 = vld [vmem:[%s2 + $0x24] sm:$0xf]
  %v2488 = vld [vmem:[%s2 + $0x28] sm:$0xf]
  %v2489 = vld [vmem:[%s2 + $0x2c] sm:$0xf]
  %v2490 = vld [vmem:[%s2 + $0x30] sm:$0xf]
  %v2491 = vld [vmem:[%s2 + $0x34] sm:$0xf]
  %v2492 = vld [vmem:[%s2 + $0x38] sm:$0xf]
  %v2493 = vld [vmem:[%s2 + $0x3c] sm:$0xf]
  %v2494 = vld [vmem:[%s2 + $0x40] sm:$0xf]
  %v2495 = vld [vmem:[%s2 + $0x44] sm:$0xf]
  %v2496 = vld [vmem:[%s2 + $0x48] sm:$0xf]
  %v2497 = vld [vmem:[%s2 + $0x4c] sm:$0xf]
  %v2498 = vld [vmem:[%s2 + $0x50] sm:$0xf]
  %v2499 = vld [vmem:[%s2 + $0x54] sm:$0xf]
  %v2500 = vld [vmem:[%s2 + $0x58] sm:$0xf]
  %v2501 = vld [vmem:[%s2 + $0x5c] sm:$0xf]
  %v2502 = vld [vmem:[%s2 + $0x60] sm:$0xf]
  %v2503 = vld [vmem:[%s2 + $0x64] sm:$0xf]
  %v2504 = vld [vmem:[%s2 + $0x68] sm:$0xf]
  %v2505 = vld [vmem:[%s2 + $0x6c] sm:$0xf]
  %v2506 = vld [vmem:[%s2 + $0x70] sm:$0xf]
  %v2507 = vld [vmem:[%s2 + $0x74] sm:$0xf]
  %v2508 = vld [vmem:[%s2 + $0x78] sm:$0xf]
  %v2509 = vld [vmem:[%s2 + $0x7c] sm:$0xf]
  %v2510 = vld [vmem:[%s2 + $0x80] sm:$0xf]
  %v2511 = vld [vmem:[%s2 + $0x84] sm:$0xf]
  %v2512 = vld [vmem:[%s2 + $0x88] sm:$0xf]
  %v2513 = vld [vmem:[%s2 + $0x8c] sm:$0xf]
  %v2514 = vld [vmem:[%s2 + $0x90] sm:$0x1]
  %v2552 = vunpack.c.l.b16 %v2478
  %v2553 = vunpack.c.l.b16 %v2479
  %v2554 = vunpack.c.l.b16 %v2480
  %v2555 = vunpack.c.l.b16 %v2481
  %v2556 = vunpack.c.l.b16 %v2482
  %v2557 = vunpack.c.l.b16 %v2483
  %v2558 = vunpack.c.l.b16 %v2484
  %v2559 = vunpack.c.l.b16 %v2485
  %v2560 = vunpack.c.l.b16 %v2486
  %v2561 = vunpack.c.l.b16 %v2487
  %v2562 = vunpack.c.l.b16 %v2488
  %v2563 = vunpack.c.l.b16 %v2489
  %v2564 = vunpack.c.l.b16 %v2490
  %v2565 = vunpack.c.l.b16 %v2491
  %v2566 = vunpack.c.l.b16 %v2492
  %v2567 = vunpack.c.l.b16 %v2493
  %v2568 = vunpack.c.l.b16 %v2494
  %v2569 = vunpack.c.l.b16 %v2495
  %v2570 = vunpack.c.l.b16 %v2496
  %v2571 = vunpack.c.l.b16 %v2497
  %v2572 = vunpack.c.l.b16 %v2498
  %v2573 = vunpack.c.l.b16 %v2499
  %v2574 = vunpack.c.l.b16 %v2500
  %v2575 = vunpack.c.l.b16 %v2501
  %v2576 = vunpack.c.l.b16 %v2502
  %v2577 = vunpack.c.l.b16 %v2503
  %v2578 = vunpack.c.l.b16 %v2504
  %v2579 = vunpack.c.l.b16 %v2505
  %v2580 = vunpack.c.l.b16 %v2506
  %v2581 = vunpack.c.l.b16 %v2507
  %v2582 = vunpack.c.l.b16 %v2508
  %v2583 = vunpack.c.l.b16 %v2509
  %v2584 = vunpack.c.l.b16 %v2510
  %v2585 = vunpack.c.l.b16 %v2511
  %v2586 = vunpack.c.l.b16 %v2512
  %v2587 = vunpack.c.l.b16 %v2513
  %v2588 = vunpack.c.l.b16 %v2514
  %v2589 = vpack.c.b16 %v2553, %v2552
  %v2590 = vpack.c.b16 %v2555, %v2554
  %v2591 = vpack.c.b16 %v2557, %v2556
  %v2592 = vpack.c.b16 %v2559, %v2558
  %v2593 = vpack.c.b16 %v2561, %v2560
  %v2594 = vpack.c.b16 %v2563, %v2562
  %v2595 = vpack.c.b16 %v2565, %v2564
  %v2596 = vpack.c.b16 %v2567, %v2566
  %v2597 = vpack.c.b16 %v2569, %v2568
  %v2598 = vpack.c.b16 %v2571, %v2570
  %v2599 = vpack.c.b16 %v2573, %v2572
  %v2600 = vpack.c.b16 %v2575, %v2574
  %v2601 = vpack.c.b16 %v2577, %v2576
  %v2602 = vpack.c.b16 %v2579, %v2578
  %v2603 = vpack.c.b16 %v2581, %v2580
  %v2604 = vpack.c.b16 %v2583, %v2582
  %v2605 = vpack.c.b16 %v2585, %v2584
  %v2606 = vpack.c.b16 %v2587, %v2586
  %v2607 = vpack.c.b16 %v2588, %v2588
  %v2627 = vsel %vm594, %v2477, 0
  %v2630 = vand.u32 %v2607, %v600
  %2632 = vmatprep.subr.bf16.mxu0 0
  %2633 = vmatpush1.bf16.msra.mxu0 %v2596
  %2634 = vmatprep.subr.bf16.mxu0 0
  %2635 = vmatpush1.bf16.msra.mxu0 %v2595
  %2636 = vmatprep.subr.bf16.mxu0 0
  %2637 = vmatpush1.bf16.msra.mxu0 %v2594
  %2638 = vmatprep.subr.bf16.mxu0 0
  %2639 = vmatpush1.bf16.msra.mxu0 %v2593
  %2640 = vmatprep.subr.bf16.mxu0 0
  %2641 = vmatpush1.bf16.msra.mxu0 %v2592
  %2642 = vmatprep.subr.bf16.mxu0 0
  %2643 = vmatpush1.bf16.msra.mxu0 %v2591
  %2644 = vmatprep.subr.bf16.mxu0 0
  %2645 = vmatpush1.bf16.msra.mxu0 %v2590
  %2646 = vmatprep.subr.bf16.mxu0 0
  %2647 = vmatpush1.bf16.msra.mxu0 %v2589
  %2648 = vmatprep.subr.bf16.mxu0 0
  %2649 = vmatpush2.bf16.msra.mxu0 %v2604
  %2650 = vmatprep.subr.bf16.mxu0 0
  %2651 = vmatpush2.bf16.msra.mxu0 %v2603
  %2652 = vmatprep.subr.bf16.mxu0 0
  %2653 = vmatpush2.bf16.msra.mxu0 %v2602
  %2654 = vmatprep.subr.bf16.mxu0 0
  %2655 = vmatpush2.bf16.msra.mxu0 %v2601
  %2656 = vmatprep.subr.bf16.mxu0 0
  %2657 = vmatpush2.bf16.msra.mxu0 %v2600
  %2658 = vmatprep.subr.bf16.mxu0 0
  %2659 = vmatpush2.bf16.msra.mxu0 %v2599
  %2660 = vmatprep.subr.bf16.mxu0 0
  %2661 = vmatpush2.bf16.msra.mxu0 %v2598
  %2662 = vmatprep.subr.bf16.mxu0 0
  %2663 = vmatpush2.bf16.msra.mxu0 %v2597
  %2664 = vmatprep.mubr.bf16.mxu0 %v2476
  %2665 = vmatmul.mubr.bf16.gmra.mxu0 %v2475
  %v2666 = vpop.f32.mrf.mxu0
  %v2667 = vadd.f32 0.0, %v2666
  %v2668 = vpop.f32.mrf.mxu0
  %v2669 = vpop.f32.mrf.mxu0
  %v2670 = vadd.f32 0.0, %v2669
  %v2671 = vpop.f32.mrf.mxu0
  %2672 = vdwg.mxu0
  %2673 = vmatprep.subr.bf16.mxu0 0
  %2674 = vmatpush1.bf16.msra.mxu0 0
  %2675 = vmatprep.subr.bf16.mxu0 0
  %2676 = vmatpush1.bf16.msra.mxu0 0
  %2677 = vmatprep.subr.bf16.mxu0 0
  %2678 = vmatpush1.bf16.msra.mxu0 0
  %2679 = vmatprep.subr.bf16.mxu0 0
  %2680 = vmatpush1.bf16.msra.mxu0 0
  %2681 = vmatprep.subr.bf16.mxu0 0
  %2682 = vmatpush1.bf16.msra.mxu0 0
  %2683 = vmatprep.subr.bf16.mxu0 0
  %2684 = vmatpush1.bf16.msra.mxu0 %v2630
  %2685 = vmatprep.subr.bf16.mxu0 0
  %2686 = vmatpush1.bf16.msra.mxu0 %v2606
  %2687 = vmatprep.subr.bf16.mxu0 0
  %2688 = vmatpush1.bf16.msra.mxu0 %v2605
  %2689 = vmatprep.subr.bf16.mxu0 0
  %2690 = vmatpush2.bf16.msra.mxu0 0
  %2691 = vmatprep.subr.bf16.mxu0 0
  %2692 = vmatpush2.bf16.msra.mxu0 0
  %2693 = vmatprep.subr.bf16.mxu0 0
  %2694 = vmatpush2.bf16.msra.mxu0 0
  %2695 = vmatprep.subr.bf16.mxu0 0
  %2696 = vmatpush2.bf16.msra.mxu0 0
  %2697 = vmatprep.subr.bf16.mxu0 0
  %2698 = vmatpush2.bf16.msra.mxu0 0
  %2699 = vmatprep.subr.bf16.mxu0 0
  %2700 = vmatpush2.bf16.msra.mxu0 0
  %2701 = vmatprep.subr.bf16.mxu0 0
  %2702 = vmatpush2.bf16.msra.mxu0 0
  %2703 = vmatprep.subr.bf16.mxu0 0
  %2704 = vmatpush2.bf16.msra.mxu0 0
  %2705 = vmatprep.mubr.bf16.mxu0 0
  %2706 = vmatmul.mubr.bf16.gmra.mxu0 %v2627
  %v2707 = vpop.f32.mrf.mxu0
  %v2708 = vadd.f32 %v2667, %v2707
  %v2709 = vpop.f32.mrf.mxu0
  %v2710 = vpop.f32.mrf.mxu0
  %v2711 = vadd.f32 %v2670, %v2710
  %v2712 = vpop.f32.mrf.mxu0
  %2713 = vdwg.mxu0
  %v2714 = vmax.f32 %v2708, 0.0
  %v2715 = vmax.f32 %v2711, 0.0
  %v2716 = vpack.c.bf16 %v2715, %v2714
  %v2718 = vunpack.c.l.b16 %v2716
  %v2719 = vunpack.c.h.b16 %v2716
  %v2720 = vpack.c.b16 %v2718, %v2718
  %v2721 = vpack.c.b16 %v2719, %v2719
  %2722 = vrot.lane.b32.xlu0 %v2720, 64
  %v2723 = vpop.permute.xlu0 %2722
  %2724 = vrot.lane.b32.xlu0 %v2721, 64
  %v2725 = vpop.permute.xlu0 %2724
  %2728 = vst.msk [vmem:[#allocation2 + $0x4] sm:$0xf] %vm1375, %v2723
  %2729 = vst.msk [vmem:[#allocation2 + $0x18] sm:$0xf] %vm1375, %v2725
  %s2730 = scalar_lea.vmem %s0, 64
  %v2731 = vld [vmem:[%s2730] sm:$0xff]
  %v2732 = vld [vmem:[%s2730 + $0x8] sm:$0xff]
  %v2733 = vld [vmem:[%s1] sm:$0xff]
  %v2734 = vld [vmem:[%s1 + $0x8] sm:$0xf]
  %v2735 = vld [vmem:[%s1 + $0xc] sm:$0xff]
  %v2736 = vld [vmem:[%s1 + $0x14] sm:$0xf]
  %v2737 = vld [vmem:[%s1 + $0x18] sm:$0xff]
  %v2738 = vld [vmem:[%s1 + $0x20] sm:$0xf]
  %v2739 = vld [vmem:[%s1 + $0x24] sm:$0xff]
  %v2740 = vld [vmem:[%s1 + $0x2c] sm:$0xf]
  %v2741 = vld [vmem:[%s1 + $0x30] sm:$0xff]
  %v2742 = vld [vmem:[%s1 + $0x38] sm:$0xf]
  %v2743 = vld [vmem:[%s1 + $0x3c] sm:$0xff]
  %v2744 = vld [vmem:[%s1 + $0x44] sm:$0xf]
  %v2745 = vld [vmem:[%s1 + $0x48] sm:$0xff]
  %v2746 = vld [vmem:[%s1 + $0x50] sm:$0xf]
  %v2747 = vld [vmem:[%s1 + $0x54] sm:$0xff]
  %v2748 = vld [vmem:[%s1 + $0x5c] sm:$0xf]
  %v2749 = vld [vmem:[%s1 + $0x60] sm:$0xff]
  %v2750 = vld [vmem:[%s1 + $0x68] sm:$0xf]
  %v2751 = vld [vmem:[%s1 + $0x6c] sm:$0xff]
  %v2752 = vld [vmem:[%s1 + $0x74] sm:$0xf]
  %v2753 = vld [vmem:[%s1 + $0x78] sm:$0xff]
  %v2754 = vld [vmem:[%s1 + $0x80] sm:$0xf]
  %v2755 = vld [vmem:[%s1 + $0x84] sm:$0xff]
  %v2756 = vld [vmem:[%s1 + $0x8c] sm:$0xf]
  %v2757 = vld [vmem:[%s1 + $0x90] sm:$0xff]
  %v2758 = vld [vmem:[%s1 + $0x98] sm:$0xf]
  %v2759 = vld [vmem:[%s1 + $0x9c] sm:$0xff]
  %v2760 = vld [vmem:[%s1 + $0xa4] sm:$0xf]
  %v2761 = vld [vmem:[%s1 + $0xa8] sm:$0xff]
  %v2762 = vld [vmem:[%s1 + $0xb0] sm:$0xf]
  %v2763 = vld [vmem:[%s1 + $0xb4] sm:$0xff]
  %v2764 = vld [vmem:[%s1 + $0xbc] sm:$0xf]
  %v2765 = vld [vmem:[%s1 + $0xc0] sm:$0xff]
  %v2766 = vld [vmem:[%s1 + $0xc8] sm:$0xf]
  %v2767 = vld [vmem:[%s1 + $0xcc] sm:$0xff]
  %v2768 = vld [vmem:[%s1 + $0xd4] sm:$0xf]
  %v2769 = vld [vmem:[%s1 + $0xd8] sm:$0xff]
  %v2770 = vld [vmem:[%s1 + $0xe0] sm:$0xf]
  %v2771 = vld [vmem:[%s1 + $0xe4] sm:$0xff]
  %v2772 = vld [vmem:[%s1 + $0xec] sm:$0xf]
  %v2773 = vld [vmem:[%s1 + $0xf0] sm:$0xff]
  %v2774 = vld [vmem:[%s1 + $0xf8] sm:$0xf]
  %v2775 = vld [vmem:[%s1 + $0xfc] sm:$0xff]
  %v2776 = vld [vmem:[%s1 + $0x104] sm:$0xf]
  %v2777 = vld [vmem:[%s1 + $0x108] sm:$0xff]
  %v2778 = vld [vmem:[%s1 + $0x110] sm:$0xf]
  %v2779 = vld [vmem:[%s1 + $0x114] sm:$0xff]
  %v2780 = vld [vmem:[%s1 + $0x11c] sm:$0xf]
  %v2781 = vld [vmem:[%s1 + $0x120] sm:$0xff]
  %v2782 = vld [vmem:[%s1 + $0x128] sm:$0xf]
  %v2783 = vld [vmem:[%s1 + $0x12c] sm:$0xff]
  %v2784 = vld [vmem:[%s1 + $0x134] sm:$0xf]
  %v2785 = vld [vmem:[%s1 + $0x138] sm:$0xff]
  %v2786 = vld [vmem:[%s1 + $0x140] sm:$0xf]
  %v2787 = vld [vmem:[%s1 + $0x144] sm:$0xff]
  %v2788 = vld [vmem:[%s1 + $0x14c] sm:$0xf]
  %v2789 = vld [vmem:[%s1 + $0x150] sm:$0xff]
  %v2790 = vld [vmem:[%s1 + $0x158] sm:$0xf]
  %v2791 = vld [vmem:[%s1 + $0x15c] sm:$0xff]
  %v2792 = vld [vmem:[%s1 + $0x164] sm:$0xf]
  %v2793 = vld [vmem:[%s1 + $0x168] sm:$0xff]
  %v2794 = vld [vmem:[%s1 + $0x170] sm:$0xf]
  %v2795 = vld [vmem:[%s1 + $0x174] sm:$0xff]
  %v2796 = vld [vmem:[%s1 + $0x17c] sm:$0xf]
  %v2799 = vunpack.c.l.b16 %v2731
  %v2800 = vunpack.c.h.b16 %v2731
  %v2801 = vunpack.c.l.b16 %v2732
  %v2802 = vunpack.c.h.b16 %v2732
  %v2803 = vpack.c.b16 %v2801, %v2799
  %v2804 = vpack.c.b16 %v2802, %v2800
  %v2871 = vunpack.c.l.b16 %v2733
  %v2872 = vunpack.c.h.b16 %v2733
  %v2873 = vunpack.c.l.b16 %v2734
  %v2874 = vunpack.c.l.b16 %v2735
  %v2875 = vunpack.c.h.b16 %v2735
  %v2876 = vunpack.c.l.b16 %v2736
  %v2877 = vunpack.c.l.b16 %v2737
  %v2878 = vunpack.c.h.b16 %v2737
  %v2879 = vunpack.c.l.b16 %v2738
  %v2880 = vunpack.c.l.b16 %v2739
  %v2881 = vunpack.c.h.b16 %v2739
  %v2882 = vunpack.c.l.b16 %v2740
  %v2883 = vunpack.c.l.b16 %v2741
  %v2884 = vunpack.c.h.b16 %v2741
  %v2885 = vunpack.c.l.b16 %v2742
  %v2886 = vunpack.c.l.b16 %v2743
  %v2887 = vunpack.c.h.b16 %v2743
  %v2888 = vunpack.c.l.b16 %v2744
  %v2889 = vunpack.c.l.b16 %v2745
  %v2890 = vunpack.c.h.b16 %v2745
  %v2891 = vunpack.c.l.b16 %v2746
  %v2892 = vunpack.c.l.b16 %v2747
  %v2893 = vunpack.c.h.b16 %v2747
  %v2894 = vunpack.c.l.b16 %v2748
  %v2895 = vunpack.c.l.b16 %v2749
  %v2896 = vunpack.c.h.b16 %v2749
  %v2897 = vunpack.c.l.b16 %v2750
  %v2898 = vunpack.c.l.b16 %v2751
  %v2899 = vunpack.c.h.b16 %v2751
  %v2900 = vunpack.c.l.b16 %v2752
  %v2901 = vunpack.c.l.b16 %v2753
  %v2902 = vunpack.c.h.b16 %v2753
  %v2903 = vunpack.c.l.b16 %v2754
  %v2904 = vunpack.c.l.b16 %v2755
  %v2905 = vunpack.c.h.b16 %v2755
  %v2906 = vunpack.c.l.b16 %v2756
  %v2907 = vunpack.c.l.b16 %v2757
  %v2908 = vunpack.c.h.b16 %v2757
  %v2909 = vunpack.c.l.b16 %v2758
  %v2910 = vunpack.c.l.b16 %v2759
  %v2911 = vunpack.c.h.b16 %v2759
  %v2912 = vunpack.c.l.b16 %v2760
  %v2913 = vunpack.c.l.b16 %v2761
  %v2914 = vunpack.c.h.b16 %v2761
  %v2915 = vunpack.c.l.b16 %v2762
  %v2916 = vunpack.c.l.b16 %v2763
  %v2917 = vunpack.c.h.b16 %v2763
  %v2918 = vunpack.c.l.b16 %v2764
  %v2919 = vunpack.c.l.b16 %v2765
  %v2920 = vunpack.c.h.b16 %v2765
  %v2921 = vunpack.c.l.b16 %v2766
  %v2922 = vunpack.c.l.b16 %v2767
  %v2923 = vunpack.c.h.b16 %v2767
  %v2924 = vunpack.c.l.b16 %v2768
  %v2925 = vunpack.c.l.b16 %v2769
  %v2926 = vunpack.c.h.b16 %v2769
  %v2927 = vunpack.c.l.b16 %v2770
  %v2928 = vunpack.c.l.b16 %v2771
  %v2929 = vunpack.c.h.b16 %v2771
  %v2930 = vunpack.c.l.b16 %v2772
  %v2931 = vunpack.c.l.b16 %v2773
  %v2932 = vunpack.c.h.b16 %v2773
  %v2933 = vunpack.c.l.b16 %v2774
  %v2934 = vunpack.c.l.b16 %v2775
  %v2935 = vunpack.c.h.b16 %v2775
  %v2936 = vunpack.c.l.b16 %v2776
  %v2937 = vunpack.c.l.b16 %v2777
  %v2938 = vunpack.c.h.b16 %v2777
  %v2939 = vunpack.c.l.b16 %v2778
  %v2940 = vunpack.c.l.b16 %v2779
  %v2941 = vunpack.c.h.b16 %v2779
  %v2942 = vunpack.c.l.b16 %v2780
  %v2943 = vunpack.c.l.b16 %v2781
  %v2944 = vunpack.c.h.b16 %v2781
  %v2945 = vunpack.c.l.b16 %v2782
  %v2946 = vunpack.c.l.b16 %v2783
  %v2947 = vunpack.c.h.b16 %v2783
  %v2948 = vunpack.c.l.b16 %v2784
  %v2949 = vunpack.c.l.b16 %v2785
  %v2950 = vunpack.c.h.b16 %v2785
  %v2951 = vunpack.c.l.b16 %v2786
  %v2952 = vunpack.c.l.b16 %v2787
  %v2953 = vunpack.c.h.b16 %v2787
  %v2954 = vunpack.c.l.b16 %v2788
  %v2955 = vunpack.c.l.b16 %v2789
  %v2956 = vunpack.c.h.b16 %v2789
  %v2957 = vunpack.c.l.b16 %v2790
  %v2958 = vunpack.c.l.b16 %v2791
  %v2959 = vunpack.c.h.b16 %v2791
  %v2960 = vunpack.c.l.b16 %v2792
  %v2961 = vunpack.c.l.b16 %v2793
  %v2962 = vunpack.c.h.b16 %v2793
  %v2963 = vunpack.c.l.b16 %v2794
  %v2964 = vunpack.c.l.b16 %v2795
  %v2965 = vunpack.c.h.b16 %v2795
  %v2966 = vunpack.c.l.b16 %v2796
  %v2967 = vpack.c.b16 %v2874, %v2871
  %v2968 = vpack.c.b16 %v2875, %v2872
  %v2969 = vpack.c.b16 %v2876, %v2873
  %v2970 = vpack.c.b16 %v2880, %v2877
  %v2971 = vpack.c.b16 %v2881, %v2878
  %v2972 = vpack.c.b16 %v2882, %v2879
  %v2973 = vpack.c.b16 %v2886, %v2883
  %v2974 = vpack.c.b16 %v2887, %v2884
  %v2975 = vpack.c.b16 %v2888, %v2885
  %v2976 = vpack.c.b16 %v2892, %v2889
  %v2977 = vpack.c.b16 %v2893, %v2890
  %v2978 = vpack.c.b16 %v2894, %v2891
  %v2979 = vpack.c.b16 %v2898, %v2895
  %v2980 = vpack.c.b16 %v2899, %v2896
  %v2981 = vpack.c.b16 %v2900, %v2897
  %v2982 = vpack.c.b16 %v2904, %v2901
  %v2983 = vpack.c.b16 %v2905, %v2902
  %v2984 = vpack.c.b16 %v2906, %v2903
  %v2985 = vpack.c.b16 %v2910, %v2907
  %v2986 = vpack.c.b16 %v2911, %v2908
  %v2987 = vpack.c.b16 %v2912, %v2909
  %v2988 = vpack.c.b16 %v2916, %v2913
  %v2989 = vpack.c.b16 %v2917, %v2914
  %v2990 = vpack.c.b16 %v2918, %v2915
  %v2991 = vpack.c.b16 %v2922, %v2919
  %v2992 = vpack.c.b16 %v2923, %v2920
  %v2993 = vpack.c.b16 %v2924, %v2921
  %v2994 = vpack.c.b16 %v2928, %v2925
  %v2995 = vpack.c.b16 %v2929, %v2926
  %v2996 = vpack.c.b16 %v2930, %v2927
  %v2997 = vpack.c.b16 %v2934, %v2931
  %v2998 = vpack.c.b16 %v2935, %v2932
  %v2999 = vpack.c.b16 %v2936, %v2933
  %v3000 = vpack.c.b16 %v2940, %v2937
  %v3001 = vpack.c.b16 %v2941, %v2938
  %v3002 = vpack.c.b16 %v2942, %v2939
  %v3003 = vpack.c.b16 %v2946, %v2943
  %v3004 = vpack.c.b16 %v2947, %v2944
  %v3005 = vpack.c.b16 %v2948, %v2945
  %v3006 = vpack.c.b16 %v2952, %v2949
  %v3007 = vpack.c.b16 %v2953, %v2950
  %v3008 = vpack.c.b16 %v2954, %v2951
  %v3009 = vpack.c.b16 %v2958, %v2955
  %v3010 = vpack.c.b16 %v2959, %v2956
  %v3011 = vpack.c.b16 %v2960, %v2957
  %v3012 = vpack.c.b16 %v2964, %v2961
  %v3013 = vpack.c.b16 %v2965, %v2962
  %v3014 = vpack.c.b16 %v2966, %v2963
  %3063 = vmatprep.subr.bf16.mxu0 %v2989
  %3064 = vmatpush1.bf16.msra.mxu0 %v2988
  %3065 = vmatprep.subr.bf16.mxu0 %v2986
  %3066 = vmatpush1.bf16.msra.mxu0 %v2985
  %3067 = vmatprep.subr.bf16.mxu0 %v2983
  %3068 = vmatpush1.bf16.msra.mxu0 %v2982
  %3069 = vmatprep.subr.bf16.mxu0 %v2980
  %3070 = vmatpush1.bf16.msra.mxu0 %v2979
  %3071 = vmatprep.subr.bf16.mxu0 %v2977
  %3072 = vmatpush1.bf16.msra.mxu0 %v2976
  %3073 = vmatprep.subr.bf16.mxu0 %v2974
  %3074 = vmatpush1.bf16.msra.mxu0 %v2973
  %3075 = vmatprep.subr.bf16.mxu0 %v2971
  %3076 = vmatpush1.bf16.msra.mxu0 %v2970
  %3077 = vmatprep.subr.bf16.mxu0 %v2968
  %3078 = vmatpush1.bf16.msra.mxu0 %v2967
  %3079 = vmatprep.subr.bf16.mxu0 %v3013
  %3080 = vmatpush2.bf16.msra.mxu0 %v3012
  %3081 = vmatprep.subr.bf16.mxu0 %v3010
  %3082 = vmatpush2.bf16.msra.mxu0 %v3009
  %3083 = vmatprep.subr.bf16.mxu0 %v3007
  %3084 = vmatpush2.bf16.msra.mxu0 %v3006
  %3085 = vmatprep.subr.bf16.mxu0 %v3004
  %3086 = vmatpush2.bf16.msra.mxu0 %v3003
  %3087 = vmatprep.subr.bf16.mxu0 %v3001
  %3088 = vmatpush2.bf16.msra.mxu0 %v3000
  %3089 = vmatprep.subr.bf16.mxu0 %v2998
  %3090 = vmatpush2.bf16.msra.mxu0 %v2997
  %3091 = vmatprep.subr.bf16.mxu0 %v2995
  %3092 = vmatpush2.bf16.msra.mxu0 %v2994
  %3093 = vmatprep.subr.bf16.mxu0 %v2992
  %3094 = vmatpush2.bf16.msra.mxu0 %v2991
  %3095 = vmatprep.mubr.bf16.mxu0 %v2804
  %3096 = vmatmul.mubr.bf16.gmra.mxu0 %v2803
  %v3097 = vpop.f32.mrf.mxu0
  %v3098 = vadd.f32 0.0, %v3097
  %v3099 = vpop.f32.mrf.mxu0
  %v3100 = vadd.f32 0.0, %v3099
  %v3101 = vpop.f32.mrf.mxu0
  %v3102 = vadd.f32 0.0, %v3101
  %v3103 = vpop.f32.mrf.mxu0
  %v3104 = vadd.f32 0.0, %v3103
  %3105 = vdwg.mxu0
  %3106 = vmatprep.subr.bf16.mxu0 0
  %3107 = vmatpush1.bf16.msra.mxu0 %v2990
  %3108 = vmatprep.subr.bf16.mxu0 0
  %3109 = vmatpush1.bf16.msra.mxu0 %v2987
  %3110 = vmatprep.subr.bf16.mxu0 0
  %3111 = vmatpush1.bf16.msra.mxu0 %v2984
  %3112 = vmatprep.subr.bf16.mxu0 0
  %3113 = vmatpush1.bf16.msra.mxu0 %v2981
  %3114 = vmatprep.subr.bf16.mxu0 0
  %3115 = vmatpush1.bf16.msra.mxu0 %v2978
  %3116 = vmatprep.subr.bf16.mxu0 0
  %3117 = vmatpush1.bf16.msra.mxu0 %v2975
  %3118 = vmatprep.subr.bf16.mxu0 0
  %3119 = vmatpush1.bf16.msra.mxu0 %v2972
  %3120 = vmatprep.subr.bf16.mxu0 0
  %3121 = vmatpush1.bf16.msra.mxu0 %v2969
  %3122 = vmatprep.subr.bf16.mxu0 0
  %3123 = vmatpush2.bf16.msra.mxu0 %v3014
  %3124 = vmatprep.subr.bf16.mxu0 0
  %3125 = vmatpush2.bf16.msra.mxu0 %v3011
  %3126 = vmatprep.subr.bf16.mxu0 0
  %3127 = vmatpush2.bf16.msra.mxu0 %v3008
  %3128 = vmatprep.subr.bf16.mxu0 0
  %3129 = vmatpush2.bf16.msra.mxu0 %v3005
  %3130 = vmatprep.subr.bf16.mxu0 0
  %3131 = vmatpush2.bf16.msra.mxu0 %v3002
  %3132 = vmatprep.subr.bf16.mxu0 0
  %3133 = vmatpush2.bf16.msra.mxu0 %v2999
  %3134 = vmatprep.subr.bf16.mxu0 0
  %3135 = vmatpush2.bf16.msra.mxu0 %v2996
  %3136 = vmatprep.subr.bf16.mxu0 0
  %3137 = vmatpush2.bf16.msra.mxu0 %v2993
  %3138 = vmatprep.mubr.bf16.mxu0 %v2804
  %3139 = vmatmul.mubr.bf16.gmra.mxu0 %v2803
  %v3140 = vpop.f32.mrf.mxu0
  %v3141 = vadd.f32 0.0, %v3140
  %v3142 = vpop.f32.mrf.mxu0
  %v3143 = vpop.f32.mrf.mxu0
  %v3144 = vadd.f32 0.0, %v3143
  %v3145 = vpop.f32.mrf.mxu0
  %3146 = vdwg.mxu0
  %v3147 = vmax.f32 %v3098, 0.0
  %v3148 = vmax.f32 %v3100, 0.0
  %v3149 = vmax.f32 %v3141, 0.0
  %v3150 = vmax.f32 %v3102, 0.0
  %v3151 = vmax.f32 %v3104, 0.0
  %v3152 = vmax.f32 %v3144, 0.0
  %v3153 = vpack.c.bf16 %v3150, %v3147
  %v3154 = vpack.c.bf16 %v3151, %v3148
  %v3155 = vpack.c.bf16 %v3152, %v3149
  %v3156 = vld [vmem:[%s2] sm:$0xf]
  %v3157 = vld [vmem:[%s2 + $0x4] sm:$0xf]
  %v3158 = vld [vmem:[%s2 + $0x8] sm:$0xf]
  %v3159 = vld [vmem:[%s2 + $0xc] sm:$0xf]
  %v3160 = vld [vmem:[%s2 + $0x10] sm:$0xf]
  %v3161 = vld [vmem:[%s2 + $0x14] sm:$0xf]
  %v3162 = vld [vmem:[%s2 + $0x18] sm:$0xf]
  %v3163 = vld [vmem:[%s2 + $0x1c] sm:$0xf]
  %v3164 = vld [vmem:[%s2 + $0x20] sm:$0xf]
  %v3165 = vld [vmem:[%s2 + $0x24] sm:$0xf]
  %v3166 = vld [vmem:[%s2 + $0x28] sm:$0xf]
  %v3167 = vld [vmem:[%s2 + $0x2c] sm:$0xf]
  %v3168 = vld [vmem:[%s2 + $0x30] sm:$0xf]
  %v3169 = vld [vmem:[%s2 + $0x34] sm:$0xf]
  %v3170 = vld [vmem:[%s2 + $0x38] sm:$0xf]
  %v3171 = vld [vmem:[%s2 + $0x3c] sm:$0xf]
  %v3172 = vld [vmem:[%s2 + $0x40] sm:$0xf]
  %v3173 = vld [vmem:[%s2 + $0x44] sm:$0xf]
  %v3174 = vld [vmem:[%s2 + $0x48] sm:$0xf]
  %v3175 = vld [vmem:[%s2 + $0x4c] sm:$0xf]
  %v3176 = vld [vmem:[%s2 + $0x50] sm:$0xf]
  %v3177 = vld [vmem:[%s2 + $0x54] sm:$0xf]
  %v3178 = vld [vmem:[%s2 + $0x58] sm:$0xf]
  %v3179 = vld [vmem:[%s2 + $0x5c] sm:$0xf]
  %v3180 = vld [vmem:[%s2 + $0x60] sm:$0xf]
  %v3181 = vld [vmem:[%s2 + $0x64] sm:$0xf]
  %v3182 = vld [vmem:[%s2 + $0x68] sm:$0xf]
  %v3183 = vld [vmem:[%s2 + $0x6c] sm:$0xf]
  %v3184 = vld [vmem:[%s2 + $0x70] sm:$0xf]
  %v3185 = vld [vmem:[%s2 + $0x74] sm:$0xf]
  %v3186 = vld [vmem:[%s2 + $0x78] sm:$0xf]
  %v3187 = vld [vmem:[%s2 + $0x7c] sm:$0xf]
  %v3188 = vld [vmem:[%s2 + $0x80] sm:$0xf]
  %v3189 = vld [vmem:[%s2 + $0x84] sm:$0xf]
  %v3190 = vld [vmem:[%s2 + $0x88] sm:$0xf]
  %v3191 = vld [vmem:[%s2 + $0x8c] sm:$0xf]
  %v3192 = vld [vmem:[%s2 + $0x90] sm:$0x1]
  %v3230 = vunpack.c.l.b16 %v3156
  %v3231 = vunpack.c.l.b16 %v3157
  %v3232 = vunpack.c.l.b16 %v3158
  %v3233 = vunpack.c.l.b16 %v3159
  %v3234 = vunpack.c.l.b16 %v3160
  %v3235 = vunpack.c.l.b16 %v3161
  %v3236 = vunpack.c.l.b16 %v3162
  %v3237 = vunpack.c.l.b16 %v3163
  %v3238 = vunpack.c.l.b16 %v3164
  %v3239 = vunpack.c.l.b16 %v3165
  %v3240 = vunpack.c.l.b16 %v3166
  %v3241 = vunpack.c.l.b16 %v3167
  %v3242 = vunpack.c.l.b16 %v3168
  %v3243 = vunpack.c.l.b16 %v3169
  %v3244 = vunpack.c.l.b16 %v3170
  %v3245 = vunpack.c.l.b16 %v3171
  %v3246 = vunpack.c.l.b16 %v3172
  %v3247 = vunpack.c.l.b16 %v3173
  %v3248 = vunpack.c.l.b16 %v3174
  %v3249 = vunpack.c.l.b16 %v3175
  %v3250 = vunpack.c.l.b16 %v3176
  %v3251 = vunpack.c.l.b16 %v3177
  %v3252 = vunpack.c.l.b16 %v3178
  %v3253 = vunpack.c.l.b16 %v3179
  %v3254 = vunpack.c.l.b16 %v3180
  %v3255 = vunpack.c.l.b16 %v3181
  %v3256 = vunpack.c.l.b16 %v3182
  %v3257 = vunpack.c.l.b16 %v3183
  %v3258 = vunpack.c.l.b16 %v3184
  %v3259 = vunpack.c.l.b16 %v3185
  %v3260 = vunpack.c.l.b16 %v3186
  %v3261 = vunpack.c.l.b16 %v3187
  %v3262 = vunpack.c.l.b16 %v3188
  %v3263 = vunpack.c.l.b16 %v3189
  %v3264 = vunpack.c.l.b16 %v3190
  %v3265 = vunpack.c.l.b16 %v3191
  %v3266 = vunpack.c.l.b16 %v3192
  %v3267 = vpack.c.b16 %v3231, %v3230
  %v3268 = vpack.c.b16 %v3233, %v3232
  %v3269 = vpack.c.b16 %v3235, %v3234
  %v3270 = vpack.c.b16 %v3237, %v3236
  %v3271 = vpack.c.b16 %v3239, %v3238
  %v3272 = vpack.c.b16 %v3241, %v3240
  %v3273 = vpack.c.b16 %v3243, %v3242
  %v3274 = vpack.c.b16 %v3245, %v3244
  %v3275 = vpack.c.b16 %v3247, %v3246
  %v3276 = vpack.c.b16 %v3249, %v3248
  %v3277 = vpack.c.b16 %v3251, %v3250
  %v3278 = vpack.c.b16 %v3253, %v3252
  %v3279 = vpack.c.b16 %v3255, %v3254
  %v3280 = vpack.c.b16 %v3257, %v3256
  %v3281 = vpack.c.b16 %v3259, %v3258
  %v3282 = vpack.c.b16 %v3261, %v3260
  %v3283 = vpack.c.b16 %v3263, %v3262
  %v3284 = vpack.c.b16 %v3265, %v3264
  %v3285 = vpack.c.b16 %v3266, %v3266
  %v3305 = vsel %vm594, %v3155, 0
  %v3308 = vand.u32 %v3285, %v600
  %3310 = vmatprep.subr.bf16.mxu0 0
  %3311 = vmatpush1.bf16.msra.mxu0 %v3274
  %3312 = vmatprep.subr.bf16.mxu0 0
  %3313 = vmatpush1.bf16.msra.mxu0 %v3273
  %3314 = vmatprep.subr.bf16.mxu0 0
  %3315 = vmatpush1.bf16.msra.mxu0 %v3272
  %3316 = vmatprep.subr.bf16.mxu0 0
  %3317 = vmatpush1.bf16.msra.mxu0 %v3271
  %3318 = vmatprep.subr.bf16.mxu0 0
  %3319 = vmatpush1.bf16.msra.mxu0 %v3270
  %3320 = vmatprep.subr.bf16.mxu0 0
  %3321 = vmatpush1.bf16.msra.mxu0 %v3269
  %3322 = vmatprep.subr.bf16.mxu0 0
  %3323 = vmatpush1.bf16.msra.mxu0 %v3268
  %3324 = vmatprep.subr.bf16.mxu0 0
  %3325 = vmatpush1.bf16.msra.mxu0 %v3267
  %3326 = vmatprep.subr.bf16.mxu0 0
  %3327 = vmatpush2.bf16.msra.mxu0 %v3282
  %3328 = vmatprep.subr.bf16.mxu0 0
  %3329 = vmatpush2.bf16.msra.mxu0 %v3281
  %3330 = vmatprep.subr.bf16.mxu0 0
  %3331 = vmatpush2.bf16.msra.mxu0 %v3280
  %3332 = vmatprep.subr.bf16.mxu0 0
  %3333 = vmatpush2.bf16.msra.mxu0 %v3279
  %3334 = vmatprep.subr.bf16.mxu0 0
  %3335 = vmatpush2.bf16.msra.mxu0 %v3278
  %3336 = vmatprep.subr.bf16.mxu0 0
  %3337 = vmatpush2.bf16.msra.mxu0 %v3277
  %3338 = vmatprep.subr.bf16.mxu0 0
  %3339 = vmatpush2.bf16.msra.mxu0 %v3276
  %3340 = vmatprep.subr.bf16.mxu0 0
  %3341 = vmatpush2.bf16.msra.mxu0 %v3275
  %3342 = vmatprep.mubr.bf16.mxu0 %v3154
  %3343 = vmatmul.mubr.bf16.gmra.mxu0 %v3153
  %v3344 = vpop.f32.mrf.mxu0
  %v3345 = vadd.f32 0.0, %v3344
  %v3346 = vpop.f32.mrf.mxu0
  %v3347 = vpop.f32.mrf.mxu0
  %v3348 = vadd.f32 0.0, %v3347
  %v3349 = vpop.f32.mrf.mxu0
  %3350 = vdwg.mxu0
  %3351 = vmatprep.subr.bf16.mxu0 0
  %3352 = vmatpush1.bf16.msra.mxu0 0
  %3353 = vmatprep.subr.bf16.mxu0 0
  %3354 = vmatpush1.bf16.msra.mxu0 0
  %3355 = vmatprep.subr.bf16.mxu0 0
  %3356 = vmatpush1.bf16.msra.mxu0 0
  %3357 = vmatprep.subr.bf16.mxu0 0
  %3358 = vmatpush1.bf16.msra.mxu0 0
  %3359 = vmatprep.subr.bf16.mxu0 0
  %3360 = vmatpush1.bf16.msra.mxu0 0
  %3361 = vmatprep.subr.bf16.mxu0 0
  %3362 = vmatpush1.bf16.msra.mxu0 %v3308
  %3363 = vmatprep.subr.bf16.mxu0 0
  %3364 = vmatpush1.bf16.msra.mxu0 %v3284
  %3365 = vmatprep.subr.bf16.mxu0 0
  %3366 = vmatpush1.bf16.msra.mxu0 %v3283
  %3367 = vmatprep.subr.bf16.mxu0 0
  %3368 = vmatpush2.bf16.msra.mxu0 0
  %3369 = vmatprep.subr.bf16.mxu0 0
  %3370 = vmatpush2.bf16.msra.mxu0 0
  %3371 = vmatprep.subr.bf16.mxu0 0
  %3372 = vmatpush2.bf16.msra.mxu0 0
  %3373 = vmatprep.subr.bf16.mxu0 0
  %3374 = vmatpush2.bf16.msra.mxu0 0
  %3375 = vmatprep.subr.bf16.mxu0 0
  %3376 = vmatpush2.bf16.msra.mxu0 0
  %3377 = vmatprep.subr.bf16.mxu0 0
  %3378 = vmatpush2.bf16.msra.mxu0 0
  %3379 = vmatprep.subr.bf16.mxu0 0
  %3380 = vmatpush2.bf16.msra.mxu0 0
  %3381 = vmatprep.subr.bf16.mxu0 0
  %3382 = vmatpush2.bf16.msra.mxu0 0
  %3383 = vmatprep.mubr.bf16.mxu0 0
  %3384 = vmatmul.mubr.bf16.gmra.mxu0 %v3305
  %v3385 = vpop.f32.mrf.mxu0
  %v3386 = vadd.f32 %v3345, %v3385
  %v3387 = vpop.f32.mrf.mxu0
  %v3388 = vpop.f32.mrf.mxu0
  %v3389 = vadd.f32 %v3348, %v3388
  %v3390 = vpop.f32.mrf.mxu0
  %3391 = vdwg.mxu0
  %v3392 = vmax.f32 %v3386, 0.0
  %v3393 = vmax.f32 %v3389, 0.0
  %v3394 = vpack.c.bf16 %v3393, %v3392
  %v3396 = vunpack.c.l.b16 %v3394
  %v3397 = vunpack.c.h.b16 %v3394
  %v3398 = vpack.c.b16 %v3396, %v3396
  %v3399 = vpack.c.b16 %v3397, %v3397
  %3402 = vst.msk [vmem:[#allocation2 + $0x8] sm:$0xf] %vm696, %v3398
  %3403 = vst.msk [vmem:[#allocation2 + $0x1c] sm:$0xf] %vm696, %v3399
  %s3404 = scalar_lea.vmem %s0, 80
  %v3405 = vld [vmem:[%s3404] sm:$0xff]
  %v3406 = vld [vmem:[%s3404 + $0x8] sm:$0xff]
  %v3407 = vld [vmem:[%s1] sm:$0xff]
  %v3408 = vld [vmem:[%s1 + $0x8] sm:$0xf]
  %v3409 = vld [vmem:[%s1 + $0xc] sm:$0xff]
  %v3410 = vld [vmem:[%s1 + $0x14] sm:$0xf]
  %v3411 = vld [vmem:[%s1 + $0x18] sm:$0xff]
  %v3412 = vld [vmem:[%s1 + $0x20] sm:$0xf]
  %v3413 = vld [vmem:[%s1 + $0x24] sm:$0xff]
  %v3414 = vld [vmem:[%s1 + $0x2c] sm:$0xf]
  %v3415 = vld [vmem:[%s1 + $0x30] sm:$0xff]
  %v3416 = vld [vmem:[%s1 + $0x38] sm:$0xf]
  %v3417 = vld [vmem:[%s1 + $0x3c] sm:$0xff]
  %v3418 = vld [vmem:[%s1 + $0x44] sm:$0xf]
  %v3419 = vld [vmem:[%s1 + $0x48] sm:$0xff]
  %v3420 = vld [vmem:[%s1 + $0x50] sm:$0xf]
  %v3421 = vld [vmem:[%s1 + $0x54] sm:$0xff]
  %v3422 = vld [vmem:[%s1 + $0x5c] sm:$0xf]
  %v3423 = vld [vmem:[%s1 + $0x60] sm:$0xff]
  %v3424 = vld [vmem:[%s1 + $0x68] sm:$0xf]
  %v3425 = vld [vmem:[%s1 + $0x6c] sm:$0xff]
  %v3426 = vld [vmem:[%s1 + $0x74] sm:$0xf]
  %v3427 = vld [vmem:[%s1 + $0x78] sm:$0xff]
  %v3428 = vld [vmem:[%s1 + $0x80] sm:$0xf]
  %v3429 = vld [vmem:[%s1 + $0x84] sm:$0xff]
  %v3430 = vld [vmem:[%s1 + $0x8c] sm:$0xf]
  %v3431 = vld [vmem:[%s1 + $0x90] sm:$0xff]
  %v3432 = vld [vmem:[%s1 + $0x98] sm:$0xf]
  %v3433 = vld [vmem:[%s1 + $0x9c] sm:$0xff]
  %v3434 = vld [vmem:[%s1 + $0xa4] sm:$0xf]
  %v3435 = vld [vmem:[%s1 + $0xa8] sm:$0xff]
  %v3436 = vld [vmem:[%s1 + $0xb0] sm:$0xf]
  %v3437 = vld [vmem:[%s1 + $0xb4] sm:$0xff]
  %v3438 = vld [vmem:[%s1 + $0xbc] sm:$0xf]
  %v3439 = vld [vmem:[%s1 + $0xc0] sm:$0xff]
  %v3440 = vld [vmem:[%s1 + $0xc8] sm:$0xf]
  %v3441 = vld [vmem:[%s1 + $0xcc] sm:$0xff]
  %v3442 = vld [vmem:[%s1 + $0xd4] sm:$0xf]
  %v3443 = vld [vmem:[%s1 + $0xd8] sm:$0xff]
  %v3444 = vld [vmem:[%s1 + $0xe0] sm:$0xf]
  %v3445 = vld [vmem:[%s1 + $0xe4] sm:$0xff]
  %v3446 = vld [vmem:[%s1 + $0xec] sm:$0xf]
  %v3447 = vld [vmem:[%s1 + $0xf0] sm:$0xff]
  %v3448 = vld [vmem:[%s1 + $0xf8] sm:$0xf]
  %v3449 = vld [vmem:[%s1 + $0xfc] sm:$0xff]
  %v3450 = vld [vmem:[%s1 + $0x104] sm:$0xf]
  %v3451 = vld [vmem:[%s1 + $0x108] sm:$0xff]
  %v3452 = vld [vmem:[%s1 + $0x110] sm:$0xf]
  %v3453 = vld [vmem:[%s1 + $0x114] sm:$0xff]
  %v3454 = vld [vmem:[%s1 + $0x11c] sm:$0xf]
  %v3455 = vld [vmem:[%s1 + $0x120] sm:$0xff]
  %v3456 = vld [vmem:[%s1 + $0x128] sm:$0xf]
  %v3457 = vld [vmem:[%s1 + $0x12c] sm:$0xff]
  %v3458 = vld [vmem:[%s1 + $0x134] sm:$0xf]
  %v3459 = vld [vmem:[%s1 + $0x138] sm:$0xff]
  %v3460 = vld [vmem:[%s1 + $0x140] sm:$0xf]
  %v3461 = vld [vmem:[%s1 + $0x144] sm:$0xff]
  %v3462 = vld [vmem:[%s1 + $0x14c] sm:$0xf]
  %v3463 = vld [vmem:[%s1 + $0x150] sm:$0xff]
  %v3464 = vld [vmem:[%s1 + $0x158] sm:$0xf]
  %v3465 = vld [vmem:[%s1 + $0x15c] sm:$0xff]
  %v3466 = vld [vmem:[%s1 + $0x164] sm:$0xf]
  %v3467 = vld [vmem:[%s1 + $0x168] sm:$0xff]
  %v3468 = vld [vmem:[%s1 + $0x170] sm:$0xf]
  %v3469 = vld [vmem:[%s1 + $0x174] sm:$0xff]
  %v3470 = vld [vmem:[%s1 + $0x17c] sm:$0xf]
  %v3473 = vunpack.c.l.b16 %v3405
  %v3474 = vunpack.c.h.b16 %v3405
  %v3475 = vunpack.c.l.b16 %v3406
  %v3476 = vunpack.c.h.b16 %v3406
  %v3477 = vpack.c.b16 %v3475, %v3473
  %v3478 = vpack.c.b16 %v3476, %v3474
  %v3545 = vunpack.c.l.b16 %v3407
  %v3546 = vunpack.c.h.b16 %v3407
  %v3547 = vunpack.c.l.b16 %v3408
  %v3548 = vunpack.c.l.b16 %v3409
  %v3549 = vunpack.c.h.b16 %v3409
  %v3550 = vunpack.c.l.b16 %v3410
  %v3551 = vunpack.c.l.b16 %v3411
  %v3552 = vunpack.c.h.b16 %v3411
  %v3553 = vunpack.c.l.b16 %v3412
  %v3554 = vunpack.c.l.b16 %v3413
  %v3555 = vunpack.c.h.b16 %v3413
  %v3556 = vunpack.c.l.b16 %v3414
  %v3557 = vunpack.c.l.b16 %v3415
  %v3558 = vunpack.c.h.b16 %v3415
  %v3559 = vunpack.c.l.b16 %v3416
  %v3560 = vunpack.c.l.b16 %v3417
  %v3561 = vunpack.c.h.b16 %v3417
  %v3562 = vunpack.c.l.b16 %v3418
  %v3563 = vunpack.c.l.b16 %v3419
  %v3564 = vunpack.c.h.b16 %v3419
  %v3565 = vunpack.c.l.b16 %v3420
  %v3566 = vunpack.c.l.b16 %v3421
  %v3567 = vunpack.c.h.b16 %v3421
  %v3568 = vunpack.c.l.b16 %v3422
  %v3569 = vunpack.c.l.b16 %v3423
  %v3570 = vunpack.c.h.b16 %v3423
  %v3571 = vunpack.c.l.b16 %v3424
  %v3572 = vunpack.c.l.b16 %v3425
  %v3573 = vunpack.c.h.b16 %v3425
  %v3574 = vunpack.c.l.b16 %v3426
  %v3575 = vunpack.c.l.b16 %v3427
  %v3576 = vunpack.c.h.b16 %v3427
  %v3577 = vunpack.c.l.b16 %v3428
  %v3578 = vunpack.c.l.b16 %v3429
  %v3579 = vunpack.c.h.b16 %v3429
  %v3580 = vunpack.c.l.b16 %v3430
  %v3581 = vunpack.c.l.b16 %v3431
  %v3582 = vunpack.c.h.b16 %v3431
  %v3583 = vunpack.c.l.b16 %v3432
  %v3584 = vunpack.c.l.b16 %v3433
  %v3585 = vunpack.c.h.b16 %v3433
  %v3586 = vunpack.c.l.b16 %v3434
  %v3587 = vunpack.c.l.b16 %v3435
  %v3588 = vunpack.c.h.b16 %v3435
  %v3589 = vunpack.c.l.b16 %v3436
  %v3590 = vunpack.c.l.b16 %v3437
  %v3591 = vunpack.c.h.b16 %v3437
  %v3592 = vunpack.c.l.b16 %v3438
  %v3593 = vunpack.c.l.b16 %v3439
  %v3594 = vunpack.c.h.b16 %v3439
  %v3595 = vunpack.c.l.b16 %v3440
  %v3596 = vunpack.c.l.b16 %v3441
  %v3597 = vunpack.c.h.b16 %v3441
  %v3598 = vunpack.c.l.b16 %v3442
  %v3599 = vunpack.c.l.b16 %v3443
  %v3600 = vunpack.c.h.b16 %v3443
  %v3601 = vunpack.c.l.b16 %v3444
  %v3602 = vunpack.c.l.b16 %v3445
  %v3603 = vunpack.c.h.b16 %v3445
  %v3604 = vunpack.c.l.b16 %v3446
  %v3605 = vunpack.c.l.b16 %v3447
  %v3606 = vunpack.c.h.b16 %v3447
  %v3607 = vunpack.c.l.b16 %v3448
  %v3608 = vunpack.c.l.b16 %v3449
  %v3609 = vunpack.c.h.b16 %v3449
  %v3610 = vunpack.c.l.b16 %v3450
  %v3611 = vunpack.c.l.b16 %v3451
  %v3612 = vunpack.c.h.b16 %v3451
  %v3613 = vunpack.c.l.b16 %v3452
  %v3614 = vunpack.c.l.b16 %v3453
  %v3615 = vunpack.c.h.b16 %v3453
  %v3616 = vunpack.c.l.b16 %v3454
  %v3617 = vunpack.c.l.b16 %v3455
  %v3618 = vunpack.c.h.b16 %v3455
  %v3619 = vunpack.c.l.b16 %v3456
  %v3620 = vunpack.c.l.b16 %v3457
  %v3621 = vunpack.c.h.b16 %v3457
  %v3622 = vunpack.c.l.b16 %v3458
  %v3623 = vunpack.c.l.b16 %v3459
  %v3624 = vunpack.c.h.b16 %v3459
  %v3625 = vunpack.c.l.b16 %v3460
  %v3626 = vunpack.c.l.b16 %v3461
  %v3627 = vunpack.c.h.b16 %v3461
  %v3628 = vunpack.c.l.b16 %v3462
  %v3629 = vunpack.c.l.b16 %v3463
  %v3630 = vunpack.c.h.b16 %v3463
  %v3631 = vunpack.c.l.b16 %v3464
  %v3632 = vunpack.c.l.b16 %v3465
  %v3633 = vunpack.c.h.b16 %v3465
  %v3634 = vunpack.c.l.b16 %v3466
  %v3635 = vunpack.c.l.b16 %v3467
  %v3636 = vunpack.c.h.b16 %v3467
  %v3637 = vunpack.c.l.b16 %v3468
  %v3638 = vunpack.c.l.b16 %v3469
  %v3639 = vunpack.c.h.b16 %v3469
  %v3640 = vunpack.c.l.b16 %v3470
  %v3641 = vpack.c.b16 %v3548, %v3545
  %v3642 = vpack.c.b16 %v3549, %v3546
  %v3643 = vpack.c.b16 %v3550, %v3547
  %v3644 = vpack.c.b16 %v3554, %v3551
  %v3645 = vpack.c.b16 %v3555, %v3552
  %v3646 = vpack.c.b16 %v3556, %v3553
  %v3647 = vpack.c.b16 %v3560, %v3557
  %v3648 = vpack.c.b16 %v3561, %v3558
  %v3649 = vpack.c.b16 %v3562, %v3559
  %v3650 = vpack.c.b16 %v3566, %v3563
  %v3651 = vpack.c.b16 %v3567, %v3564
  %v3652 = vpack.c.b16 %v3568, %v3565
  %v3653 = vpack.c.b16 %v3572, %v3569
  %v3654 = vpack.c.b16 %v3573, %v3570
  %v3655 = vpack.c.b16 %v3574, %v3571
  %v3656 = vpack.c.b16 %v3578, %v3575
  %v3657 = vpack.c.b16 %v3579, %v3576
  %v3658 = vpack.c.b16 %v3580, %v3577
  %v3659 = vpack.c.b16 %v3584, %v3581
  %v3660 = vpack.c.b16 %v3585, %v3582
  %v3661 = vpack.c.b16 %v3586, %v3583
  %v3662 = vpack.c.b16 %v3590, %v3587
  %v3663 = vpack.c.b16 %v3591, %v3588
  %v3664 = vpack.c.b16 %v3592, %v3589
  %v3665 = vpack.c.b16 %v3596, %v3593
  %v3666 = vpack.c.b16 %v3597, %v3594
  %v3667 = vpack.c.b16 %v3598, %v3595
  %v3668 = vpack.c.b16 %v3602, %v3599
  %v3669 = vpack.c.b16 %v3603, %v3600
  %v3670 = vpack.c.b16 %v3604, %v3601
  %v3671 = vpack.c.b16 %v3608, %v3605
  %v3672 = vpack.c.b16 %v3609, %v3606
  %v3673 = vpack.c.b16 %v3610, %v3607
  %v3674 = vpack.c.b16 %v3614, %v3611
  %v3675 = vpack.c.b16 %v3615, %v3612
  %v3676 = vpack.c.b16 %v3616, %v3613
  %v3677 = vpack.c.b16 %v3620, %v3617
  %v3678 = vpack.c.b16 %v3621, %v3618
  %v3679 = vpack.c.b16 %v3622, %v3619
  %v3680 = vpack.c.b16 %v3626, %v3623
  %v3681 = vpack.c.b16 %v3627, %v3624
  %v3682 = vpack.c.b16 %v3628, %v3625
  %v3683 = vpack.c.b16 %v3632, %v3629
  %v3684 = vpack.c.b16 %v3633, %v3630
  %v3685 = vpack.c.b16 %v3634, %v3631
  %v3686 = vpack.c.b16 %v3638, %v3635
  %v3687 = vpack.c.b16 %v3639, %v3636
  %v3688 = vpack.c.b16 %v3640, %v3637
  %3737 = vmatprep.subr.bf16.mxu0 %v3663
  %3738 = vmatpush1.bf16.msra.mxu0 %v3662
  %3739 = vmatprep.subr.bf16.mxu0 %v3660
  %3740 = vmatpush1.bf16.msra.mxu0 %v3659
  %3741 = vmatprep.subr.bf16.mxu0 %v3657
  %3742 = vmatpush1.bf16.msra.mxu0 %v3656
  %3743 = vmatprep.subr.bf16.mxu0 %v3654
  %3744 = vmatpush1.bf16.msra.mxu0 %v3653
  %3745 = vmatprep.subr.bf16.mxu0 %v3651
  %3746 = vmatpush1.bf16.msra.mxu0 %v3650
  %3747 = vmatprep.subr.bf16.mxu0 %v3648
  %3748 = vmatpush1.bf16.msra.mxu0 %v3647
  %3749 = vmatprep.subr.bf16.mxu0 %v3645
  %3750 = vmatpush1.bf16.msra.mxu0 %v3644
  %3751 = vmatprep.subr.bf16.mxu0 %v3642
  %3752 = vmatpush1.bf16.msra.mxu0 %v3641
  %3753 = vmatprep.subr.bf16.mxu0 %v3687
  %3754 = vmatpush2.bf16.msra.mxu0 %v3686
  %3755 = vmatprep.subr.bf16.mxu0 %v3684
  %3756 = vmatpush2.bf16.msra.mxu0 %v3683
  %3757 = vmatprep.subr.bf16.mxu0 %v3681
  %3758 = vmatpush2.bf16.msra.mxu0 %v3680
  %3759 = vmatprep.subr.bf16.mxu0 %v3678
  %3760 = vmatpush2.bf16.msra.mxu0 %v3677
  %3761 = vmatprep.subr.bf16.mxu0 %v3675
  %3762 = vmatpush2.bf16.msra.mxu0 %v3674
  %3763 = vmatprep.subr.bf16.mxu0 %v3672
  %3764 = vmatpush2.bf16.msra.mxu0 %v3671
  %3765 = vmatprep.subr.bf16.mxu0 %v3669
  %3766 = vmatpush2.bf16.msra.mxu0 %v3668
  %3767 = vmatprep.subr.bf16.mxu0 %v3666
  %3768 = vmatpush2.bf16.msra.mxu0 %v3665
  %3769 = vmatprep.mubr.bf16.mxu0 %v3478
  %3770 = vmatmul.mubr.bf16.gmra.mxu0 %v3477
  %v3771 = vpop.f32.mrf.mxu0
  %v3772 = vadd.f32 0.0, %v3771
  %v3773 = vpop.f32.mrf.mxu0
  %v3774 = vadd.f32 0.0, %v3773
  %v3775 = vpop.f32.mrf.mxu0
  %v3776 = vadd.f32 0.0, %v3775
  %v3777 = vpop.f32.mrf.mxu0
  %v3778 = vadd.f32 0.0, %v3777
  %3779 = vdwg.mxu0
  %3780 = vmatprep.subr.bf16.mxu0 0
  %3781 = vmatpush1.bf16.msra.mxu0 %v3664
  %3782 = vmatprep.subr.bf16.mxu0 0
  %3783 = vmatpush1.bf16.msra.mxu0 %v3661
  %3784 = vmatprep.subr.bf16.mxu0 0
  %3785 = vmatpush1.bf16.msra.mxu0 %v3658
  %3786 = vmatprep.subr.bf16.mxu0 0
  %3787 = vmatpush1.bf16.msra.mxu0 %v3655
  %3788 = vmatprep.subr.bf16.mxu0 0
  %3789 = vmatpush1.bf16.msra.mxu0 %v3652
  %3790 = vmatprep.subr.bf16.mxu0 0
  %3791 = vmatpush1.bf16.msra.mxu0 %v3649
  %3792 = vmatprep.subr.bf16.mxu0 0
  %3793 = vmatpush1.bf16.msra.mxu0 %v3646
  %3794 = vmatprep.subr.bf16.mxu0 0
  %3795 = vmatpush1.bf16.msra.mxu0 %v3643
  %3796 = vmatprep.subr.bf16.mxu0 0
  %3797 = vmatpush2.bf16.msra.mxu0 %v3688
  %3798 = vmatprep.subr.bf16.mxu0 0
  %3799 = vmatpush2.bf16.msra.mxu0 %v3685
  %3800 = vmatprep.subr.bf16.mxu0 0
  %3801 = vmatpush2.bf16.msra.mxu0 %v3682
  %3802 = vmatprep.subr.bf16.mxu0 0
  %3803 = vmatpush2.bf16.msra.mxu0 %v3679
  %3804 = vmatprep.subr.bf16.mxu0 0
  %3805 = vmatpush2.bf16.msra.mxu0 %v3676
  %3806 = vmatprep.subr.bf16.mxu0 0
  %3807 = vmatpush2.bf16.msra.mxu0 %v3673
  %3808 = vmatprep.subr.bf16.mxu0 0
  %3809 = vmatpush2.bf16.msra.mxu0 %v3670
  %3810 = vmatprep.subr.bf16.mxu0 0
  %3811 = vmatpush2.bf16.msra.mxu0 %v3667
  %3812 = vmatprep.mubr.bf16.mxu0 %v3478
  %3813 = vmatmul.mubr.bf16.gmra.mxu0 %v3477
  %v3814 = vpop.f32.mrf.mxu0
  %v3815 = vadd.f32 0.0, %v3814
  %v3816 = vpop.f32.mrf.mxu0
  %v3817 = vpop.f32.mrf.mxu0
  %v3818 = vadd.f32 0.0, %v3817
  %v3819 = vpop.f32.mrf.mxu0
  %3820 = vdwg.mxu0
  %v3821 = vmax.f32 %v3772, 0.0
  %v3822 = vmax.f32 %v3774, 0.0
  %v3823 = vmax.f32 %v3815, 0.0
  %v3824 = vmax.f32 %v3776, 0.0
  %v3825 = vmax.f32 %v3778, 0.0
  %v3826 = vmax.f32 %v3818, 0.0
  %v3827 = vpack.c.bf16 %v3824, %v3821
  %v3828 = vpack.c.bf16 %v3825, %v3822
  %v3829 = vpack.c.bf16 %v3826, %v3823
  %v3830 = vld [vmem:[%s2] sm:$0xf]
  %v3831 = vld [vmem:[%s2 + $0x4] sm:$0xf]
  %v3832 = vld [vmem:[%s2 + $0x8] sm:$0xf]
  %v3833 = vld [vmem:[%s2 + $0xc] sm:$0xf]
  %v3834 = vld [vmem:[%s2 + $0x10] sm:$0xf]
  %v3835 = vld [vmem:[%s2 + $0x14] sm:$0xf]
  %v3836 = vld [vmem:[%s2 + $0x18] sm:$0xf]
  %v3837 = vld [vmem:[%s2 + $0x1c] sm:$0xf]
  %v3838 = vld [vmem:[%s2 + $0x20] sm:$0xf]
  %v3839 = vld [vmem:[%s2 + $0x24] sm:$0xf]
  %v3840 = vld [vmem:[%s2 + $0x28] sm:$0xf]
  %v3841 = vld [vmem:[%s2 + $0x2c] sm:$0xf]
  %v3842 = vld [vmem:[%s2 + $0x30] sm:$0xf]
  %v3843 = vld [vmem:[%s2 + $0x34] sm:$0xf]
  %v3844 = vld [vmem:[%s2 + $0x38] sm:$0xf]
  %v3845 = vld [vmem:[%s2 + $0x3c] sm:$0xf]
  %v3846 = vld [vmem:[%s2 + $0x40] sm:$0xf]
  %v3847 = vld [vmem:[%s2 + $0x44] sm:$0xf]
  %v3848 = vld [vmem:[%s2 + $0x48] sm:$0xf]
  %v3849 = vld [vmem:[%s2 + $0x4c] sm:$0xf]
  %v3850 = vld [vmem:[%s2 + $0x50] sm:$0xf]
  %v3851 = vld [vmem:[%s2 + $0x54] sm:$0xf]
  %v3852 = vld [vmem:[%s2 + $0x58] sm:$0xf]
  %v3853 = vld [vmem:[%s2 + $0x5c] sm:$0xf]
  %v3854 = vld [vmem:[%s2 + $0x60] sm:$0xf]
  %v3855 = vld [vmem:[%s2 + $0x64] sm:$0xf]
  %v3856 = vld [vmem:[%s2 + $0x68] sm:$0xf]
  %v3857 = vld [vmem:[%s2 + $0x6c] sm:$0xf]
  %v3858 = vld [vmem:[%s2 + $0x70] sm:$0xf]
  %v3859 = vld [vmem:[%s2 + $0x74] sm:$0xf]
  %v3860 = vld [vmem:[%s2 + $0x78] sm:$0xf]
  %v3861 = vld [vmem:[%s2 + $0x7c] sm:$0xf]
  %v3862 = vld [vmem:[%s2 + $0x80] sm:$0xf]
  %v3863 = vld [vmem:[%s2 + $0x84] sm:$0xf]
  %v3864 = vld [vmem:[%s2 + $0x88] sm:$0xf]
  %v3865 = vld [vmem:[%s2 + $0x8c] sm:$0xf]
  %v3866 = vld [vmem:[%s2 + $0x90] sm:$0x1]
  %v3904 = vunpack.c.l.b16 %v3830
  %v3905 = vunpack.c.l.b16 %v3831
  %v3906 = vunpack.c.l.b16 %v3832
  %v3907 = vunpack.c.l.b16 %v3833
  %v3908 = vunpack.c.l.b16 %v3834
  %v3909 = vunpack.c.l.b16 %v3835
  %v3910 = vunpack.c.l.b16 %v3836
  %v3911 = vunpack.c.l.b16 %v3837
  %v3912 = vunpack.c.l.b16 %v3838
  %v3913 = vunpack.c.l.b16 %v3839
  %v3914 = vunpack.c.l.b16 %v3840
  %v3915 = vunpack.c.l.b16 %v3841
  %v3916 = vunpack.c.l.b16 %v3842
  %v3917 = vunpack.c.l.b16 %v3843
  %v3918 = vunpack.c.l.b16 %v3844
  %v3919 = vunpack.c.l.b16 %v3845
  %v3920 = vunpack.c.l.b16 %v3846
  %v3921 = vunpack.c.l.b16 %v3847
  %v3922 = vunpack.c.l.b16 %v3848
  %v3923 = vunpack.c.l.b16 %v3849
  %v3924 = vunpack.c.l.b16 %v3850
  %v3925 = vunpack.c.l.b16 %v3851
  %v3926 = vunpack.c.l.b16 %v3852
  %v3927 = vunpack.c.l.b16 %v3853
  %v3928 = vunpack.c.l.b16 %v3854
  %v3929 = vunpack.c.l.b16 %v3855
  %v3930 = vunpack.c.l.b16 %v3856
  %v3931 = vunpack.c.l.b16 %v3857
  %v3932 = vunpack.c.l.b16 %v3858
  %v3933 = vunpack.c.l.b16 %v3859
  %v3934 = vunpack.c.l.b16 %v3860
  %v3935 = vunpack.c.l.b16 %v3861
  %v3936 = vunpack.c.l.b16 %v3862
  %v3937 = vunpack.c.l.b16 %v3863
  %v3938 = vunpack.c.l.b16 %v3864
  %v3939 = vunpack.c.l.b16 %v3865
  %v3940 = vunpack.c.l.b16 %v3866
  %v3941 = vpack.c.b16 %v3905, %v3904
  %v3942 = vpack.c.b16 %v3907, %v3906
  %v3943 = vpack.c.b16 %v3909, %v3908
  %v3944 = vpack.c.b16 %v3911, %v3910
  %v3945 = vpack.c.b16 %v3913, %v3912
  %v3946 = vpack.c.b16 %v3915, %v3914
  %v3947 = vpack.c.b16 %v3917, %v3916
  %v3948 = vpack.c.b16 %v3919, %v3918
  %v3949 = vpack.c.b16 %v3921, %v3920
  %v3950 = vpack.c.b16 %v3923, %v3922
  %v3951 = vpack.c.b16 %v3925, %v3924
  %v3952 = vpack.c.b16 %v3927, %v3926
  %v3953 = vpack.c.b16 %v3929, %v3928
  %v3954 = vpack.c.b16 %v3931, %v3930
  %v3955 = vpack.c.b16 %v3933, %v3932
  %v3956 = vpack.c.b16 %v3935, %v3934
  %v3957 = vpack.c.b16 %v3937, %v3936
  %v3958 = vpack.c.b16 %v3939, %v3938
  %v3959 = vpack.c.b16 %v3940, %v3940
  %v3979 = vsel %vm594, %v3829, 0
  %v3982 = vand.u32 %v3959, %v600
  %3984 = vmatprep.subr.bf16.mxu0 0
  %3985 = vmatpush1.bf16.msra.mxu0 %v3948
  %3986 = vmatprep.subr.bf16.mxu0 0
  %3987 = vmatpush1.bf16.msra.mxu0 %v3947
  %3988 = vmatprep.subr.bf16.mxu0 0
  %3989 = vmatpush1.bf16.msra.mxu0 %v3946
  %3990 = vmatprep.subr.bf16.mxu0 0
  %3991 = vmatpush1.bf16.msra.mxu0 %v3945
  %3992 = vmatprep.subr.bf16.mxu0 0
  %3993 = vmatpush1.bf16.msra.mxu0 %v3944
  %3994 = vmatprep.subr.bf16.mxu0 0
  %3995 = vmatpush1.bf16.msra.mxu0 %v3943
  %3996 = vmatprep.subr.bf16.mxu0 0
  %3997 = vmatpush1.bf16.msra.mxu0 %v3942
  %3998 = vmatprep.subr.bf16.mxu0 0
  %3999 = vmatpush1.bf16.msra.mxu0 %v3941
  %4000 = vmatprep.subr.bf16.mxu0 0
  %4001 = vmatpush2.bf16.msra.mxu0 %v3956
  %4002 = vmatprep.subr.bf16.mxu0 0
  %4003 = vmatpush2.bf16.msra.mxu0 %v3955
  %4004 = vmatprep.subr.bf16.mxu0 0
  %4005 = vmatpush2.bf16.msra.mxu0 %v3954
  %4006 = vmatprep.subr.bf16.mxu0 0
  %4007 = vmatpush2.bf16.msra.mxu0 %v3953
  %4008 = vmatprep.subr.bf16.mxu0 0
  %4009 = vmatpush2.bf16.msra.mxu0 %v3952
  %4010 = vmatprep.subr.bf16.mxu0 0
  %4011 = vmatpush2.bf16.msra.mxu0 %v3951
  %4012 = vmatprep.subr.bf16.mxu0 0
  %4013 = vmatpush2.bf16.msra.mxu0 %v3950
  %4014 = vmatprep.subr.bf16.mxu0 0
  %4015 = vmatpush2.bf16.msra.mxu0 %v3949
  %4016 = vmatprep.mubr.bf16.mxu0 %v3828
  %4017 = vmatmul.mubr.bf16.gmra.mxu0 %v3827
  %v4018 = vpop.f32.mrf.mxu0
  %v4019 = vadd.f32 0.0, %v4018
  %v4020 = vpop.f32.mrf.mxu0
  %v4021 = vpop.f32.mrf.mxu0
  %v4022 = vadd.f32 0.0, %v4021
  %v4023 = vpop.f32.mrf.mxu0
  %4024 = vdwg.mxu0
  %4025 = vmatprep.subr.bf16.mxu0 0
  %4026 = vmatpush1.bf16.msra.mxu0 0
  %4027 = vmatprep.subr.bf16.mxu0 0
  %4028 = vmatpush1.bf16.msra.mxu0 0
  %4029 = vmatprep.subr.bf16.mxu0 0
  %4030 = vmatpush1.bf16.msra.mxu0 0
  %4031 = vmatprep.subr.bf16.mxu0 0
  %4032 = vmatpush1.bf16.msra.mxu0 0
  %4033 = vmatprep.subr.bf16.mxu0 0
  %4034 = vmatpush1.bf16.msra.mxu0 0
  %4035 = vmatprep.subr.bf16.mxu0 0
  %4036 = vmatpush1.bf16.msra.mxu0 %v3982
  %4037 = vmatprep.subr.bf16.mxu0 0
  %4038 = vmatpush1.bf16.msra.mxu0 %v3958
  %4039 = vmatprep.subr.bf16.mxu0 0
  %4040 = vmatpush1.bf16.msra.mxu0 %v3957
  %4041 = vmatprep.subr.bf16.mxu0 0
  %4042 = vmatpush2.bf16.msra.mxu0 0
  %4043 = vmatprep.subr.bf16.mxu0 0
  %4044 = vmatpush2.bf16.msra.mxu0 0
  %4045 = vmatprep.subr.bf16.mxu0 0
  %4046 = vmatpush2.bf16.msra.mxu0 0
  %4047 = vmatprep.subr.bf16.mxu0 0
  %4048 = vmatpush2.bf16.msra.mxu0 0
  %4049 = vmatprep.subr.bf16.mxu0 0
  %4050 = vmatpush2.bf16.msra.mxu0 0
  %4051 = vmatprep.subr.bf16.mxu0 0
  %4052 = vmatpush2.bf16.msra.mxu0 0
  %4053 = vmatprep.subr.bf16.mxu0 0
  %4054 = vmatpush2.bf16.msra.mxu0 0
  %4055 = vmatprep.subr.bf16.mxu0 0
  %4056 = vmatpush2.bf16.msra.mxu0 0
  %4057 = vmatprep.mubr.bf16.mxu0 0
  %4058 = vmatmul.mubr.bf16.gmra.mxu0 %v3979
  %v4059 = vpop.f32.mrf.mxu0
  %v4060 = vadd.f32 %v4019, %v4059
  %v4061 = vpop.f32.mrf.mxu0
  %v4062 = vpop.f32.mrf.mxu0
  %v4063 = vadd.f32 %v4022, %v4062
  %v4064 = vpop.f32.mrf.mxu0
  %4065 = vdwg.mxu0
  %v4066 = vmax.f32 %v4060, 0.0
  %v4067 = vmax.f32 %v4063, 0.0
  %v4068 = vpack.c.bf16 %v4067, %v4066
  %v4070 = vunpack.c.l.b16 %v4068
  %v4071 = vunpack.c.h.b16 %v4068
  %v4072 = vpack.c.b16 %v4070, %v4070
  %v4073 = vpack.c.b16 %v4071, %v4071
  %4074 = vrot.lane.b32.xlu0 %v4072, 64
  %v4075 = vpop.permute.xlu0 %4074
  %4076 = vrot.lane.b32.xlu0 %v4073, 64
  %v4077 = vpop.permute.xlu0 %4076
  %4080 = vst.msk [vmem:[#allocation2 + $0x8] sm:$0xf] %vm1375, %v4075
  %4081 = vst.msk [vmem:[#allocation2 + $0x1c] sm:$0xf] %vm1375, %v4077
  %s4082 = scalar_lea.vmem %s0, 96
  %v4083 = vld [vmem:[%s4082] sm:$0xff]
  %v4084 = vld [vmem:[%s4082 + $0x8] sm:$0xff]
  %v4085 = vld [vmem:[%s1] sm:$0xff]
  %v4086 = vld [vmem:[%s1 + $0x8] sm:$0xf]
  %v4087 = vld [vmem:[%s1 + $0xc] sm:$0xff]
  %v4088 = vld [vmem:[%s1 + $0x14] sm:$0xf]
  %v4089 = vld [vmem:[%s1 + $0x18] sm:$0xff]
  %v4090 = vld [vmem:[%s1 + $0x20] sm:$0xf]
  %v4091 = vld [vmem:[%s1 + $0x24] sm:$0xff]
  %v4092 = vld [vmem:[%s1 + $0x2c] sm:$0xf]
  %v4093 = vld [vmem:[%s1 + $0x30] sm:$0xff]
  %v4094 = vld [vmem:[%s1 + $0x38] sm:$0xf]
  %v4095 = vld [vmem:[%s1 + $0x3c] sm:$0xff]
  %v4096 = vld [vmem:[%s1 + $0x44] sm:$0xf]
  %v4097 = vld [vmem:[%s1 + $0x48] sm:$0xff]
  %v4098 = vld [vmem:[%s1 + $0x50] sm:$0xf]
  %v4099 = vld [vmem:[%s1 + $0x54] sm:$0xff]
  %v4100 = vld [vmem:[%s1 + $0x5c] sm:$0xf]
  %v4101 = vld [vmem:[%s1 + $0x60] sm:$0xff]
  %v4102 = vld [vmem:[%s1 + $0x68] sm:$0xf]
  %v4103 = vld [vmem:[%s1 + $0x6c] sm:$0xff]
  %v4104 = vld [vmem:[%s1 + $0x74] sm:$0xf]
  %v4105 = vld [vmem:[%s1 + $0x78] sm:$0xff]
  %v4106 = vld [vmem:[%s1 + $0x80] sm:$0xf]
  %v4107 = vld [vmem:[%s1 + $0x84] sm:$0xff]
  %v4108 = vld [vmem:[%s1 + $0x8c] sm:$0xf]
  %v4109 = vld [vmem:[%s1 + $0x90] sm:$0xff]
  %v4110 = vld [vmem:[%s1 + $0x98] sm:$0xf]
  %v4111 = vld [vmem:[%s1 + $0x9c] sm:$0xff]
  %v4112 = vld [vmem:[%s1 + $0xa4] sm:$0xf]
  %v4113 = vld [vmem:[%s1 + $0xa8] sm:$0xff]
  %v4114 = vld [vmem:[%s1 + $0xb0] sm:$0xf]
  %v4115 = vld [vmem:[%s1 + $0xb4] sm:$0xff]
  %v4116 = vld [vmem:[%s1 + $0xbc] sm:$0xf]
  %v4117 = vld [vmem:[%s1 + $0xc0] sm:$0xff]
  %v4118 = vld [vmem:[%s1 + $0xc8] sm:$0xf]
  %v4119 = vld [vmem:[%s1 + $0xcc] sm:$0xff]
  %v4120 = vld [vmem:[%s1 + $0xd4] sm:$0xf]
  %v4121 = vld [vmem:[%s1 + $0xd8] sm:$0xff]
  %v4122 = vld [vmem:[%s1 + $0xe0] sm:$0xf]
  %v4123 = vld [vmem:[%s1 + $0xe4] sm:$0xff]
  %v4124 = vld [vmem:[%s1 + $0xec] sm:$0xf]
  %v4125 = vld [vmem:[%s1 + $0xf0] sm:$0xff]
  %v4126 = vld [vmem:[%s1 + $0xf8] sm:$0xf]
  %v4127 = vld [vmem:[%s1 + $0xfc] sm:$0xff]
  %v4128 = vld [vmem:[%s1 + $0x104] sm:$0xf]
  %v4129 = vld [vmem:[%s1 + $0x108] sm:$0xff]
  %v4130 = vld [vmem:[%s1 + $0x110] sm:$0xf]
  %v4131 = vld [vmem:[%s1 + $0x114] sm:$0xff]
  %v4132 = vld [vmem:[%s1 + $0x11c] sm:$0xf]
  %v4133 = vld [vmem:[%s1 + $0x120] sm:$0xff]
  %v4134 = vld [vmem:[%s1 + $0x128] sm:$0xf]
  %v4135 = vld [vmem:[%s1 + $0x12c] sm:$0xff]
  %v4136 = vld [vmem:[%s1 + $0x134] sm:$0xf]
  %v4137 = vld [vmem:[%s1 + $0x138] sm:$0xff]
  %v4138 = vld [vmem:[%s1 + $0x140] sm:$0xf]
  %v4139 = vld [vmem:[%s1 + $0x144] sm:$0xff]
  %v4140 = vld [vmem:[%s1 + $0x14c] sm:$0xf]
  %v4141 = vld [vmem:[%s1 + $0x150] sm:$0xff]
  %v4142 = vld [vmem:[%s1 + $0x158] sm:$0xf]
  %v4143 = vld [vmem:[%s1 + $0x15c] sm:$0xff]
  %v4144 = vld [vmem:[%s1 + $0x164] sm:$0xf]
  %v4145 = vld [vmem:[%s1 + $0x168] sm:$0xff]
  %v4146 = vld [vmem:[%s1 + $0x170] sm:$0xf]
  %v4147 = vld [vmem:[%s1 + $0x174] sm:$0xff]
  %v4148 = vld [vmem:[%s1 + $0x17c] sm:$0xf]
  %v4151 = vunpack.c.l.b16 %v4083
  %v4152 = vunpack.c.h.b16 %v4083
  %v4153 = vunpack.c.l.b16 %v4084
  %v4154 = vunpack.c.h.b16 %v4084
  %v4155 = vpack.c.b16 %v4153, %v4151
  %v4156 = vpack.c.b16 %v4154, %v4152
  %v4223 = vunpack.c.l.b16 %v4085
  %v4224 = vunpack.c.h.b16 %v4085
  %v4225 = vunpack.c.l.b16 %v4086
  %v4226 = vunpack.c.l.b16 %v4087
  %v4227 = vunpack.c.h.b16 %v4087
  %v4228 = vunpack.c.l.b16 %v4088
  %v4229 = vunpack.c.l.b16 %v4089
  %v4230 = vunpack.c.h.b16 %v4089
  %v4231 = vunpack.c.l.b16 %v4090
  %v4232 = vunpack.c.l.b16 %v4091
  %v4233 = vunpack.c.h.b16 %v4091
  %v4234 = vunpack.c.l.b16 %v4092
  %v4235 = vunpack.c.l.b16 %v4093
  %v4236 = vunpack.c.h.b16 %v4093
  %v4237 = vunpack.c.l.b16 %v4094
  %v4238 = vunpack.c.l.b16 %v4095
  %v4239 = vunpack.c.h.b16 %v4095
  %v4240 = vunpack.c.l.b16 %v4096
  %v4241 = vunpack.c.l.b16 %v4097
  %v4242 = vunpack.c.h.b16 %v4097
  %v4243 = vunpack.c.l.b16 %v4098
  %v4244 = vunpack.c.l.b16 %v4099
  %v4245 = vunpack.c.h.b16 %v4099
  %v4246 = vunpack.c.l.b16 %v4100
  %v4247 = vunpack.c.l.b16 %v4101
  %v4248 = vunpack.c.h.b16 %v4101
  %v4249 = vunpack.c.l.b16 %v4102
  %v4250 = vunpack.c.l.b16 %v4103
  %v4251 = vunpack.c.h.b16 %v4103
  %v4252 = vunpack.c.l.b16 %v4104
  %v4253 = vunpack.c.l.b16 %v4105
  %v4254 = vunpack.c.h.b16 %v4105
  %v4255 = vunpack.c.l.b16 %v4106
  %v4256 = vunpack.c.l.b16 %v4107
  %v4257 = vunpack.c.h.b16 %v4107
  %v4258 = vunpack.c.l.b16 %v4108
  %v4259 = vunpack.c.l.b16 %v4109
  %v4260 = vunpack.c.h.b16 %v4109
  %v4261 = vunpack.c.l.b16 %v4110
  %v4262 = vunpack.c.l.b16 %v4111
  %v4263 = vunpack.c.h.b16 %v4111
  %v4264 = vunpack.c.l.b16 %v4112
  %v4265 = vunpack.c.l.b16 %v4113
  %v4266 = vunpack.c.h.b16 %v4113
  %v4267 = vunpack.c.l.b16 %v4114
  %v4268 = vunpack.c.l.b16 %v4115
  %v4269 = vunpack.c.h.b16 %v4115
  %v4270 = vunpack.c.l.b16 %v4116
  %v4271 = vunpack.c.l.b16 %v4117
  %v4272 = vunpack.c.h.b16 %v4117
  %v4273 = vunpack.c.l.b16 %v4118
  %v4274 = vunpack.c.l.b16 %v4119
  %v4275 = vunpack.c.h.b16 %v4119
  %v4276 = vunpack.c.l.b16 %v4120
  %v4277 = vunpack.c.l.b16 %v4121
  %v4278 = vunpack.c.h.b16 %v4121
  %v4279 = vunpack.c.l.b16 %v4122
  %v4280 = vunpack.c.l.b16 %v4123
  %v4281 = vunpack.c.h.b16 %v4123
  %v4282 = vunpack.c.l.b16 %v4124
  %v4283 = vunpack.c.l.b16 %v4125
  %v4284 = vunpack.c.h.b16 %v4125
  %v4285 = vunpack.c.l.b16 %v4126
  %v4286 = vunpack.c.l.b16 %v4127
  %v4287 = vunpack.c.h.b16 %v4127
  %v4288 = vunpack.c.l.b16 %v4128
  %v4289 = vunpack.c.l.b16 %v4129
  %v4290 = vunpack.c.h.b16 %v4129
  %v4291 = vunpack.c.l.b16 %v4130
  %v4292 = vunpack.c.l.b16 %v4131
  %v4293 = vunpack.c.h.b16 %v4131
  %v4294 = vunpack.c.l.b16 %v4132
  %v4295 = vunpack.c.l.b16 %v4133
  %v4296 = vunpack.c.h.b16 %v4133
  %v4297 = vunpack.c.l.b16 %v4134
  %v4298 = vunpack.c.l.b16 %v4135
  %v4299 = vunpack.c.h.b16 %v4135
  %v4300 = vunpack.c.l.b16 %v4136
  %v4301 = vunpack.c.l.b16 %v4137
  %v4302 = vunpack.c.h.b16 %v4137
  %v4303 = vunpack.c.l.b16 %v4138
  %v4304 = vunpack.c.l.b16 %v4139
  %v4305 = vunpack.c.h.b16 %v4139
  %v4306 = vunpack.c.l.b16 %v4140
  %v4307 = vunpack.c.l.b16 %v4141
  %v4308 = vunpack.c.h.b16 %v4141
  %v4309 = vunpack.c.l.b16 %v4142
  %v4310 = vunpack.c.l.b16 %v4143
  %v4311 = vunpack.c.h.b16 %v4143
  %v4312 = vunpack.c.l.b16 %v4144
  %v4313 = vunpack.c.l.b16 %v4145
  %v4314 = vunpack.c.h.b16 %v4145
  %v4315 = vunpack.c.l.b16 %v4146
  %v4316 = vunpack.c.l.b16 %v4147
  %v4317 = vunpack.c.h.b16 %v4147
  %v4318 = vunpack.c.l.b16 %v4148
  %v4319 = vpack.c.b16 %v4226, %v4223
  %v4320 = vpack.c.b16 %v4227, %v4224
  %v4321 = vpack.c.b16 %v4228, %v4225
  %v4322 = vpack.c.b16 %v4232, %v4229
  %v4323 = vpack.c.b16 %v4233, %v4230
  %v4324 = vpack.c.b16 %v4234, %v4231
  %v4325 = vpack.c.b16 %v4238, %v4235
  %v4326 = vpack.c.b16 %v4239, %v4236
  %v4327 = vpack.c.b16 %v4240, %v4237
  %v4328 = vpack.c.b16 %v4244, %v4241
  %v4329 = vpack.c.b16 %v4245, %v4242
  %v4330 = vpack.c.b16 %v4246, %v4243
  %v4331 = vpack.c.b16 %v4250, %v4247
  %v4332 = vpack.c.b16 %v4251, %v4248
  %v4333 = vpack.c.b16 %v4252, %v4249
  %v4334 = vpack.c.b16 %v4256, %v4253
  %v4335 = vpack.c.b16 %v4257, %v4254
  %v4336 = vpack.c.b16 %v4258, %v4255
  %v4337 = vpack.c.b16 %v4262, %v4259
  %v4338 = vpack.c.b16 %v4263, %v4260
  %v4339 = vpack.c.b16 %v4264, %v4261
  %v4340 = vpack.c.b16 %v4268, %v4265
  %v4341 = vpack.c.b16 %v4269, %v4266
  %v4342 = vpack.c.b16 %v4270, %v4267
  %v4343 = vpack.c.b16 %v4274, %v4271
  %v4344 = vpack.c.b16 %v4275, %v4272
  %v4345 = vpack.c.b16 %v4276, %v4273
  %v4346 = vpack.c.b16 %v4280, %v4277
  %v4347 = vpack.c.b16 %v4281, %v4278
  %v4348 = vpack.c.b16 %v4282, %v4279
  %v4349 = vpack.c.b16 %v4286, %v4283
  %v4350 = vpack.c.b16 %v4287, %v4284
  %v4351 = vpack.c.b16 %v4288, %v4285
  %v4352 = vpack.c.b16 %v4292, %v4289
  %v4353 = vpack.c.b16 %v4293, %v4290
  %v4354 = vpack.c.b16 %v4294, %v4291
  %v4355 = vpack.c.b16 %v4298, %v4295
  %v4356 = vpack.c.b16 %v4299, %v4296
  %v4357 = vpack.c.b16 %v4300, %v4297
  %v4358 = vpack.c.b16 %v4304, %v4301
  %v4359 = vpack.c.b16 %v4305, %v4302
  %v4360 = vpack.c.b16 %v4306, %v4303
  %v4361 = vpack.c.b16 %v4310, %v4307
  %v4362 = vpack.c.b16 %v4311, %v4308
  %v4363 = vpack.c.b16 %v4312, %v4309
  %v4364 = vpack.c.b16 %v4316, %v4313
  %v4365 = vpack.c.b16 %v4317, %v4314
  %v4366 = vpack.c.b16 %v4318, %v4315
  %4415 = vmatprep.subr.bf16.mxu0 %v4341
  %4416 = vmatpush1.bf16.msra.mxu0 %v4340
  %4417 = vmatprep.subr.bf16.mxu0 %v4338
  %4418 = vmatpush1.bf16.msra.mxu0 %v4337
  %4419 = vmatprep.subr.bf16.mxu0 %v4335
  %4420 = vmatpush1.bf16.msra.mxu0 %v4334
  %4421 = vmatprep.subr.bf16.mxu0 %v4332
  %4422 = vmatpush1.bf16.msra.mxu0 %v4331
  %4423 = vmatprep.subr.bf16.mxu0 %v4329
  %4424 = vmatpush1.bf16.msra.mxu0 %v4328
  %4425 = vmatprep.subr.bf16.mxu0 %v4326
  %4426 = vmatpush1.bf16.msra.mxu0 %v4325
  %4427 = vmatprep.subr.bf16.mxu0 %v4323
  %4428 = vmatpush1.bf16.msra.mxu0 %v4322
  %4429 = vmatprep.subr.bf16.mxu0 %v4320
  %4430 = vmatpush1.bf16.msra.mxu0 %v4319
  %4431 = vmatprep.subr.bf16.mxu0 %v4365
  %4432 = vmatpush2.bf16.msra.mxu0 %v4364
  %4433 = vmatprep.subr.bf16.mxu0 %v4362
  %4434 = vmatpush2.bf16.msra.mxu0 %v4361
  %4435 = vmatprep.subr.bf16.mxu0 %v4359
  %4436 = vmatpush2.bf16.msra.mxu0 %v4358
  %4437 = vmatprep.subr.bf16.mxu0 %v4356
  %4438 = vmatpush2.bf16.msra.mxu0 %v4355
  %4439 = vmatprep.subr.bf16.mxu0 %v4353
  %4440 = vmatpush2.bf16.msra.mxu0 %v4352
  %4441 = vmatprep.subr.bf16.mxu0 %v4350
  %4442 = vmatpush2.bf16.msra.mxu0 %v4349
  %4443 = vmatprep.subr.bf16.mxu0 %v4347
  %4444 = vmatpush2.bf16.msra.mxu0 %v4346
  %4445 = vmatprep.subr.bf16.mxu0 %v4344
  %4446 = vmatpush2.bf16.msra.mxu0 %v4343
  %4447 = vmatprep.mubr.bf16.mxu0 %v4156
  %4448 = vmatmul.mubr.bf16.gmra.mxu0 %v4155
  %v4449 = vpop.f32.mrf.mxu0
  %v4450 = vadd.f32 0.0, %v4449
  %v4451 = vpop.f32.mrf.mxu0
  %v4452 = vadd.f32 0.0, %v4451
  %v4453 = vpop.f32.mrf.mxu0
  %v4454 = vadd.f32 0.0, %v4453
  %v4455 = vpop.f32.mrf.mxu0
  %v4456 = vadd.f32 0.0, %v4455
  %4457 = vdwg.mxu0
  %4458 = vmatprep.subr.bf16.mxu0 0
  %4459 = vmatpush1.bf16.msra.mxu0 %v4342
  %4460 = vmatprep.subr.bf16.mxu0 0
  %4461 = vmatpush1.bf16.msra.mxu0 %v4339
  %4462 = vmatprep.subr.bf16.mxu0 0
  %4463 = vmatpush1.bf16.msra.mxu0 %v4336
  %4464 = vmatprep.subr.bf16.mxu0 0
  %4465 = vmatpush1.bf16.msra.mxu0 %v4333
  %4466 = vmatprep.subr.bf16.mxu0 0
  %4467 = vmatpush1.bf16.msra.mxu0 %v4330
  %4468 = vmatprep.subr.bf16.mxu0 0
  %4469 = vmatpush1.bf16.msra.mxu0 %v4327
  %4470 = vmatprep.subr.bf16.mxu0 0
  %4471 = vmatpush1.bf16.msra.mxu0 %v4324
  %4472 = vmatprep.subr.bf16.mxu0 0
  %4473 = vmatpush1.bf16.msra.mxu0 %v4321
  %4474 = vmatprep.subr.bf16.mxu0 0
  %4475 = vmatpush2.bf16.msra.mxu0 %v4366
  %4476 = vmatprep.subr.bf16.mxu0 0
  %4477 = vmatpush2.bf16.msra.mxu0 %v4363
  %4478 = vmatprep.subr.bf16.mxu0 0
  %4479 = vmatpush2.bf16.msra.mxu0 %v4360
  %4480 = vmatprep.subr.bf16.mxu0 0
  %4481 = vmatpush2.bf16.msra.mxu0 %v4357
  %4482 = vmatprep.subr.bf16.mxu0 0
  %4483 = vmatpush2.bf16.msra.mxu0 %v4354
  %4484 = vmatprep.subr.bf16.mxu0 0
  %4485 = vmatpush2.bf16.msra.mxu0 %v4351
  %4486 = vmatprep.subr.bf16.mxu0 0
  %4487 = vmatpush2.bf16.msra.mxu0 %v4348
  %4488 = vmatprep.subr.bf16.mxu0 0
  %4489 = vmatpush2.bf16.msra.mxu0 %v4345
  %4490 = vmatprep.mubr.bf16.mxu0 %v4156
  %4491 = vmatmul.mubr.bf16.gmra.mxu0 %v4155
  %v4492 = vpop.f32.mrf.mxu0
  %v4493 = vadd.f32 0.0, %v4492
  %v4494 = vpop.f32.mrf.mxu0
  %v4495 = vpop.f32.mrf.mxu0
  %v4496 = vadd.f32 0.0, %v4495
  %v4497 = vpop.f32.mrf.mxu0
  %4498 = vdwg.mxu0
  %v4499 = vmax.f32 %v4450, 0.0
  %v4500 = vmax.f32 %v4452, 0.0
  %v4501 = vmax.f32 %v4493, 0.0
  %v4502 = vmax.f32 %v4454, 0.0
  %v4503 = vmax.f32 %v4456, 0.0
  %v4504 = vmax.f32 %v4496, 0.0
  %v4505 = vpack.c.bf16 %v4502, %v4499
  %v4506 = vpack.c.bf16 %v4503, %v4500
  %v4507 = vpack.c.bf16 %v4504, %v4501
  %v4508 = vld [vmem:[%s2] sm:$0xf]
  %v4509 = vld [vmem:[%s2 + $0x4] sm:$0xf]
  %v4510 = vld [vmem:[%s2 + $0x8] sm:$0xf]
  %v4511 = vld [vmem:[%s2 + $0xc] sm:$0xf]
  %v4512 = vld [vmem:[%s2 + $0x10] sm:$0xf]
  %v4513 = vld [vmem:[%s2 + $0x14] sm:$0xf]
  %v4514 = vld [vmem:[%s2 + $0x18] sm:$0xf]
  %v4515 = vld [vmem:[%s2 + $0x1c] sm:$0xf]
  %v4516 = vld [vmem:[%s2 + $0x20] sm:$0xf]
  %v4517 = vld [vmem:[%s2 + $0x24] sm:$0xf]
  %v4518 = vld [vmem:[%s2 + $0x28] sm:$0xf]
  %v4519 = vld [vmem:[%s2 + $0x2c] sm:$0xf]
  %v4520 = vld [vmem:[%s2 + $0x30] sm:$0xf]
  %v4521 = vld [vmem:[%s2 + $0x34] sm:$0xf]
  %v4522 = vld [vmem:[%s2 + $0x38] sm:$0xf]
  %v4523 = vld [vmem:[%s2 + $0x3c] sm:$0xf]
  %v4524 = vld [vmem:[%s2 + $0x40] sm:$0xf]
  %v4525 = vld [vmem:[%s2 + $0x44] sm:$0xf]
  %v4526 = vld [vmem:[%s2 + $0x48] sm:$0xf]
  %v4527 = vld [vmem:[%s2 + $0x4c] sm:$0xf]
  %v4528 = vld [vmem:[%s2 + $0x50] sm:$0xf]
  %v4529 = vld [vmem:[%s2 + $0x54] sm:$0xf]
  %v4530 = vld [vmem:[%s2 + $0x58] sm:$0xf]
  %v4531 = vld [vmem:[%s2 + $0x5c] sm:$0xf]
  %v4532 = vld [vmem:[%s2 + $0x60] sm:$0xf]
  %v4533 = vld [vmem:[%s2 + $0x64] sm:$0xf]
  %v4534 = vld [vmem:[%s2 + $0x68] sm:$0xf]
  %v4535 = vld [vmem:[%s2 + $0x6c] sm:$0xf]
  %v4536 = vld [vmem:[%s2 + $0x70] sm:$0xf]
  %v4537 = vld [vmem:[%s2 + $0x74] sm:$0xf]
  %v4538 = vld [vmem:[%s2 + $0x78] sm:$0xf]
  %v4539 = vld [vmem:[%s2 + $0x7c] sm:$0xf]
  %v4540 = vld [vmem:[%s2 + $0x80] sm:$0xf]
  %v4541 = vld [vmem:[%s2 + $0x84] sm:$0xf]
  %v4542 = vld [vmem:[%s2 + $0x88] sm:$0xf]
  %v4543 = vld [vmem:[%s2 + $0x8c] sm:$0xf]
  %v4544 = vld [vmem:[%s2 + $0x90] sm:$0x1]
  %v4582 = vunpack.c.l.b16 %v4508
  %v4583 = vunpack.c.l.b16 %v4509
  %v4584 = vunpack.c.l.b16 %v4510
  %v4585 = vunpack.c.l.b16 %v4511
  %v4586 = vunpack.c.l.b16 %v4512
  %v4587 = vunpack.c.l.b16 %v4513
  %v4588 = vunpack.c.l.b16 %v4514
  %v4589 = vunpack.c.l.b16 %v4515
  %v4590 = vunpack.c.l.b16 %v4516
  %v4591 = vunpack.c.l.b16 %v4517
  %v4592 = vunpack.c.l.b16 %v4518
  %v4593 = vunpack.c.l.b16 %v4519
  %v4594 = vunpack.c.l.b16 %v4520
  %v4595 = vunpack.c.l.b16 %v4521
  %v4596 = vunpack.c.l.b16 %v4522
  %v4597 = vunpack.c.l.b16 %v4523
  %v4598 = vunpack.c.l.b16 %v4524
  %v4599 = vunpack.c.l.b16 %v4525
  %v4600 = vunpack.c.l.b16 %v4526
  %v4601 = vunpack.c.l.b16 %v4527
  %v4602 = vunpack.c.l.b16 %v4528
  %v4603 = vunpack.c.l.b16 %v4529
  %v4604 = vunpack.c.l.b16 %v4530
  %v4605 = vunpack.c.l.b16 %v4531
  %v4606 = vunpack.c.l.b16 %v4532
  %v4607 = vunpack.c.l.b16 %v4533
  %v4608 = vunpack.c.l.b16 %v4534
  %v4609 = vunpack.c.l.b16 %v4535
  %v4610 = vunpack.c.l.b16 %v4536
  %v4611 = vunpack.c.l.b16 %v4537
  %v4612 = vunpack.c.l.b16 %v4538
  %v4613 = vunpack.c.l.b16 %v4539
  %v4614 = vunpack.c.l.b16 %v4540
  %v4615 = vunpack.c.l.b16 %v4541
  %v4616 = vunpack.c.l.b16 %v4542
  %v4617 = vunpack.c.l.b16 %v4543
  %v4618 = vunpack.c.l.b16 %v4544
  %v4619 = vpack.c.b16 %v4583, %v4582
  %v4620 = vpack.c.b16 %v4585, %v4584
  %v4621 = vpack.c.b16 %v4587, %v4586
  %v4622 = vpack.c.b16 %v4589, %v4588
  %v4623 = vpack.c.b16 %v4591, %v4590
  %v4624 = vpack.c.b16 %v4593, %v4592
  %v4625 = vpack.c.b16 %v4595, %v4594
  %v4626 = vpack.c.b16 %v4597, %v4596
  %v4627 = vpack.c.b16 %v4599, %v4598
  %v4628 = vpack.c.b16 %v4601, %v4600
  %v4629 = vpack.c.b16 %v4603, %v4602
  %v4630 = vpack.c.b16 %v4605, %v4604
  %v4631 = vpack.c.b16 %v4607, %v4606
  %v4632 = vpack.c.b16 %v4609, %v4608
  %v4633 = vpack.c.b16 %v4611, %v4610
  %v4634 = vpack.c.b16 %v4613, %v4612
  %v4635 = vpack.c.b16 %v4615, %v4614
  %v4636 = vpack.c.b16 %v4617, %v4616
  %v4637 = vpack.c.b16 %v4618, %v4618
  %v4657 = vsel %vm594, %v4507, 0
  %v4660 = vand.u32 %v4637, %v600
  %4662 = vmatprep.subr.bf16.mxu0 0
  %4663 = vmatpush1.bf16.msra.mxu0 %v4626
  %4664 = vmatprep.subr.bf16.mxu0 0
  %4665 = vmatpush1.bf16.msra.mxu0 %v4625
  %4666 = vmatprep.subr.bf16.mxu0 0
  %4667 = vmatpush1.bf16.msra.mxu0 %v4624
  %4668 = vmatprep.subr.bf16.mxu0 0
  %4669 = vmatpush1.bf16.msra.mxu0 %v4623
  %4670 = vmatprep.subr.bf16.mxu0 0
  %4671 = vmatpush1.bf16.msra.mxu0 %v4622
  %4672 = vmatprep.subr.bf16.mxu0 0
  %4673 = vmatpush1.bf16.msra.mxu0 %v4621
  %4674 = vmatprep.subr.bf16.mxu0 0
  %4675 = vmatpush1.bf16.msra.mxu0 %v4620
  %4676 = vmatprep.subr.bf16.mxu0 0
  %4677 = vmatpush1.bf16.msra.mxu0 %v4619
  %4678 = vmatprep.subr.bf16.mxu0 0
  %4679 = vmatpush2.bf16.msra.mxu0 %v4634
  %4680 = vmatprep.subr.bf16.mxu0 0
  %4681 = vmatpush2.bf16.msra.mxu0 %v4633
  %4682 = vmatprep.subr.bf16.mxu0 0
  %4683 = vmatpush2.bf16.msra.mxu0 %v4632
  %4684 = vmatprep.subr.bf16.mxu0 0
  %4685 = vmatpush2.bf16.msra.mxu0 %v4631
  %4686 = vmatprep.subr.bf16.mxu0 0
  %4687 = vmatpush2.bf16.msra.mxu0 %v4630
  %4688 = vmatprep.subr.bf16.mxu0 0
  %4689 = vmatpush2.bf16.msra.mxu0 %v4629
  %4690 = vmatprep.subr.bf16.mxu0 0
  %4691 = vmatpush2.bf16.msra.mxu0 %v4628
  %4692 = vmatprep.subr.bf16.mxu0 0
  %4693 = vmatpush2.bf16.msra.mxu0 %v4627
  %4694 = vmatprep.mubr.bf16.mxu0 %v4506
  %4695 = vmatmul.mubr.bf16.gmra.mxu0 %v4505
  %v4696 = vpop.f32.mrf.mxu0
  %v4697 = vadd.f32 0.0, %v4696
  %v4698 = vpop.f32.mrf.mxu0
  %v4699 = vpop.f32.mrf.mxu0
  %v4700 = vadd.f32 0.0, %v4699
  %v4701 = vpop.f32.mrf.mxu0
  %4702 = vdwg.mxu0
  %4703 = vmatprep.subr.bf16.mxu0 0
  %4704 = vmatpush1.bf16.msra.mxu0 0
  %4705 = vmatprep.subr.bf16.mxu0 0
  %4706 = vmatpush1.bf16.msra.mxu0 0
  %4707 = vmatprep.subr.bf16.mxu0 0
  %4708 = vmatpush1.bf16.msra.mxu0 0
  %4709 = vmatprep.subr.bf16.mxu0 0
  %4710 = vmatpush1.bf16.msra.mxu0 0
  %4711 = vmatprep.subr.bf16.mxu0 0
  %4712 = vmatpush1.bf16.msra.mxu0 0
  %4713 = vmatprep.subr.bf16.mxu0 0
  %4714 = vmatpush1.bf16.msra.mxu0 %v4660
  %4715 = vmatprep.subr.bf16.mxu0 0
  %4716 = vmatpush1.bf16.msra.mxu0 %v4636
  %4717 = vmatprep.subr.bf16.mxu0 0
  %4718 = vmatpush1.bf16.msra.mxu0 %v4635
  %4719 = vmatprep.subr.bf16.mxu0 0
  %4720 = vmatpush2.bf16.msra.mxu0 0
  %4721 = vmatprep.subr.bf16.mxu0 0
  %4722 = vmatpush2.bf16.msra.mxu0 0
  %4723 = vmatprep.subr.bf16.mxu0 0
  %4724 = vmatpush2.bf16.msra.mxu0 0
  %4725 = vmatprep.subr.bf16.mxu0 0
  %4726 = vmatpush2.bf16.msra.mxu0 0
  %4727 = vmatprep.subr.bf16.mxu0 0
  %4728 = vmatpush2.bf16.msra.mxu0 0
  %4729 = vmatprep.subr.bf16.mxu0 0
  %4730 = vmatpush2.bf16.msra.mxu0 0
  %4731 = vmatprep.subr.bf16.mxu0 0
  %4732 = vmatpush2.bf16.msra.mxu0 0
  %4733 = vmatprep.subr.bf16.mxu0 0
  %4734 = vmatpush2.bf16.msra.mxu0 0
  %4735 = vmatprep.mubr.bf16.mxu0 0
  %4736 = vmatmul.mubr.bf16.gmra.mxu0 %v4657
  %v4737 = vpop.f32.mrf.mxu0
  %v4738 = vadd.f32 %v4697, %v4737
  %v4739 = vpop.f32.mrf.mxu0
  %v4740 = vpop.f32.mrf.mxu0
  %v4741 = vadd.f32 %v4700, %v4740
  %v4742 = vpop.f32.mrf.mxu0
  %4743 = vdwg.mxu0
  %v4744 = vmax.f32 %v4738, 0.0
  %v4745 = vmax.f32 %v4741, 0.0
  %v4746 = vpack.c.bf16 %v4745, %v4744
  %v4748 = vunpack.c.l.b16 %v4746
  %v4749 = vunpack.c.h.b16 %v4746
  %v4750 = vpack.c.b16 %v4748, %v4748
  %v4751 = vpack.c.b16 %v4749, %v4749
  %4754 = vst.msk [vmem:[#allocation2 + $0xc] sm:$0xf] %vm696, %v4750
  %4755 = vst.msk [vmem:[#allocation2 + $0x20] sm:$0xf] %vm696, %v4751
  %s4756 = scalar_lea.vmem %s0, 112
  %v4757 = vld [vmem:[%s4756] sm:$0xff]
  %v4758 = vld [vmem:[%s4756 + $0x8] sm:$0xff]
  %v4759 = vld [vmem:[%s1] sm:$0xff]
  %v4760 = vld [vmem:[%s1 + $0x8] sm:$0xf]
  %v4761 = vld [vmem:[%s1 + $0xc] sm:$0xff]
  %v4762 = vld [vmem:[%s1 + $0x14] sm:$0xf]
  %v4763 = vld [vmem:[%s1 + $0x18] sm:$0xff]
  %v4764 = vld [vmem:[%s1 + $0x20] sm:$0xf]
  %v4765 = vld [vmem:[%s1 + $0x24] sm:$0xff]
  %v4766 = vld [vmem:[%s1 + $0x2c] sm:$0xf]
  %v4767 = vld [vmem:[%s1 + $0x30] sm:$0xff]
  %v4768 = vld [vmem:[%s1 + $0x38] sm:$0xf]
  %v4769 = vld [vmem:[%s1 + $0x3c] sm:$0xff]
  %v4770 = vld [vmem:[%s1 + $0x44] sm:$0xf]
  %v4771 = vld [vmem:[%s1 + $0x48] sm:$0xff]
  %v4772 = vld [vmem:[%s1 + $0x50] sm:$0xf]
  %v4773 = vld [vmem:[%s1 + $0x54] sm:$0xff]
  %v4774 = vld [vmem:[%s1 + $0x5c] sm:$0xf]
  %v4775 = vld [vmem:[%s1 + $0x60] sm:$0xff]
  %v4776 = vld [vmem:[%s1 + $0x68] sm:$0xf]
  %v4777 = vld [vmem:[%s1 + $0x6c] sm:$0xff]
  %v4778 = vld [vmem:[%s1 + $0x74] sm:$0xf]
  %v4779 = vld [vmem:[%s1 + $0x78] sm:$0xff]
  %v4780 = vld [vmem:[%s1 + $0x80] sm:$0xf]
  %v4781 = vld [vmem:[%s1 + $0x84] sm:$0xff]
  %v4782 = vld [vmem:[%s1 + $0x8c] sm:$0xf]
  %v4783 = vld [vmem:[%s1 + $0x90] sm:$0xff]
  %v4784 = vld [vmem:[%s1 + $0x98] sm:$0xf]
  %v4785 = vld [vmem:[%s1 + $0x9c] sm:$0xff]
  %v4786 = vld [vmem:[%s1 + $0xa4] sm:$0xf]
  %v4787 = vld [vmem:[%s1 + $0xa8] sm:$0xff]
  %v4788 = vld [vmem:[%s1 + $0xb0] sm:$0xf]
  %v4789 = vld [vmem:[%s1 + $0xb4] sm:$0xff]
  %v4790 = vld [vmem:[%s1 + $0xbc] sm:$0xf]
  %v4791 = vld [vmem:[%s1 + $0xc0] sm:$0xff]
  %v4792 = vld [vmem:[%s1 + $0xc8] sm:$0xf]
  %v4793 = vld [vmem:[%s1 + $0xcc] sm:$0xff]
  %v4794 = vld [vmem:[%s1 + $0xd4] sm:$0xf]
  %v4795 = vld [vmem:[%s1 + $0xd8] sm:$0xff]
  %v4796 = vld [vmem:[%s1 + $0xe0] sm:$0xf]
  %v4797 = vld [vmem:[%s1 + $0xe4] sm:$0xff]
  %v4798 = vld [vmem:[%s1 + $0xec] sm:$0xf]
  %v4799 = vld [vmem:[%s1 + $0xf0] sm:$0xff]
  %v4800 = vld [vmem:[%s1 + $0xf8] sm:$0xf]
  %v4801 = vld [vmem:[%s1 + $0xfc] sm:$0xff]
  %v4802 = vld [vmem:[%s1 + $0x104] sm:$0xf]
  %v4803 = vld [vmem:[%s1 + $0x108] sm:$0xff]
  %v4804 = vld [vmem:[%s1 + $0x110] sm:$0xf]
  %v4805 = vld [vmem:[%s1 + $0x114] sm:$0xff]
  %v4806 = vld [vmem:[%s1 + $0x11c] sm:$0xf]
  %v4807 = vld [vmem:[%s1 + $0x120] sm:$0xff]
  %v4808 = vld [vmem:[%s1 + $0x128] sm:$0xf]
  %v4809 = vld [vmem:[%s1 + $0x12c] sm:$0xff]
  %v4810 = vld [vmem:[%s1 + $0x134] sm:$0xf]
  %v4811 = vld [vmem:[%s1 + $0x138] sm:$0xff]
  %v4812 = vld [vmem:[%s1 + $0x140] sm:$0xf]
  %v4813 = vld [vmem:[%s1 + $0x144] sm:$0xff]
  %v4814 = vld [vmem:[%s1 + $0x14c] sm:$0xf]
  %v4815 = vld [vmem:[%s1 + $0x150] sm:$0xff]
  %v4816 = vld [vmem:[%s1 + $0x158] sm:$0xf]
  %v4817 = vld [vmem:[%s1 + $0x15c] sm:$0xff]
  %v4818 = vld [vmem:[%s1 + $0x164] sm:$0xf]
  %v4819 = vld [vmem:[%s1 + $0x168] sm:$0xff]
  %v4820 = vld [vmem:[%s1 + $0x170] sm:$0xf]
  %v4821 = vld [vmem:[%s1 + $0x174] sm:$0xff]
  %v4822 = vld [vmem:[%s1 + $0x17c] sm:$0xf]
  %v4825 = vunpack.c.l.b16 %v4757
  %v4826 = vunpack.c.h.b16 %v4757
  %v4827 = vunpack.c.l.b16 %v4758
  %v4828 = vunpack.c.h.b16 %v4758
  %v4829 = vpack.c.b16 %v4827, %v4825
  %v4830 = vpack.c.b16 %v4828, %v4826
  %v4897 = vunpack.c.l.b16 %v4759
  %v4898 = vunpack.c.h.b16 %v4759
  %v4899 = vunpack.c.l.b16 %v4760
  %v4900 = vunpack.c.l.b16 %v4761
  %v4901 = vunpack.c.h.b16 %v4761
  %v4902 = vunpack.c.l.b16 %v4762
  %v4903 = vunpack.c.l.b16 %v4763
  %v4904 = vunpack.c.h.b16 %v4763
  %v4905 = vunpack.c.l.b16 %v4764
  %v4906 = vunpack.c.l.b16 %v4765
  %v4907 = vunpack.c.h.b16 %v4765
  %v4908 = vunpack.c.l.b16 %v4766
  %v4909 = vunpack.c.l.b16 %v4767
  %v4910 = vunpack.c.h.b16 %v4767
  %v4911 = vunpack.c.l.b16 %v4768
  %v4912 = vunpack.c.l.b16 %v4769
  %v4913 = vunpack.c.h.b16 %v4769
  %v4914 = vunpack.c.l.b16 %v4770
  %v4915 = vunpack.c.l.b16 %v4771
  %v4916 = vunpack.c.h.b16 %v4771
  %v4917 = vunpack.c.l.b16 %v4772
  %v4918 = vunpack.c.l.b16 %v4773
  %v4919 = vunpack.c.h.b16 %v4773
  %v4920 = vunpack.c.l.b16 %v4774
  %v4921 = vunpack.c.l.b16 %v4775
  %v4922 = vunpack.c.h.b16 %v4775
  %v4923 = vunpack.c.l.b16 %v4776
  %v4924 = vunpack.c.l.b16 %v4777
  %v4925 = vunpack.c.h.b16 %v4777
  %v4926 = vunpack.c.l.b16 %v4778
  %v4927 = vunpack.c.l.b16 %v4779
  %v4928 = vunpack.c.h.b16 %v4779
  %v4929 = vunpack.c.l.b16 %v4780
  %v4930 = vunpack.c.l.b16 %v4781
  %v4931 = vunpack.c.h.b16 %v4781
  %v4932 = vunpack.c.l.b16 %v4782
  %v4933 = vunpack.c.l.b16 %v4783
  %v4934 = vunpack.c.h.b16 %v4783
  %v4935 = vunpack.c.l.b16 %v4784
  %v4936 = vunpack.c.l.b16 %v4785
  %v4937 = vunpack.c.h.b16 %v4785
  %v4938 = vunpack.c.l.b16 %v4786
  %v4939 = vunpack.c.l.b16 %v4787
  %v4940 = vunpack.c.h.b16 %v4787
  %v4941 = vunpack.c.l.b16 %v4788
  %v4942 = vunpack.c.l.b16 %v4789
  %v4943 = vunpack.c.h.b16 %v4789
  %v4944 = vunpack.c.l.b16 %v4790
  %v4945 = vunpack.c.l.b16 %v4791
  %v4946 = vunpack.c.h.b16 %v4791
  %v4947 = vunpack.c.l.b16 %v4792
  %v4948 = vunpack.c.l.b16 %v4793
  %v4949 = vunpack.c.h.b16 %v4793
  %v4950 = vunpack.c.l.b16 %v4794
  %v4951 = vunpack.c.l.b16 %v4795
  %v4952 = vunpack.c.h.b16 %v4795
  %v4953 = vunpack.c.l.b16 %v4796
  %v4954 = vunpack.c.l.b16 %v4797
  %v4955 = vunpack.c.h.b16 %v4797
  %v4956 = vunpack.c.l.b16 %v4798
  %v4957 = vunpack.c.l.b16 %v4799
  %v4958 = vunpack.c.h.b16 %v4799
  %v4959 = vunpack.c.l.b16 %v4800
  %v4960 = vunpack.c.l.b16 %v4801
  %v4961 = vunpack.c.h.b16 %v4801
  %v4962 = vunpack.c.l.b16 %v4802
  %v4963 = vunpack.c.l.b16 %v4803
  %v4964 = vunpack.c.h.b16 %v4803
  %v4965 = vunpack.c.l.b16 %v4804
  %v4966 = vunpack.c.l.b16 %v4805
  %v4967 = vunpack.c.h.b16 %v4805
  %v4968 = vunpack.c.l.b16 %v4806
  %v4969 = vunpack.c.l.b16 %v4807
  %v4970 = vunpack.c.h.b16 %v4807
  %v4971 = vunpack.c.l.b16 %v4808
  %v4972 = vunpack.c.l.b16 %v4809
  %v4973 = vunpack.c.h.b16 %v4809
  %v4974 = vunpack.c.l.b16 %v4810
  %v4975 = vunpack.c.l.b16 %v4811
  %v4976 = vunpack.c.h.b16 %v4811
  %v4977 = vunpack.c.l.b16 %v4812
  %v4978 = vunpack.c.l.b16 %v4813
  %v4979 = vunpack.c.h.b16 %v4813
  %v4980 = vunpack.c.l.b16 %v4814
  %v4981 = vunpack.c.l.b16 %v4815
  %v4982 = vunpack.c.h.b16 %v4815
  %v4983 = vunpack.c.l.b16 %v4816
  %v4984 = vunpack.c.l.b16 %v4817
  %v4985 = vunpack.c.h.b16 %v4817
  %v4986 = vunpack.c.l.b16 %v4818
  %v4987 = vunpack.c.l.b16 %v4819
  %v4988 = vunpack.c.h.b16 %v4819
  %v4989 = vunpack.c.l.b16 %v4820
  %v4990 = vunpack.c.l.b16 %v4821
  %v4991 = vunpack.c.h.b16 %v4821
  %v4992 = vunpack.c.l.b16 %v4822
  %v4993 = vpack.c.b16 %v4900, %v4897
  %v4994 = vpack.c.b16 %v4901, %v4898
  %v4995 = vpack.c.b16 %v4902, %v4899
  %v4996 = vpack.c.b16 %v4906, %v4903
  %v4997 = vpack.c.b16 %v4907, %v4904
  %v4998 = vpack.c.b16 %v4908, %v4905
  %v4999 = vpack.c.b16 %v4912, %v4909
  %v5000 = vpack.c.b16 %v4913, %v4910
  %v5001 = vpack.c.b16 %v4914, %v4911
  %v5002 = vpack.c.b16 %v4918, %v4915
  %v5003 = vpack.c.b16 %v4919, %v4916
  %v5004 = vpack.c.b16 %v4920, %v4917
  %v5005 = vpack.c.b16 %v4924, %v4921
  %v5006 = vpack.c.b16 %v4925, %v4922
  %v5007 = vpack.c.b16 %v4926, %v4923
  %v5008 = vpack.c.b16 %v4930, %v4927
  %v5009 = vpack.c.b16 %v4931, %v4928
  %v5010 = vpack.c.b16 %v4932, %v4929
  %v5011 = vpack.c.b16 %v4936, %v4933
  %v5012 = vpack.c.b16 %v4937, %v4934
  %v5013 = vpack.c.b16 %v4938, %v4935
  %v5014 = vpack.c.b16 %v4942, %v4939
  %v5015 = vpack.c.b16 %v4943, %v4940
  %v5016 = vpack.c.b16 %v4944, %v4941
  %v5017 = vpack.c.b16 %v4948, %v4945
  %v5018 = vpack.c.b16 %v4949, %v4946
  %v5019 = vpack.c.b16 %v4950, %v4947
  %v5020 = vpack.c.b16 %v4954, %v4951
  %v5021 = vpack.c.b16 %v4955, %v4952
  %v5022 = vpack.c.b16 %v4956, %v4953
  %v5023 = vpack.c.b16 %v4960, %v4957
  %v5024 = vpack.c.b16 %v4961, %v4958
  %v5025 = vpack.c.b16 %v4962, %v4959
  %v5026 = vpack.c.b16 %v4966, %v4963
  %v5027 = vpack.c.b16 %v4967, %v4964
  %v5028 = vpack.c.b16 %v4968, %v4965
  %v5029 = vpack.c.b16 %v4972, %v4969
  %v5030 = vpack.c.b16 %v4973, %v4970
  %v5031 = vpack.c.b16 %v4974, %v4971
  %v5032 = vpack.c.b16 %v4978, %v4975
  %v5033 = vpack.c.b16 %v4979, %v4976
  %v5034 = vpack.c.b16 %v4980, %v4977
  %v5035 = vpack.c.b16 %v4984, %v4981
  %v5036 = vpack.c.b16 %v4985, %v4982
  %v5037 = vpack.c.b16 %v4986, %v4983
  %v5038 = vpack.c.b16 %v4990, %v4987
  %v5039 = vpack.c.b16 %v4991, %v4988
  %v5040 = vpack.c.b16 %v4992, %v4989
  %5089 = vmatprep.subr.bf16.mxu0 %v5015
  %5090 = vmatpush1.bf16.msra.mxu0 %v5014
  %5091 = vmatprep.subr.bf16.mxu0 %v5012
  %5092 = vmatpush1.bf16.msra.mxu0 %v5011
  %5093 = vmatprep.subr.bf16.mxu0 %v5009
  %5094 = vmatpush1.bf16.msra.mxu0 %v5008
  %5095 = vmatprep.subr.bf16.mxu0 %v5006
  %5096 = vmatpush1.bf16.msra.mxu0 %v5005
  %5097 = vmatprep.subr.bf16.mxu0 %v5003
  %5098 = vmatpush1.bf16.msra.mxu0 %v5002
  %5099 = vmatprep.subr.bf16.mxu0 %v5000
  %5100 = vmatpush1.bf16.msra.mxu0 %v4999
  %5101 = vmatprep.subr.bf16.mxu0 %v4997
  %5102 = vmatpush1.bf16.msra.mxu0 %v4996
  %5103 = vmatprep.subr.bf16.mxu0 %v4994
  %5104 = vmatpush1.bf16.msra.mxu0 %v4993
  %5105 = vmatprep.subr.bf16.mxu0 %v5039
  %5106 = vmatpush2.bf16.msra.mxu0 %v5038
  %5107 = vmatprep.subr.bf16.mxu0 %v5036
  %5108 = vmatpush2.bf16.msra.mxu0 %v5035
  %5109 = vmatprep.subr.bf16.mxu0 %v5033
  %5110 = vmatpush2.bf16.msra.mxu0 %v5032
  %5111 = vmatprep.subr.bf16.mxu0 %v5030
  %5112 = vmatpush2.bf16.msra.mxu0 %v5029
  %5113 = vmatprep.subr.bf16.mxu0 %v5027
  %5114 = vmatpush2.bf16.msra.mxu0 %v5026
  %5115 = vmatprep.subr.bf16.mxu0 %v5024
  %5116 = vmatpush2.bf16.msra.mxu0 %v5023
  %5117 = vmatprep.subr.bf16.mxu0 %v5021
  %5118 = vmatpush2.bf16.msra.mxu0 %v5020
  %5119 = vmatprep.subr.bf16.mxu0 %v5018
  %5120 = vmatpush2.bf16.msra.mxu0 %v5017
  %5121 = vmatprep.mubr.bf16.mxu0 %v4830
  %5122 = vmatmul.mubr.bf16.gmra.mxu0 %v4829
  %v5123 = vpop.f32.mrf.mxu0
  %v5124 = vadd.f32 0.0, %v5123
  %v5125 = vpop.f32.mrf.mxu0
  %v5126 = vadd.f32 0.0, %v5125
  %v5127 = vpop.f32.mrf.mxu0
  %v5128 = vadd.f32 0.0, %v5127
  %v5129 = vpop.f32.mrf.mxu0
  %v5130 = vadd.f32 0.0, %v5129
  %5131 = vdwg.mxu0
  %5132 = vmatprep.subr.bf16.mxu0 0
  %5133 = vmatpush1.bf16.msra.mxu0 %v5016
  %5134 = vmatprep.subr.bf16.mxu0 0
  %5135 = vmatpush1.bf16.msra.mxu0 %v5013
  %5136 = vmatprep.subr.bf16.mxu0 0
  %5137 = vmatpush1.bf16.msra.mxu0 %v5010
  %5138 = vmatprep.subr.bf16.mxu0 0
  %5139 = vmatpush1.bf16.msra.mxu0 %v5007
  %5140 = vmatprep.subr.bf16.mxu0 0
  %5141 = vmatpush1.bf16.msra.mxu0 %v5004
  %5142 = vmatprep.subr.bf16.mxu0 0
  %5143 = vmatpush1.bf16.msra.mxu0 %v5001
  %5144 = vmatprep.subr.bf16.mxu0 0
  %5145 = vmatpush1.bf16.msra.mxu0 %v4998
  %5146 = vmatprep.subr.bf16.mxu0 0
  %5147 = vmatpush1.bf16.msra.mxu0 %v4995
  %5148 = vmatprep.subr.bf16.mxu0 0
  %5149 = vmatpush2.bf16.msra.mxu0 %v5040
  %5150 = vmatprep.subr.bf16.mxu0 0
  %5151 = vmatpush2.bf16.msra.mxu0 %v5037
  %5152 = vmatprep.subr.bf16.mxu0 0
  %5153 = vmatpush2.bf16.msra.mxu0 %v5034
  %5154 = vmatprep.subr.bf16.mxu0 0
  %5155 = vmatpush2.bf16.msra.mxu0 %v5031
  %5156 = vmatprep.subr.bf16.mxu0 0
  %5157 = vmatpush2.bf16.msra.mxu0 %v5028
  %5158 = vmatprep.subr.bf16.mxu0 0
  %5159 = vmatpush2.bf16.msra.mxu0 %v5025
  %5160 = vmatprep.subr.bf16.mxu0 0
  %5161 = vmatpush2.bf16.msra.mxu0 %v5022
  %5162 = vmatprep.subr.bf16.mxu0 0
  %5163 = vmatpush2.bf16.msra.mxu0 %v5019
  %5164 = vmatprep.mubr.bf16.mxu0 %v4830
  %5165 = vmatmul.mubr.bf16.gmra.mxu0 %v4829
  %v5166 = vpop.f32.mrf.mxu0
  %v5167 = vadd.f32 0.0, %v5166
  %v5168 = vpop.f32.mrf.mxu0
  %v5169 = vpop.f32.mrf.mxu0
  %v5170 = vadd.f32 0.0, %v5169
  %v5171 = vpop.f32.mrf.mxu0
  %5172 = vdwg.mxu0
  %v5173 = vmax.f32 %v5124, 0.0
  %v5174 = vmax.f32 %v5126, 0.0
  %v5175 = vmax.f32 %v5167, 0.0
  %v5176 = vmax.f32 %v5128, 0.0
  %v5177 = vmax.f32 %v5130, 0.0
  %v5178 = vmax.f32 %v5170, 0.0
  %v5179 = vpack.c.bf16 %v5176, %v5173
  %v5180 = vpack.c.bf16 %v5177, %v5174
  %v5181 = vpack.c.bf16 %v5178, %v5175
  %v5182 = vld [vmem:[%s2] sm:$0xf]
  %v5183 = vld [vmem:[%s2 + $0x4] sm:$0xf]
  %v5184 = vld [vmem:[%s2 + $0x8] sm:$0xf]
  %v5185 = vld [vmem:[%s2 + $0xc] sm:$0xf]
  %v5186 = vld [vmem:[%s2 + $0x10] sm:$0xf]
  %v5187 = vld [vmem:[%s2 + $0x14] sm:$0xf]
  %v5188 = vld [vmem:[%s2 + $0x18] sm:$0xf]
  %v5189 = vld [vmem:[%s2 + $0x1c] sm:$0xf]
  %v5190 = vld [vmem:[%s2 + $0x20] sm:$0xf]
  %v5191 = vld [vmem:[%s2 + $0x24] sm:$0xf]
  %v5192 = vld [vmem:[%s2 + $0x28] sm:$0xf]
  %v5193 = vld [vmem:[%s2 + $0x2c] sm:$0xf]
  %v5194 = vld [vmem:[%s2 + $0x30] sm:$0xf]
  %v5195 = vld [vmem:[%s2 + $0x34] sm:$0xf]
  %v5196 = vld [vmem:[%s2 + $0x38] sm:$0xf]
  %v5197 = vld [vmem:[%s2 + $0x3c] sm:$0xf]
  %v5198 = vld [vmem:[%s2 + $0x40] sm:$0xf]
  %v5199 = vld [vmem:[%s2 + $0x44] sm:$0xf]
  %v5200 = vld [vmem:[%s2 + $0x48] sm:$0xf]
  %v5201 = vld [vmem:[%s2 + $0x4c] sm:$0xf]
  %v5202 = vld [vmem:[%s2 + $0x50] sm:$0xf]
  %v5203 = vld [vmem:[%s2 + $0x54] sm:$0xf]
  %v5204 = vld [vmem:[%s2 + $0x58] sm:$0xf]
  %v5205 = vld [vmem:[%s2 + $0x5c] sm:$0xf]
  %v5206 = vld [vmem:[%s2 + $0x60] sm:$0xf]
  %v5207 = vld [vmem:[%s2 + $0x64] sm:$0xf]
  %v5208 = vld [vmem:[%s2 + $0x68] sm:$0xf]
  %v5209 = vld [vmem:[%s2 + $0x6c] sm:$0xf]
  %v5210 = vld [vmem:[%s2 + $0x70] sm:$0xf]
  %v5211 = vld [vmem:[%s2 + $0x74] sm:$0xf]
  %v5212 = vld [vmem:[%s2 + $0x78] sm:$0xf]
  %v5213 = vld [vmem:[%s2 + $0x7c] sm:$0xf]
  %v5214 = vld [vmem:[%s2 + $0x80] sm:$0xf]
  %v5215 = vld [vmem:[%s2 + $0x84] sm:$0xf]
  %v5216 = vld [vmem:[%s2 + $0x88] sm:$0xf]
  %v5217 = vld [vmem:[%s2 + $0x8c] sm:$0xf]
  %v5218 = vld [vmem:[%s2 + $0x90] sm:$0x1]
  %v5256 = vunpack.c.l.b16 %v5182
  %v5257 = vunpack.c.l.b16 %v5183
  %v5258 = vunpack.c.l.b16 %v5184
  %v5259 = vunpack.c.l.b16 %v5185
  %v5260 = vunpack.c.l.b16 %v5186
  %v5261 = vunpack.c.l.b16 %v5187
  %v5262 = vunpack.c.l.b16 %v5188
  %v5263 = vunpack.c.l.b16 %v5189
  %v5264 = vunpack.c.l.b16 %v5190
  %v5265 = vunpack.c.l.b16 %v5191
  %v5266 = vunpack.c.l.b16 %v5192
  %v5267 = vunpack.c.l.b16 %v5193
  %v5268 = vunpack.c.l.b16 %v5194
  %v5269 = vunpack.c.l.b16 %v5195
  %v5270 = vunpack.c.l.b16 %v5196
  %v5271 = vunpack.c.l.b16 %v5197
  %v5272 = vunpack.c.l.b16 %v5198
  %v5273 = vunpack.c.l.b16 %v5199
  %v5274 = vunpack.c.l.b16 %v5200
  %v5275 = vunpack.c.l.b16 %v5201
  %v5276 = vunpack.c.l.b16 %v5202
  %v5277 = vunpack.c.l.b16 %v5203
  %v5278 = vunpack.c.l.b16 %v5204
  %v5279 = vunpack.c.l.b16 %v5205
  %v5280 = vunpack.c.l.b16 %v5206
  %v5281 = vunpack.c.l.b16 %v5207
  %v5282 = vunpack.c.l.b16 %v5208
  %v5283 = vunpack.c.l.b16 %v5209
  %v5284 = vunpack.c.l.b16 %v5210
  %v5285 = vunpack.c.l.b16 %v5211
  %v5286 = vunpack.c.l.b16 %v5212
  %v5287 = vunpack.c.l.b16 %v5213
  %v5288 = vunpack.c.l.b16 %v5214
  %v5289 = vunpack.c.l.b16 %v5215
  %v5290 = vunpack.c.l.b16 %v5216
  %v5291 = vunpack.c.l.b16 %v5217
  %v5292 = vunpack.c.l.b16 %v5218
  %v5293 = vpack.c.b16 %v5257, %v5256
  %v5294 = vpack.c.b16 %v5259, %v5258
  %v5295 = vpack.c.b16 %v5261, %v5260
  %v5296 = vpack.c.b16 %v5263, %v5262
  %v5297 = vpack.c.b16 %v5265, %v5264
  %v5298 = vpack.c.b16 %v5267, %v5266
  %v5299 = vpack.c.b16 %v5269, %v5268
  %v5300 = vpack.c.b16 %v5271, %v5270
  %v5301 = vpack.c.b16 %v5273, %v5272
  %v5302 = vpack.c.b16 %v5275, %v5274
  %v5303 = vpack.c.b16 %v5277, %v5276
  %v5304 = vpack.c.b16 %v5279, %v5278
  %v5305 = vpack.c.b16 %v5281, %v5280
  %v5306 = vpack.c.b16 %v5283, %v5282
  %v5307 = vpack.c.b16 %v5285, %v5284
  %v5308 = vpack.c.b16 %v5287, %v5286
  %v5309 = vpack.c.b16 %v5289, %v5288
  %v5310 = vpack.c.b16 %v5291, %v5290
  %v5311 = vpack.c.b16 %v5292, %v5292
  %v5331 = vsel %vm594, %v5181, 0
  %v5334 = vand.u32 %v5311, %v600
  %5336 = vmatprep.subr.bf16.mxu0 0
  %5337 = vmatpush1.bf16.msra.mxu0 %v5300
  %5338 = vmatprep.subr.bf16.mxu0 0
  %5339 = vmatpush1.bf16.msra.mxu0 %v5299
  %5340 = vmatprep.subr.bf16.mxu0 0
  %5341 = vmatpush1.bf16.msra.mxu0 %v5298
  %5342 = vmatprep.subr.bf16.mxu0 0
  %5343 = vmatpush1.bf16.msra.mxu0 %v5297
  %5344 = vmatprep.subr.bf16.mxu0 0
  %5345 = vmatpush1.bf16.msra.mxu0 %v5296
  %5346 = vmatprep.subr.bf16.mxu0 0
  %5347 = vmatpush1.bf16.msra.mxu0 %v5295
  %5348 = vmatprep.subr.bf16.mxu0 0
  %5349 = vmatpush1.bf16.msra.mxu0 %v5294
  %5350 = vmatprep.subr.bf16.mxu0 0
  %5351 = vmatpush1.bf16.msra.mxu0 %v5293
  %5352 = vmatprep.subr.bf16.mxu0 0
  %5353 = vmatpush2.bf16.msra.mxu0 %v5308
  %5354 = vmatprep.subr.bf16.mxu0 0
  %5355 = vmatpush2.bf16.msra.mxu0 %v5307
  %5356 = vmatprep.subr.bf16.mxu0 0
  %5357 = vmatpush2.bf16.msra.mxu0 %v5306
  %5358 = vmatprep.subr.bf16.mxu0 0
  %5359 = vmatpush2.bf16.msra.mxu0 %v5305
  %5360 = vmatprep.subr.bf16.mxu0 0
  %5361 = vmatpush2.bf16.msra.mxu0 %v5304
  %5362 = vmatprep.subr.bf16.mxu0 0
  %5363 = vmatpush2.bf16.msra.mxu0 %v5303
  %5364 = vmatprep.subr.bf16.mxu0 0
  %5365 = vmatpush2.bf16.msra.mxu0 %v5302
  %5366 = vmatprep.subr.bf16.mxu0 0
  %5367 = vmatpush2.bf16.msra.mxu0 %v5301
  %5368 = vmatprep.mubr.bf16.mxu0 %v5180
  %5369 = vmatmul.mubr.bf16.gmra.mxu0 %v5179
  %v5370 = vpop.f32.mrf.mxu0
  %v5371 = vadd.f32 0.0, %v5370
  %v5372 = vpop.f32.mrf.mxu0
  %v5373 = vpop.f32.mrf.mxu0
  %v5374 = vadd.f32 0.0, %v5373
  %v5375 = vpop.f32.mrf.mxu0
  %5376 = vdwg.mxu0
  %5377 = vmatprep.subr.bf16.mxu0 0
  %5378 = vmatpush1.bf16.msra.mxu0 0
  %5379 = vmatprep.subr.bf16.mxu0 0
  %5380 = vmatpush1.bf16.msra.mxu0 0
  %5381 = vmatprep.subr.bf16.mxu0 0
  %5382 = vmatpush1.bf16.msra.mxu0 0
  %5383 = vmatprep.subr.bf16.mxu0 0
  %5384 = vmatpush1.bf16.msra.mxu0 0
  %5385 = vmatprep.subr.bf16.mxu0 0
  %5386 = vmatpush1.bf16.msra.mxu0 0
  %5387 = vmatprep.subr.bf16.mxu0 0
  %5388 = vmatpush1.bf16.msra.mxu0 %v5334
  %5389 = vmatprep.subr.bf16.mxu0 0
  %5390 = vmatpush1.bf16.msra.mxu0 %v5310
  %5391 = vmatprep.subr.bf16.mxu0 0
  %5392 = vmatpush1.bf16.msra.mxu0 %v5309
  %5393 = vmatprep.subr.bf16.mxu0 0
  %5394 = vmatpush2.bf16.msra.mxu0 0
  %5395 = vmatprep.subr.bf16.mxu0 0
  %5396 = vmatpush2.bf16.msra.mxu0 0
  %5397 = vmatprep.subr.bf16.mxu0 0
  %5398 = vmatpush2.bf16.msra.mxu0 0
  %5399 = vmatprep.subr.bf16.mxu0 0
  %5400 = vmatpush2.bf16.msra.mxu0 0
  %5401 = vmatprep.subr.bf16.mxu0 0
  %5402 = vmatpush2.bf16.msra.mxu0 0
  %5403 = vmatprep.subr.bf16.mxu0 0
  %5404 = vmatpush2.bf16.msra.mxu0 0
  %5405 = vmatprep.subr.bf16.mxu0 0
  %5406 = vmatpush2.bf16.msra.mxu0 0
  %5407 = vmatprep.subr.bf16.mxu0 0
  %5408 = vmatpush2.bf16.msra.mxu0 0
  %5409 = vmatprep.mubr.bf16.mxu0 0
  %5410 = vmatmul.mubr.bf16.gmra.mxu0 %v5331
  %v5411 = vpop.f32.mrf.mxu0
  %v5412 = vadd.f32 %v5371, %v5411
  %v5413 = vpop.f32.mrf.mxu0
  %v5414 = vpop.f32.mrf.mxu0
  %v5415 = vadd.f32 %v5374, %v5414
  %v5416 = vpop.f32.mrf.mxu0
  %5417 = vdwg.mxu0
  %v5418 = vmax.f32 %v5412, 0.0
  %v5419 = vmax.f32 %v5415, 0.0
  %v5420 = vpack.c.bf16 %v5419, %v5418
  %v5422 = vunpack.c.l.b16 %v5420
  %v5423 = vunpack.c.h.b16 %v5420
  %v5424 = vpack.c.b16 %v5422, %v5422
  %v5425 = vpack.c.b16 %v5423, %v5423
  %5426 = vrot.lane.b32.xlu0 %v5424, 64
  %v5427 = vpop.permute.xlu0 %5426
  %5428 = vrot.lane.b32.xlu0 %v5425, 64
  %v5429 = vpop.permute.xlu0 %5428
  %5432 = vst.msk [vmem:[#allocation2 + $0xc] sm:$0xf] %vm1375, %v5427
  %5433 = vst.msk [vmem:[#allocation2 + $0x20] sm:$0xf] %vm1375, %v5429
  %s5434 = scalar_lea.vmem %s0, 128
  %v5435 = vld [vmem:[%s5434] sm:$0xff]
  %v5436 = vld [vmem:[%s5434 + $0x8] sm:$0xff]
  %v5437 = vld [vmem:[%s1] sm:$0xff]
  %v5438 = vld [vmem:[%s1 + $0x8] sm:$0xf]
  %v5439 = vld [vmem:[%s1 + $0xc] sm:$0xff]
  %v5440 = vld [vmem:[%s1 + $0x14] sm:$0xf]
  %v5441 = vld [vmem:[%s1 + $0x18] sm:$0xff]
  %v5442 = vld [vmem:[%s1 + $0x20] sm:$0xf]
  %v5443 = vld [vmem:[%s1 + $0x24] sm:$0xff]
  %v5444 = vld [vmem:[%s1 + $0x2c] sm:$0xf]
  %v5445 = vld [vmem:[%s1 + $0x30] sm:$0xff]
  %v5446 = vld [vmem:[%s1 + $0x38] sm:$0xf]
  %v5447 = vld [vmem:[%s1 + $0x3c] sm:$0xff]
  %v5448 = vld [vmem:[%s1 + $0x44] sm:$0xf]
  %v5449 = vld [vmem:[%s1 + $0x48] sm:$0xff]
  %v5450 = vld [vmem:[%s1 + $0x50] sm:$0xf]
  %v5451 = vld [vmem:[%s1 + $0x54] sm:$0xff]
  %v5452 = vld [vmem:[%s1 + $0x5c] sm:$0xf]
  %v5453 = vld [vmem:[%s1 + $0x60] sm:$0xff]
  %v5454 = vld [vmem:[%s1 + $0x68] sm:$0xf]
  %v5455 = vld [vmem:[%s1 + $0x6c] sm:$0xff]
  %v5456 = vld [vmem:[%s1 + $0x74] sm:$0xf]
  %v5457 = vld [vmem:[%s1 + $0x78] sm:$0xff]
  %v5458 = vld [vmem:[%s1 + $0x80] sm:$0xf]
  %v5459 = vld [vmem:[%s1 + $0x84] sm:$0xff]
  %v5460 = vld [vmem:[%s1 + $0x8c] sm:$0xf]
  %v5461 = vld [vmem:[%s1 + $0x90] sm:$0xff]
  %v5462 = vld [vmem:[%s1 + $0x98] sm:$0xf]
  %v5463 = vld [vmem:[%s1 + $0x9c] sm:$0xff]
  %v5464 = vld [vmem:[%s1 + $0xa4] sm:$0xf]
  %v5465 = vld [vmem:[%s1 + $0xa8] sm:$0xff]
  %v5466 = vld [vmem:[%s1 + $0xb0] sm:$0xf]
  %v5467 = vld [vmem:[%s1 + $0xb4] sm:$0xff]
  %v5468 = vld [vmem:[%s1 + $0xbc] sm:$0xf]
  %v5469 = vld [vmem:[%s1 + $0xc0] sm:$0xff]
  %v5470 = vld [vmem:[%s1 + $0xc8] sm:$0xf]
  %v5471 = vld [vmem:[%s1 + $0xcc] sm:$0xff]
  %v5472 = vld [vmem:[%s1 + $0xd4] sm:$0xf]
  %v5473 = vld [vmem:[%s1 + $0xd8] sm:$0xff]
  %v5474 = vld [vmem:[%s1 + $0xe0] sm:$0xf]
  %v5475 = vld [vmem:[%s1 + $0xe4] sm:$0xff]
  %v5476 = vld [vmem:[%s1 + $0xec] sm:$0xf]
  %v5477 = vld [vmem:[%s1 + $0xf0] sm:$0xff]
  %v5478 = vld [vmem:[%s1 + $0xf8] sm:$0xf]
  %v5479 = vld [vmem:[%s1 + $0xfc] sm:$0xff]
  %v5480 = vld [vmem:[%s1 + $0x104] sm:$0xf]
  %v5481 = vld [vmem:[%s1 + $0x108] sm:$0xff]
  %v5482 = vld [vmem:[%s1 + $0x110] sm:$0xf]
  %v5483 = vld [vmem:[%s1 + $0x114] sm:$0xff]
  %v5484 = vld [vmem:[%s1 + $0x11c] sm:$0xf]
  %v5485 = vld [vmem:[%s1 + $0x120] sm:$0xff]
  %v5486 = vld [vmem:[%s1 + $0x128] sm:$0xf]
  %v5487 = vld [vmem:[%s1 + $0x12c] sm:$0xff]
  %v5488 = vld [vmem:[%s1 + $0x134] sm:$0xf]
  %v5489 = vld [vmem:[%s1 + $0x138] sm:$0xff]
  %v5490 = vld [vmem:[%s1 + $0x140] sm:$0xf]
  %v5491 = vld [vmem:[%s1 + $0x144] sm:$0xff]
  %v5492 = vld [vmem:[%s1 + $0x14c] sm:$0xf]
  %v5493 = vld [vmem:[%s1 + $0x150] sm:$0xff]
  %v5494 = vld [vmem:[%s1 + $0x158] sm:$0xf]
  %v5495 = vld [vmem:[%s1 + $0x15c] sm:$0xff]
  %v5496 = vld [vmem:[%s1 + $0x164] sm:$0xf]
  %v5497 = vld [vmem:[%s1 + $0x168] sm:$0xff]
  %v5498 = vld [vmem:[%s1 + $0x170] sm:$0xf]
  %v5499 = vld [vmem:[%s1 + $0x174] sm:$0xff]
  %v5500 = vld [vmem:[%s1 + $0x17c] sm:$0xf]
  %v5503 = vunpack.c.l.b16 %v5435
  %v5504 = vunpack.c.h.b16 %v5435
  %v5505 = vunpack.c.l.b16 %v5436
  %v5506 = vunpack.c.h.b16 %v5436
  %v5507 = vpack.c.b16 %v5505, %v5503
  %v5508 = vpack.c.b16 %v5506, %v5504
  %v5575 = vunpack.c.l.b16 %v5437
  %v5576 = vunpack.c.h.b16 %v5437
  %v5577 = vunpack.c.l.b16 %v5438
  %v5578 = vunpack.c.l.b16 %v5439
  %v5579 = vunpack.c.h.b16 %v5439
  %v5580 = vunpack.c.l.b16 %v5440
  %v5581 = vunpack.c.l.b16 %v5441
  %v5582 = vunpack.c.h.b16 %v5441
  %v5583 = vunpack.c.l.b16 %v5442
  %v5584 = vunpack.c.l.b16 %v5443
  %v5585 = vunpack.c.h.b16 %v5443
  %v5586 = vunpack.c.l.b16 %v5444
  %v5587 = vunpack.c.l.b16 %v5445
  %v5588 = vunpack.c.h.b16 %v5445
  %v5589 = vunpack.c.l.b16 %v5446
  %v5590 = vunpack.c.l.b16 %v5447
  %v5591 = vunpack.c.h.b16 %v5447
  %v5592 = vunpack.c.l.b16 %v5448
  %v5593 = vunpack.c.l.b16 %v5449
  %v5594 = vunpack.c.h.b16 %v5449
  %v5595 = vunpack.c.l.b16 %v5450
  %v5596 = vunpack.c.l.b16 %v5451
  %v5597 = vunpack.c.h.b16 %v5451
  %v5598 = vunpack.c.l.b16 %v5452
  %v5599 = vunpack.c.l.b16 %v5453
  %v5600 = vunpack.c.h.b16 %v5453
  %v5601 = vunpack.c.l.b16 %v5454
  %v5602 = vunpack.c.l.b16 %v5455
  %v5603 = vunpack.c.h.b16 %v5455
  %v5604 = vunpack.c.l.b16 %v5456
  %v5605 = vunpack.c.l.b16 %v5457
  %v5606 = vunpack.c.h.b16 %v5457
  %v5607 = vunpack.c.l.b16 %v5458
  %v5608 = vunpack.c.l.b16 %v5459
  %v5609 = vunpack.c.h.b16 %v5459
  %v5610 = vunpack.c.l.b16 %v5460
  %v5611 = vunpack.c.l.b16 %v5461
  %v5612 = vunpack.c.h.b16 %v5461
  %v5613 = vunpack.c.l.b16 %v5462
  %v5614 = vunpack.c.l.b16 %v5463
  %v5615 = vunpack.c.h.b16 %v5463
  %v5616 = vunpack.c.l.b16 %v5464
  %v5617 = vunpack.c.l.b16 %v5465
  %v5618 = vunpack.c.h.b16 %v5465
  %v5619 = vunpack.c.l.b16 %v5466
  %v5620 = vunpack.c.l.b16 %v5467
  %v5621 = vunpack.c.h.b16 %v5467
  %v5622 = vunpack.c.l.b16 %v5468
  %v5623 = vunpack.c.l.b16 %v5469
  %v5624 = vunpack.c.h.b16 %v5469
  %v5625 = vunpack.c.l.b16 %v5470
  %v5626 = vunpack.c.l.b16 %v5471
  %v5627 = vunpack.c.h.b16 %v5471
  %v5628 = vunpack.c.l.b16 %v5472
  %v5629 = vunpack.c.l.b16 %v5473
  %v5630 = vunpack.c.h.b16 %v5473
  %v5631 = vunpack.c.l.b16 %v5474
  %v5632 = vunpack.c.l.b16 %v5475
  %v5633 = vunpack.c.h.b16 %v5475
  %v5634 = vunpack.c.l.b16 %v5476
  %v5635 = vunpack.c.l.b16 %v5477
  %v5636 = vunpack.c.h.b16 %v5477
  %v5637 = vunpack.c.l.b16 %v5478
  %v5638 = vunpack.c.l.b16 %v5479
  %v5639 = vunpack.c.h.b16 %v5479
  %v5640 = vunpack.c.l.b16 %v5480
  %v5641 = vunpack.c.l.b16 %v5481
  %v5642 = vunpack.c.h.b16 %v5481
  %v5643 = vunpack.c.l.b16 %v5482
  %v5644 = vunpack.c.l.b16 %v5483
  %v5645 = vunpack.c.h.b16 %v5483
  %v5646 = vunpack.c.l.b16 %v5484
  %v5647 = vunpack.c.l.b16 %v5485
  %v5648 = vunpack.c.h.b16 %v5485
  %v5649 = vunpack.c.l.b16 %v5486
  %v5650 = vunpack.c.l.b16 %v5487
  %v5651 = vunpack.c.h.b16 %v5487
  %v5652 = vunpack.c.l.b16 %v5488
  %v5653 = vunpack.c.l.b16 %v5489
  %v5654 = vunpack.c.h.b16 %v5489
  %v5655 = vunpack.c.l.b16 %v5490
  %v5656 = vunpack.c.l.b16 %v5491
  %v5657 = vunpack.c.h.b16 %v5491
  %v5658 = vunpack.c.l.b16 %v5492
  %v5659 = vunpack.c.l.b16 %v5493
  %v5660 = vunpack.c.h.b16 %v5493
  %v5661 = vunpack.c.l.b16 %v5494
  %v5662 = vunpack.c.l.b16 %v5495
  %v5663 = vunpack.c.h.b16 %v5495
  %v5664 = vunpack.c.l.b16 %v5496
  %v5665 = vunpack.c.l.b16 %v5497
  %v5666 = vunpack.c.h.b16 %v5497
  %v5667 = vunpack.c.l.b16 %v5498
  %v5668 = vunpack.c.l.b16 %v5499
  %v5669 = vunpack.c.h.b16 %v5499
  %v5670 = vunpack.c.l.b16 %v5500
  %v5671 = vpack.c.b16 %v5578, %v5575
  %v5672 = vpack.c.b16 %v5579, %v5576
  %v5673 = vpack.c.b16 %v5580, %v5577
  %v5674 = vpack.c.b16 %v5584, %v5581
  %v5675 = vpack.c.b16 %v5585, %v5582
  %v5676 = vpack.c.b16 %v5586, %v5583
  %v5677 = vpack.c.b16 %v5590, %v5587
  %v5678 = vpack.c.b16 %v5591, %v5588
  %v5679 = vpack.c.b16 %v5592, %v5589
  %v5680 = vpack.c.b16 %v5596, %v5593
  %v5681 = vpack.c.b16 %v5597, %v5594
  %v5682 = vpack.c.b16 %v5598, %v5595
  %v5683 = vpack.c.b16 %v5602, %v5599
  %v5684 = vpack.c.b16 %v5603, %v5600
  %v5685 = vpack.c.b16 %v5604, %v5601
  %v5686 = vpack.c.b16 %v5608, %v5605
  %v5687 = vpack.c.b16 %v5609, %v5606
  %v5688 = vpack.c.b16 %v5610, %v5607
  %v5689 = vpack.c.b16 %v5614, %v5611
  %v5690 = vpack.c.b16 %v5615, %v5612
  %v5691 = vpack.c.b16 %v5616, %v5613
  %v5692 = vpack.c.b16 %v5620, %v5617
  %v5693 = vpack.c.b16 %v5621, %v5618
  %v5694 = vpack.c.b16 %v5622, %v5619
  %v5695 = vpack.c.b16 %v5626, %v5623
  %v5696 = vpack.c.b16 %v5627, %v5624
  %v5697 = vpack.c.b16 %v5628, %v5625
  %v5698 = vpack.c.b16 %v5632, %v5629
  %v5699 = vpack.c.b16 %v5633, %v5630
  %v5700 = vpack.c.b16 %v5634, %v5631
  %v5701 = vpack.c.b16 %v5638, %v5635
  %v5702 = vpack.c.b16 %v5639, %v5636
  %v5703 = vpack.c.b16 %v5640, %v5637
  %v5704 = vpack.c.b16 %v5644, %v5641
  %v5705 = vpack.c.b16 %v5645, %v5642
  %v5706 = vpack.c.b16 %v5646, %v5643
  %v5707 = vpack.c.b16 %v5650, %v5647
  %v5708 = vpack.c.b16 %v5651, %v5648
  %v5709 = vpack.c.b16 %v5652, %v5649
  %v5710 = vpack.c.b16 %v5656, %v5653
  %v5711 = vpack.c.b16 %v5657, %v5654
  %v5712 = vpack.c.b16 %v5658, %v5655
  %v5713 = vpack.c.b16 %v5662, %v5659
  %v5714 = vpack.c.b16 %v5663, %v5660
  %v5715 = vpack.c.b16 %v5664, %v5661
  %v5716 = vpack.c.b16 %v5668, %v5665
  %v5717 = vpack.c.b16 %v5669, %v5666
  %v5718 = vpack.c.b16 %v5670, %v5667
  %5767 = vmatprep.subr.bf16.mxu0 %v5693
  %5768 = vmatpush1.bf16.msra.mxu0 %v5692
  %5769 = vmatprep.subr.bf16.mxu0 %v5690
  %5770 = vmatpush1.bf16.msra.mxu0 %v5689
  %5771 = vmatprep.subr.bf16.mxu0 %v5687
  %5772 = vmatpush1.bf16.msra.mxu0 %v5686
  %5773 = vmatprep.subr.bf16.mxu0 %v5684
  %5774 = vmatpush1.bf16.msra.mxu0 %v5683
  %5775 = vmatprep.subr.bf16.mxu0 %v5681
  %5776 = vmatpush1.bf16.msra.mxu0 %v5680
  %5777 = vmatprep.subr.bf16.mxu0 %v5678
  %5778 = vmatpush1.bf16.msra.mxu0 %v5677
  %5779 = vmatprep.subr.bf16.mxu0 %v5675
  %5780 = vmatpush1.bf16.msra.mxu0 %v5674
  %5781 = vmatprep.subr.bf16.mxu0 %v5672
  %5782 = vmatpush1.bf16.msra.mxu0 %v5671
  %5783 = vmatprep.subr.bf16.mxu0 %v5717
  %5784 = vmatpush2.bf16.msra.mxu0 %v5716
  %5785 = vmatprep.subr.bf16.mxu0 %v5714
  %5786 = vmatpush2.bf16.msra.mxu0 %v5713
  %5787 = vmatprep.subr.bf16.mxu0 %v5711
  %5788 = vmatpush2.bf16.msra.mxu0 %v5710
  %5789 = vmatprep.subr.bf16.mxu0 %v5708
  %5790 = vmatpush2.bf16.msra.mxu0 %v5707
  %5791 = vmatprep.subr.bf16.mxu0 %v5705
  %5792 = vmatpush2.bf16.msra.mxu0 %v5704
  %5793 = vmatprep.subr.bf16.mxu0 %v5702
  %5794 = vmatpush2.bf16.msra.mxu0 %v5701
  %5795 = vmatprep.subr.bf16.mxu0 %v5699
  %5796 = vmatpush2.bf16.msra.mxu0 %v5698
  %5797 = vmatprep.subr.bf16.mxu0 %v5696
  %5798 = vmatpush2.bf16.msra.mxu0 %v5695
  %5799 = vmatprep.mubr.bf16.mxu0 %v5508
  %5800 = vmatmul.mubr.bf16.gmra.mxu0 %v5507
  %v5801 = vpop.f32.mrf.mxu0
  %v5802 = vadd.f32 0.0, %v5801
  %v5803 = vpop.f32.mrf.mxu0
  %v5804 = vadd.f32 0.0, %v5803
  %v5805 = vpop.f32.mrf.mxu0
  %v5806 = vadd.f32 0.0, %v5805
  %v5807 = vpop.f32.mrf.mxu0
  %v5808 = vadd.f32 0.0, %v5807
  %5809 = vdwg.mxu0
  %5810 = vmatprep.subr.bf16.mxu0 0
  %5811 = vmatpush1.bf16.msra.mxu0 %v5694
  %5812 = vmatprep.subr.bf16.mxu0 0
  %5813 = vmatpush1.bf16.msra.mxu0 %v5691
  %5814 = vmatprep.subr.bf16.mxu0 0
  %5815 = vmatpush1.bf16.msra.mxu0 %v5688
  %5816 = vmatprep.subr.bf16.mxu0 0
  %5817 = vmatpush1.bf16.msra.mxu0 %v5685
  %5818 = vmatprep.subr.bf16.mxu0 0
  %5819 = vmatpush1.bf16.msra.mxu0 %v5682
  %5820 = vmatprep.subr.bf16.mxu0 0
  %5821 = vmatpush1.bf16.msra.mxu0 %v5679
  %5822 = vmatprep.subr.bf16.mxu0 0
  %5823 = vmatpush1.bf16.msra.mxu0 %v5676
  %5824 = vmatprep.subr.bf16.mxu0 0
  %5825 = vmatpush1.bf16.msra.mxu0 %v5673
  %5826 = vmatprep.subr.bf16.mxu0 0
  %5827 = vmatpush2.bf16.msra.mxu0 %v5718
  %5828 = vmatprep.subr.bf16.mxu0 0
  %5829 = vmatpush2.bf16.msra.mxu0 %v5715
  %5830 = vmatprep.subr.bf16.mxu0 0
  %5831 = vmatpush2.bf16.msra.mxu0 %v5712
  %5832 = vmatprep.subr.bf16.mxu0 0
  %5833 = vmatpush2.bf16.msra.mxu0 %v5709
  %5834 = vmatprep.subr.bf16.mxu0 0
  %5835 = vmatpush2.bf16.msra.mxu0 %v5706
  %5836 = vmatprep.subr.bf16.mxu0 0
  %5837 = vmatpush2.bf16.msra.mxu0 %v5703
  %5838 = vmatprep.subr.bf16.mxu0 0
  %5839 = vmatpush2.bf16.msra.mxu0 %v5700
  %5840 = vmatprep.subr.bf16.mxu0 0
  %5841 = vmatpush2.bf16.msra.mxu0 %v5697
  %5842 = vmatprep.mubr.bf16.mxu0 %v5508
  %5843 = vmatmul.mubr.bf16.gmra.mxu0 %v5507
  %v5844 = vpop.f32.mrf.mxu0
  %v5845 = vadd.f32 0.0, %v5844
  %v5846 = vpop.f32.mrf.mxu0
  %v5847 = vpop.f32.mrf.mxu0
  %v5848 = vadd.f32 0.0, %v5847
  %v5849 = vpop.f32.mrf.mxu0
  %5850 = vdwg.mxu0
  %v5851 = vmax.f32 %v5802, 0.0
  %v5852 = vmax.f32 %v5804, 0.0
  %v5853 = vmax.f32 %v5845, 0.0
  %v5854 = vmax.f32 %v5806, 0.0
  %v5855 = vmax.f32 %v5808, 0.0
  %v5856 = vmax.f32 %v5848, 0.0
  %v5857 = vpack.c.bf16 %v5854, %v5851
  %v5858 = vpack.c.bf16 %v5855, %v5852
  %v5859 = vpack.c.bf16 %v5856, %v5853
  %v5860 = vld [vmem:[%s2] sm:$0xf]
  %v5861 = vld [vmem:[%s2 + $0x4] sm:$0xf]
  %v5862 = vld [vmem:[%s2 + $0x8] sm:$0xf]
  %v5863 = vld [vmem:[%s2 + $0xc] sm:$0xf]
  %v5864 = vld [vmem:[%s2 + $0x10] sm:$0xf]
  %v5865 = vld [vmem:[%s2 + $0x14] sm:$0xf]
  %v5866 = vld [vmem:[%s2 + $0x18] sm:$0xf]
  %v5867 = vld [vmem:[%s2 + $0x1c] sm:$0xf]
  %v5868 = vld [vmem:[%s2 + $0x20] sm:$0xf]
  %v5869 = vld [vmem:[%s2 + $0x24] sm:$0xf]
  %v5870 = vld [vmem:[%s2 + $0x28] sm:$0xf]
  %v5871 = vld [vmem:[%s2 + $0x2c] sm:$0xf]
  %v5872 = vld [vmem:[%s2 + $0x30] sm:$0xf]
  %v5873 = vld [vmem:[%s2 + $0x34] sm:$0xf]
  %v5874 = vld [vmem:[%s2 + $0x38] sm:$0xf]
  %v5875 = vld [vmem:[%s2 + $0x3c] sm:$0xf]
  %v5876 = vld [vmem:[%s2 + $0x40] sm:$0xf]
  %v5877 = vld [vmem:[%s2 + $0x44] sm:$0xf]
  %v5878 = vld [vmem:[%s2 + $0x48] sm:$0xf]
  %v5879 = vld [vmem:[%s2 + $0x4c] sm:$0xf]
  %v5880 = vld [vmem:[%s2 + $0x50] sm:$0xf]
  %v5881 = vld [vmem:[%s2 + $0x54] sm:$0xf]
  %v5882 = vld [vmem:[%s2 + $0x58] sm:$0xf]
  %v5883 = vld [vmem:[%s2 + $0x5c] sm:$0xf]
  %v5884 = vld [vmem:[%s2 + $0x60] sm:$0xf]
  %v5885 = vld [vmem:[%s2 + $0x64] sm:$0xf]
  %v5886 = vld [vmem:[%s2 + $0x68] sm:$0xf]
  %v5887 = vld [vmem:[%s2 + $0x6c] sm:$0xf]
  %v5888 = vld [vmem:[%s2 + $0x70] sm:$0xf]
  %v5889 = vld [vmem:[%s2 + $0x74] sm:$0xf]
  %v5890 = vld [vmem:[%s2 + $0x78] sm:$0xf]
  %v5891 = vld [vmem:[%s2 + $0x7c] sm:$0xf]
  %v5892 = vld [vmem:[%s2 + $0x80] sm:$0xf]
  %v5893 = vld [vmem:[%s2 + $0x84] sm:$0xf]
  %v5894 = vld [vmem:[%s2 + $0x88] sm:$0xf]
  %v5895 = vld [vmem:[%s2 + $0x8c] sm:$0xf]
  %v5896 = vld [vmem:[%s2 + $0x90] sm:$0x1]
  %v5934 = vunpack.c.l.b16 %v5860
  %v5935 = vunpack.c.l.b16 %v5861
  %v5936 = vunpack.c.l.b16 %v5862
  %v5937 = vunpack.c.l.b16 %v5863
  %v5938 = vunpack.c.l.b16 %v5864
  %v5939 = vunpack.c.l.b16 %v5865
  %v5940 = vunpack.c.l.b16 %v5866
  %v5941 = vunpack.c.l.b16 %v5867
  %v5942 = vunpack.c.l.b16 %v5868
  %v5943 = vunpack.c.l.b16 %v5869
  %v5944 = vunpack.c.l.b16 %v5870
  %v5945 = vunpack.c.l.b16 %v5871
  %v5946 = vunpack.c.l.b16 %v5872
  %v5947 = vunpack.c.l.b16 %v5873
  %v5948 = vunpack.c.l.b16 %v5874
  %v5949 = vunpack.c.l.b16 %v5875
  %v5950 = vunpack.c.l.b16 %v5876
  %v5951 = vunpack.c.l.b16 %v5877
  %v5952 = vunpack.c.l.b16 %v5878
  %v5953 = vunpack.c.l.b16 %v5879
  %v5954 = vunpack.c.l.b16 %v5880
  %v5955 = vunpack.c.l.b16 %v5881
  %v5956 = vunpack.c.l.b16 %v5882
  %v5957 = vunpack.c.l.b16 %v5883
  %v5958 = vunpack.c.l.b16 %v5884
  %v5959 = vunpack.c.l.b16 %v5885
  %v5960 = vunpack.c.l.b16 %v5886
  %v5961 = vunpack.c.l.b16 %v5887
  %v5962 = vunpack.c.l.b16 %v5888
  %v5963 = vunpack.c.l.b16 %v5889
  %v5964 = vunpack.c.l.b16 %v5890
  %v5965 = vunpack.c.l.b16 %v5891
  %v5966 = vunpack.c.l.b16 %v5892
  %v5967 = vunpack.c.l.b16 %v5893
  %v5968 = vunpack.c.l.b16 %v5894
  %v5969 = vunpack.c.l.b16 %v5895
  %v5970 = vunpack.c.l.b16 %v5896
  %v5971 = vpack.c.b16 %v5935, %v5934
  %v5972 = vpack.c.b16 %v5937, %v5936
  %v5973 = vpack.c.b16 %v5939, %v5938
  %v5974 = vpack.c.b16 %v5941, %v5940
  %v5975 = vpack.c.b16 %v5943, %v5942
  %v5976 = vpack.c.b16 %v5945, %v5944
  %v5977 = vpack.c.b16 %v5947, %v5946
  %v5978 = vpack.c.b16 %v5949, %v5948
  %v5979 = vpack.c.b16 %v5951, %v5950
  %v5980 = vpack.c.b16 %v5953, %v5952
  %v5981 = vpack.c.b16 %v5955, %v5954
  %v5982 = vpack.c.b16 %v5957, %v5956
  %v5983 = vpack.c.b16 %v5959, %v5958
  %v5984 = vpack.c.b16 %v5961, %v5960
  %v5985 = vpack.c.b16 %v5963, %v5962
  %v5986 = vpack.c.b16 %v5965, %v5964
  %v5987 = vpack.c.b16 %v5967, %v5966
  %v5988 = vpack.c.b16 %v5969, %v5968
  %v5989 = vpack.c.b16 %v5970, %v5970
  %v6009 = vsel %vm594, %v5859, 0
  %v6012 = vand.u32 %v5989, %v600
  %6014 = vmatprep.subr.bf16.mxu0 0
  %6015 = vmatpush1.bf16.msra.mxu0 %v5978
  %6016 = vmatprep.subr.bf16.mxu0 0
  %6017 = vmatpush1.bf16.msra.mxu0 %v5977
  %6018 = vmatprep.subr.bf16.mxu0 0
  %6019 = vmatpush1.bf16.msra.mxu0 %v5976
  %6020 = vmatprep.subr.bf16.mxu0 0
  %6021 = vmatpush1.bf16.msra.mxu0 %v5975
  %6022 = vmatprep.subr.bf16.mxu0 0
  %6023 = vmatpush1.bf16.msra.mxu0 %v5974
  %6024 = vmatprep.subr.bf16.mxu0 0
  %6025 = vmatpush1.bf16.msra.mxu0 %v5973
  %6026 = vmatprep.subr.bf16.mxu0 0
  %6027 = vmatpush1.bf16.msra.mxu0 %v5972
  %6028 = vmatprep.subr.bf16.mxu0 0
  %6029 = vmatpush1.bf16.msra.mxu0 %v5971
  %6030 = vmatprep.subr.bf16.mxu0 0
  %6031 = vmatpush2.bf16.msra.mxu0 %v5986
  %6032 = vmatprep.subr.bf16.mxu0 0
  %6033 = vmatpush2.bf16.msra.mxu0 %v5985
  %6034 = vmatprep.subr.bf16.mxu0 0
  %6035 = vmatpush2.bf16.msra.mxu0 %v5984
  %6036 = vmatprep.subr.bf16.mxu0 0
  %6037 = vmatpush2.bf16.msra.mxu0 %v5983
  %6038 = vmatprep.subr.bf16.mxu0 0
  %6039 = vmatpush2.bf16.msra.mxu0 %v5982
  %6040 = vmatprep.subr.bf16.mxu0 0
  %6041 = vmatpush2.bf16.msra.mxu0 %v5981
  %6042 = vmatprep.subr.bf16.mxu0 0
  %6043 = vmatpush2.bf16.msra.mxu0 %v5980
  %6044 = vmatprep.subr.bf16.mxu0 0
  %6045 = vmatpush2.bf16.msra.mxu0 %v5979
  %6046 = vmatprep.mubr.bf16.mxu0 %v5858
  %6047 = vmatmul.mubr.bf16.gmra.mxu0 %v5857
  %v6048 = vpop.f32.mrf.mxu0
  %v6049 = vadd.f32 0.0, %v6048
  %v6050 = vpop.f32.mrf.mxu0
  %v6051 = vpop.f32.mrf.mxu0
  %v6052 = vadd.f32 0.0, %v6051
  %v6053 = vpop.f32.mrf.mxu0
  %6054 = vdwg.mxu0
  %6055 = vmatprep.subr.bf16.mxu0 0
  %6056 = vmatpush1.bf16.msra.mxu0 0
  %6057 = vmatprep.subr.bf16.mxu0 0
  %6058 = vmatpush1.bf16.msra.mxu0 0
  %6059 = vmatprep.subr.bf16.mxu0 0
  %6060 = vmatpush1.bf16.msra.mxu0 0
  %6061 = vmatprep.subr.bf16.mxu0 0
  %6062 = vmatpush1.bf16.msra.mxu0 0
  %6063 = vmatprep.subr.bf16.mxu0 0
  %6064 = vmatpush1.bf16.msra.mxu0 0
  %6065 = vmatprep.subr.bf16.mxu0 0
  %6066 = vmatpush1.bf16.msra.mxu0 %v6012
  %6067 = vmatprep.subr.bf16.mxu0 0
  %6068 = vmatpush1.bf16.msra.mxu0 %v5988
  %6069 = vmatprep.subr.bf16.mxu0 0
  %6070 = vmatpush1.bf16.msra.mxu0 %v5987
  %6071 = vmatprep.subr.bf16.mxu0 0
  %6072 = vmatpush2.bf16.msra.mxu0 0
  %6073 = vmatprep.subr.bf16.mxu0 0
  %6074 = vmatpush2.bf16.msra.mxu0 0
  %6075 = vmatprep.subr.bf16.mxu0 0
  %6076 = vmatpush2.bf16.msra.mxu0 0
  %6077 = vmatprep.subr.bf16.mxu0 0
  %6078 = vmatpush2.bf16.msra.mxu0 0
  %6079 = vmatprep.subr.bf16.mxu0 0
  %6080 = vmatpush2.bf16.msra.mxu0 0
  %6081 = vmatprep.subr.bf16.mxu0 0
  %6082 = vmatpush2.bf16.msra.mxu0 0
  %6083 = vmatprep.subr.bf16.mxu0 0
  %6084 = vmatpush2.bf16.msra.mxu0 0
  %6085 = vmatprep.subr.bf16.mxu0 0
  %6086 = vmatpush2.bf16.msra.mxu0 0
  %6087 = vmatprep.mubr.bf16.mxu0 0
  %6088 = vmatmul.mubr.bf16.gmra.mxu0 %v6009
  %v6089 = vpop.f32.mrf.mxu0
  %v6090 = vadd.f32 %v6049, %v6089
  %v6091 = vpop.f32.mrf.mxu0
  %v6092 = vpop.f32.mrf.mxu0
  %v6093 = vadd.f32 %v6052, %v6092
  %v6094 = vpop.f32.mrf.mxu0
  %6095 = vdwg.mxu0
  %v6096 = vmax.f32 %v6090, 0.0
  %v6097 = vmax.f32 %v6093, 0.0
  %v6098 = vpack.c.bf16 %v6097, %v6096
  %v6100 = vunpack.c.l.b16 %v6098
  %v6101 = vunpack.c.h.b16 %v6098
  %v6102 = vpack.c.b16 %v6100, %v6100
  %v6103 = vpack.c.b16 %v6101, %v6101
  %6106 = vst.msk [vmem:[#allocation2 + $0x10] sm:$0xf] %vm696, %v6102
  %6107 = vst.msk [vmem:[#allocation2 + $0x24] sm:$0xf] %vm696, %v6103
  %v6108 = vld [vmem:[#allocation2] sm:$0xff]
  %v6109 = vld [vmem:[#allocation2 + $0x8] sm:$0xff]
  %v6110 = vld [vmem:[#allocation2 + $0x10] sm:$0xf]
  %v6111 = vld [vmem:[#allocation2 + $0x14] sm:$0xff]
  %v6112 = vld [vmem:[#allocation2 + $0x1c] sm:$0xff]
  %v6113 = vld [vmem:[#allocation2 + $0x24] sm:$0xf]
  %v6114 = vld [vmem:[%s3] sm:$0xf]
  %v6115 = vld [vmem:[%s3 + $0x4] sm:$0xf]
  %v6116 = vld [vmem:[%s3 + $0x8] sm:$0xf]
  %v6117 = vld [vmem:[%s3 + $0xc] sm:$0xf]
  %v6118 = vld [vmem:[%s3 + $0x10] sm:$0xf]
  %v6119 = vld [vmem:[%s3 + $0x14] sm:$0xf]
  %v6120 = vld [vmem:[%s3 + $0x18] sm:$0xf]
  %v6121 = vld [vmem:[%s3 + $0x1c] sm:$0xf]
  %v6122 = vld [vmem:[%s3 + $0x20] sm:$0xf]
  %v6123 = vld [vmem:[%s3 + $0x24] sm:$0xf]
  %v6124 = vld [vmem:[%s3 + $0x28] sm:$0xf]
  %v6125 = vld [vmem:[%s3 + $0x2c] sm:$0xf]
  %v6126 = vld [vmem:[%s3 + $0x30] sm:$0xf]
  %v6127 = vld [vmem:[%s3 + $0x34] sm:$0xf]
  %v6128 = vld [vmem:[%s3 + $0x38] sm:$0xf]
  %v6129 = vld [vmem:[%s3 + $0x3c] sm:$0xf]
  %v6130 = vld [vmem:[%s3 + $0x40] sm:$0xf]
  %v6131 = vld [vmem:[%s3 + $0x44] sm:$0xf]
  %v6132 = vld [vmem:[%s3 + $0x48] sm:$0xf]
  %v6133 = vld [vmem:[%s3 + $0x4c] sm:$0xf]
  %v6134 = vld [vmem:[%s3 + $0x50] sm:$0xf]
  %v6135 = vld [vmem:[%s3 + $0x54] sm:$0xf]
  %v6136 = vld [vmem:[%s3 + $0x58] sm:$0xf]
  %v6137 = vld [vmem:[%s3 + $0x5c] sm:$0xf]
  %v6138 = vld [vmem:[%s3 + $0x60] sm:$0xf]
  %v6139 = vld [vmem:[%s3 + $0x64] sm:$0xf]
  %v6140 = vld [vmem:[%s3 + $0x68] sm:$0xf]
  %v6141 = vld [vmem:[%s3 + $0x6c] sm:$0xf]
  %v6142 = vld [vmem:[%s3 + $0x70] sm:$0xf]
  %v6143 = vld [vmem:[%s3 + $0x74] sm:$0xf]
  %v6144 = vld [vmem:[%s3 + $0x78] sm:$0xf]
  %v6145 = vld [vmem:[%s3 + $0x7c] sm:$0xf]
  %v6146 = vld [vmem:[%s3 + $0x80] sm:$0xf]
  %v6147 = vld [vmem:[%s3 + $0x84] sm:$0xf]
  %v6148 = vld [vmem:[%s3 + $0x88] sm:$0xf]
  %v6149 = vld [vmem:[%s3 + $0x8c] sm:$0xf]
  %v6150 = vld [vmem:[%s3 + $0x90] sm:$0xf]
  %v6151 = vld [vmem:[%s3 + $0x94] sm:$0xf]
  %v6152 = vld [vmem:[%s3 + $0x98] sm:$0xf]
  %v6153 = vld [vmem:[%s3 + $0x9c] sm:$0xf]
  %v6154 = vld [vmem:[%s3 + $0xa0] sm:$0xf]
  %v6155 = vld [vmem:[%s3 + $0xa4] sm:$0xf]
  %v6156 = vld [vmem:[%s3 + $0xa8] sm:$0xf]
  %v6157 = vld [vmem:[%s3 + $0xac] sm:$0xf]
  %v6158 = vld [vmem:[%s3 + $0xb0] sm:$0xf]
  %v6159 = vld [vmem:[%s3 + $0xb4] sm:$0xf]
  %v6160 = vld [vmem:[%s3 + $0xb8] sm:$0xf]
  %v6161 = vld [vmem:[%s3 + $0xbc] sm:$0xf]
  %v6162 = vld [vmem:[%s3 + $0xc0] sm:$0xf]
  %v6163 = vld [vmem:[%s3 + $0xc4] sm:$0xf]
  %v6164 = vld [vmem:[%s3 + $0xc8] sm:$0xf]
  %v6165 = vld [vmem:[%s3 + $0xcc] sm:$0xf]
  %v6166 = vld [vmem:[%s3 + $0xd0] sm:$0xf]
  %v6167 = vld [vmem:[%s3 + $0xd4] sm:$0xf]
  %v6168 = vld [vmem:[%s3 + $0xd8] sm:$0xf]
  %v6169 = vld [vmem:[%s3 + $0xdc] sm:$0xf]
  %v6170 = vld [vmem:[%s3 + $0xe0] sm:$0xf]
  %v6171 = vld [vmem:[%s3 + $0xe4] sm:$0xf]
  %v6172 = vld [vmem:[%s3 + $0xe8] sm:$0xf]
  %v6173 = vld [vmem:[%s3 + $0xec] sm:$0xf]
  %v6174 = vld [vmem:[%s3 + $0xf0] sm:$0xf]
  %v6175 = vld [vmem:[%s3 + $0xf4] sm:$0xf]
  %v6176 = vld [vmem:[%s3 + $0xf8] sm:$0xf]
  %v6177 = vld [vmem:[%s3 + $0xfc] sm:$0xf]
  %v6178 = vld [vmem:[%s3 + $0x100] sm:$0xf]
  %v6179 = vld [vmem:[%s3 + $0x104] sm:$0xf]
  %v6180 = vld [vmem:[%s3 + $0x108] sm:$0xf]
  %v6181 = vld [vmem:[%s3 + $0x10c] sm:$0xf]
  %v6182 = vld [vmem:[%s3 + $0x110] sm:$0xf]
  %v6183 = vld [vmem:[%s3 + $0x114] sm:$0xf]
  %v6184 = vld [vmem:[%s3 + $0x118] sm:$0xf]
  %v6185 = vld [vmem:[%s3 + $0x11c] sm:$0xf]
  %v6186 = vld [vmem:[%s4] sm:$0x1]
  %v6188 = vlaneseq
  %v6189 = vshrl.u32 %v6188, 7
  %v6190 = vsub.s32 0, %v6189
  %v6191 = vrot.slane %v6186, %v6190
  %v6199 = vunpack.c.l.b16 %v6108
  %v6200 = vunpack.c.h.b16 %v6108
  %v6201 = vunpack.c.l.b16 %v6109
  %v6202 = vunpack.c.h.b16 %v6109
  %v6203 = vunpack.c.l.b16 %v6110
  %v6204 = vunpack.c.l.b16 %v6111
  %v6205 = vunpack.c.h.b16 %v6111
  %v6206 = vunpack.c.l.b16 %v6112
  %v6207 = vunpack.c.h.b16 %v6112
  %v6208 = vunpack.c.l.b16 %v6113
  %v6209 = vpack.c.b16 %v6204, %v6199
  %v6210 = vpack.c.b16 %v6205, %v6200
  %v6211 = vpack.c.b16 %v6206, %v6201
  %v6212 = vpack.c.b16 %v6207, %v6202
  %v6213 = vpack.c.b16 %v6208, %v6203
  %v6290 = vunpack.c.l.b16 %v6114
  %v6291 = vunpack.c.l.b16 %v6115
  %v6292 = vunpack.c.l.b16 %v6116
  %v6293 = vunpack.c.l.b16 %v6117
  %v6294 = vunpack.c.l.b16 %v6118
  %v6295 = vunpack.c.l.b16 %v6119
  %v6296 = vunpack.c.l.b16 %v6120
  %v6297 = vunpack.c.l.b16 %v6121
  %v6298 = vunpack.c.l.b16 %v6122
  %v6299 = vunpack.c.l.b16 %v6123
  %v6300 = vunpack.c.l.b16 %v6124
  %v6301 = vunpack.c.l.b16 %v6125
  %v6302 = vunpack.c.l.b16 %v6126
  %v6303 = vunpack.c.l.b16 %v6127
  %v6304 = vunpack.c.l.b16 %v6128
  %v6305 = vunpack.c.l.b16 %v6129
  %v6306 = vunpack.c.l.b16 %v6130
  %v6307 = vunpack.c.l.b16 %v6131
  %v6308 = vunpack.c.l.b16 %v6132
  %v6309 = vunpack.c.l.b16 %v6133
  %v6310 = vunpack.c.l.b16 %v6134
  %v6311 = vunpack.c.l.b16 %v6135
  %v6312 = vunpack.c.l.b16 %v6136
  %v6313 = vunpack.c.l.b16 %v6137
  %v6314 = vunpack.c.l.b16 %v6138
  %v6315 = vunpack.c.l.b16 %v6139
  %v6316 = vunpack.c.l.b16 %v6140
  %v6317 = vunpack.c.l.b16 %v6141
  %v6318 = vunpack.c.l.b16 %v6142
  %v6319 = vunpack.c.l.b16 %v6143
  %v6320 = vunpack.c.l.b16 %v6144
  %v6321 = vunpack.c.l.b16 %v6145
  %v6322 = vunpack.c.l.b16 %v6146
  %v6323 = vunpack.c.l.b16 %v6147
  %v6324 = vunpack.c.l.b16 %v6148
  %v6325 = vunpack.c.l.b16 %v6149
  %v6326 = vunpack.c.l.b16 %v6150
  %v6327 = vunpack.c.l.b16 %v6151
  %v6328 = vunpack.c.l.b16 %v6152
  %v6329 = vunpack.c.l.b16 %v6153
  %v6330 = vunpack.c.l.b16 %v6154
  %v6331 = vunpack.c.l.b16 %v6155
  %v6332 = vunpack.c.l.b16 %v6156
  %v6333 = vunpack.c.l.b16 %v6157
  %v6334 = vunpack.c.l.b16 %v6158
  %v6335 = vunpack.c.l.b16 %v6159
  %v6336 = vunpack.c.l.b16 %v6160
  %v6337 = vunpack.c.l.b16 %v6161
  %v6338 = vunpack.c.l.b16 %v6162
  %v6339 = vunpack.c.l.b16 %v6163
  %v6340 = vunpack.c.l.b16 %v6164
  %v6341 = vunpack.c.l.b16 %v6165
  %v6342 = vunpack.c.l.b16 %v6166
  %v6343 = vunpack.c.l.b16 %v6167
  %v6344 = vunpack.c.l.b16 %v6168
  %v6345 = vunpack.c.l.b16 %v6169
  %v6346 = vunpack.c.l.b16 %v6170
  %v6347 = vunpack.c.l.b16 %v6171
  %v6348 = vunpack.c.l.b16 %v6172
  %v6349 = vunpack.c.l.b16 %v6173
  %v6350 = vunpack.c.l.b16 %v6174
  %v6351 = vunpack.c.l.b16 %v6175
  %v6352 = vunpack.c.l.b16 %v6176
  %v6353 = vunpack.c.l.b16 %v6177
  %v6354 = vunpack.c.l.b16 %v6178
  %v6355 = vunpack.c.l.b16 %v6179
  %v6356 = vunpack.c.l.b16 %v6180
  %v6357 = vunpack.c.l.b16 %v6181
  %v6358 = vunpack.c.l.b16 %v6182
  %v6359 = vunpack.c.l.b16 %v6183
  %v6360 = vunpack.c.l.b16 %v6184
  %v6361 = vunpack.c.l.b16 %v6185
  %v6362 = vpack.c.b16 %v6291, %v6290
  %v6363 = vpack.c.b16 %v6293, %v6292
  %v6364 = vpack.c.b16 %v6295, %v6294
  %v6365 = vpack.c.b16 %v6297, %v6296
  %v6366 = vpack.c.b16 %v6299, %v6298
  %v6367 = vpack.c.b16 %v6301, %v6300
  %v6368 = vpack.c.b16 %v6303, %v6302
  %v6369 = vpack.c.b16 %v6305, %v6304
  %v6370 = vpack.c.b16 %v6307, %v6306
  %v6371 = vpack.c.b16 %v6309, %v6308
  %v6372 = vpack.c.b16 %v6311, %v6310
  %v6373 = vpack.c.b16 %v6313, %v6312
  %v6374 = vpack.c.b16 %v6315, %v6314
  %v6375 = vpack.c.b16 %v6317, %v6316
  %v6376 = vpack.c.b16 %v6319, %v6318
  %v6377 = vpack.c.b16 %v6321, %v6320
  %v6378 = vpack.c.b16 %v6323, %v6322
  %v6379 = vpack.c.b16 %v6325, %v6324
  %v6380 = vpack.c.b16 %v6327, %v6326
  %v6381 = vpack.c.b16 %v6329, %v6328
  %v6382 = vpack.c.b16 %v6331, %v6330
  %v6383 = vpack.c.b16 %v6333, %v6332
  %v6384 = vpack.c.b16 %v6335, %v6334
  %v6385 = vpack.c.b16 %v6337, %v6336
  %v6386 = vpack.c.b16 %v6339, %v6338
  %v6387 = vpack.c.b16 %v6341, %v6340
  %v6388 = vpack.c.b16 %v6343, %v6342
  %v6389 = vpack.c.b16 %v6345, %v6344
  %v6390 = vpack.c.b16 %v6347, %v6346
  %v6391 = vpack.c.b16 %v6349, %v6348
  %v6392 = vpack.c.b16 %v6351, %v6350
  %v6393 = vpack.c.b16 %v6353, %v6352
  %v6394 = vpack.c.b16 %v6355, %v6354
  %v6395 = vpack.c.b16 %v6357, %v6356
  %v6396 = vpack.c.b16 %v6359, %v6358
  %v6397 = vpack.c.b16 %v6361, %v6360
  %vm6434 = vcmask 523264
  %v6436 = vsel %vm6434, %v6213, 0
  %6438 = vmatprep.subr.bf16.mxu0 0
  %6439 = vmatpush1.bf16.msra.mxu0 %v6369
  %6440 = vmatprep.subr.bf16.mxu0 0
  %6441 = vmatpush1.bf16.msra.mxu0 %v6368
  %6442 = vmatprep.subr.bf16.mxu0 0
  %6443 = vmatpush1.bf16.msra.mxu0 %v6367
  %6444 = vmatprep.subr.bf16.mxu0 0
  %6445 = vmatpush1.bf16.msra.mxu0 %v6366
  %6446 = vmatprep.subr.bf16.mxu0 0
  %6447 = vmatpush1.bf16.msra.mxu0 %v6365
  %6448 = vmatprep.subr.bf16.mxu0 0
  %6449 = vmatpush1.bf16.msra.mxu0 %v6364
  %6450 = vmatprep.subr.bf16.mxu0 0
  %6451 = vmatpush1.bf16.msra.mxu0 %v6363
  %6452 = vmatprep.subr.bf16.mxu0 0
  %6453 = vmatpush1.bf16.msra.mxu0 %v6362
  %6454 = vmatprep.subr.bf16.mxu0 0
  %6455 = vmatpush2.bf16.msra.mxu0 %v6377
  %6456 = vmatprep.subr.bf16.mxu0 0
  %6457 = vmatpush2.bf16.msra.mxu0 %v6376
  %6458 = vmatprep.subr.bf16.mxu0 0
  %6459 = vmatpush2.bf16.msra.mxu0 %v6375
  %6460 = vmatprep.subr.bf16.mxu0 0
  %6461 = vmatpush2.bf16.msra.mxu0 %v6374
  %6462 = vmatprep.subr.bf16.mxu0 0
  %6463 = vmatpush2.bf16.msra.mxu0 %v6373
  %6464 = vmatprep.subr.bf16.mxu0 0
  %6465 = vmatpush2.bf16.msra.mxu0 %v6372
  %6466 = vmatprep.subr.bf16.mxu0 0
  %6467 = vmatpush2.bf16.msra.mxu0 %v6371
  %6468 = vmatprep.subr.bf16.mxu0 0
  %6469 = vmatpush2.bf16.msra.mxu0 %v6370
  %6470 = vmatprep.mubr.bf16.mxu0 %v6210
  %6471 = vmatmul.mubr.bf16.gmra.mxu0 %v6209
  %v6472 = vpop.f32.mrf.mxu0
  %v6473 = vadd.f32 %v6191, %v6472
  %v6474 = vpop.f32.mrf.mxu0
  %v6475 = vpop.f32.mrf.mxu0
  %v6476 = vadd.f32 %v6191, %v6475
  %v6477 = vpop.f32.mrf.mxu0
  %6478 = vdwg.mxu0
  %6479 = vmatprep.subr.bf16.mxu0 0
  %6480 = vmatpush1.bf16.msra.mxu0 %v6385
  %6481 = vmatprep.subr.bf16.mxu0 0
  %6482 = vmatpush1.bf16.msra.mxu0 %v6384
  %6483 = vmatprep.subr.bf16.mxu0 0
  %6484 = vmatpush1.bf16.msra.mxu0 %v6383
  %6485 = vmatprep.subr.bf16.mxu0 0
  %6486 = vmatpush1.bf16.msra.mxu0 %v6382
  %6487 = vmatprep.subr.bf16.mxu0 0
  %6488 = vmatpush1.bf16.msra.mxu0 %v6381
  %6489 = vmatprep.subr.bf16.mxu0 0
  %6490 = vmatpush1.bf16.msra.mxu0 %v6380
  %6491 = vmatprep.subr.bf16.mxu0 0
  %6492 = vmatpush1.bf16.msra.mxu0 %v6379
  %6493 = vmatprep.subr.bf16.mxu0 0
  %6494 = vmatpush1.bf16.msra.mxu0 %v6378
  %6495 = vmatprep.subr.bf16.mxu0 0
  %6496 = vmatpush2.bf16.msra.mxu0 %v6393
  %6497 = vmatprep.subr.bf16.mxu0 0
  %6498 = vmatpush2.bf16.msra.mxu0 %v6392
  %6499 = vmatprep.subr.bf16.mxu0 0
  %6500 = vmatpush2.bf16.msra.mxu0 %v6391
  %6501 = vmatprep.subr.bf16.mxu0 0
  %6502 = vmatpush2.bf16.msra.mxu0 %v6390
  %6503 = vmatprep.subr.bf16.mxu0 0
  %6504 = vmatpush2.bf16.msra.mxu0 %v6389
  %6505 = vmatprep.subr.bf16.mxu0 0
  %6506 = vmatpush2.bf16.msra.mxu0 %v6388
  %6507 = vmatprep.subr.bf16.mxu0 0
  %6508 = vmatpush2.bf16.msra.mxu0 %v6387
  %6509 = vmatprep.subr.bf16.mxu0 0
  %6510 = vmatpush2.bf16.msra.mxu0 %v6386
  %6511 = vmatprep.mubr.bf16.mxu0 %v6212
  %6512 = vmatmul.mubr.bf16.gmra.mxu0 %v6211
  %v6513 = vpop.f32.mrf.mxu0
  %v6514 = vadd.f32 %v6473, %v6513
  %v6515 = vpop.f32.mrf.mxu0
  %v6516 = vpop.f32.mrf.mxu0
  %v6517 = vadd.f32 %v6476, %v6516
  %v6518 = vpop.f32.mrf.mxu0
  %6519 = vdwg.mxu0
  %6520 = vmatprep.subr.bf16.mxu0 0
  %6521 = vmatpush1.bf16.msra.mxu0 0
  %6522 = vmatprep.subr.bf16.mxu0 0
  %6523 = vmatpush1.bf16.msra.mxu0 0
  %6524 = vmatprep.subr.bf16.mxu0 0
  %6525 = vmatpush1.bf16.msra.mxu0 0
  %6526 = vmatprep.subr.bf16.mxu0 0
  %6527 = vmatpush1.bf16.msra.mxu0 0
  %6528 = vmatprep.subr.bf16.mxu0 0
  %6529 = vmatpush1.bf16.msra.mxu0 %v6397
  %6530 = vmatprep.subr.bf16.mxu0 0
  %6531 = vmatpush1.bf16.msra.mxu0 %v6396
  %6532 = vmatprep.subr.bf16.mxu0 0
  %6533 = vmatpush1.bf16.msra.mxu0 %v6395
  %6534 = vmatprep.subr.bf16.mxu0 0
  %6535 = vmatpush1.bf16.msra.mxu0 %v6394
  %6536 = vmatprep.subr.bf16.mxu0 0
  %6537 = vmatpush2.bf16.msra.mxu0 0
  %6538 = vmatprep.subr.bf16.mxu0 0
  %6539 = vmatpush2.bf16.msra.mxu0 0
  %6540 = vmatprep.subr.bf16.mxu0 0
  %6541 = vmatpush2.bf16.msra.mxu0 0
  %6542 = vmatprep.subr.bf16.mxu0 0
  %6543 = vmatpush2.bf16.msra.mxu0 0
  %6544 = vmatprep.subr.bf16.mxu0 0
  %6545 = vmatpush2.bf16.msra.mxu0 0
  %6546 = vmatprep.subr.bf16.mxu0 0
  %6547 = vmatpush2.bf16.msra.mxu0 0
  %6548 = vmatprep.subr.bf16.mxu0 0
  %6549 = vmatpush2.bf16.msra.mxu0 0
  %6550 = vmatprep.subr.bf16.mxu0 0
  %6551 = vmatpush2.bf16.msra.mxu0 0
  %6552 = vmatprep.mubr.bf16.mxu0 0
  %6553 = vmatmul.mubr.bf16.gmra.mxu0 %v6436
  %v6554 = vpop.f32.mrf.mxu0
  %v6555 = vadd.f32 %v6514, %v6554
  %v6556 = vpop.f32.mrf.mxu0
  %v6557 = vpop.f32.mrf.mxu0
  %v6558 = vadd.f32 %v6517, %v6557
  %v6559 = vpop.f32.mrf.mxu0
  %6560 = vdwg.mxu0
  %v6561 = vmax.f32 %v6555, 0.0
  %v6562 = vmax.f32 %v6558, 0.0
  %vm6563 = vcmask 261120
  %6564 = vst.msk [vmem:[%s5] sm:$0xff] %vm6563, %v6561
  %6565 = vst.msk [vmem:[%s5 + $0x8] sm:$0xff] %vm6563, %v6562
  // Predicated region
  $region22: #{encoders_forward.1} parent=0 // pred_check
    _
  $region23: #{encoders_forward.1} parent=0 // pred_check_branch
    %6567 = sbr.rel (0) target = $region25
  $region24: #{encoders_forward.1} parent=0 // pred_region
    _
  $region25: #{encoders_forward.1} parent=0 // pred_fallthru
    _
  // Predicated region
  $region26: #{encoders_forward.1} parent=0 // pred_check
    _
  $region27: #{encoders_forward.1} parent=0 // pred_check_branch
    %6569 = sbr.rel (0) target = $region29
  $region28: #{encoders_forward.1} parent=0 // pred_region
    _
  $region29: #{encoders_forward.1} parent=0 // pred_fallthru
    _

</llo_original>
